<compile_context>
chip_gen: v6e
topology: v6e:2x2x1
jax: 0.10.0
libtpu: 0.0.40
codegen_flags: <defaults>
</compile_context>

<pallas_src>
import jax
import jax.numpy as jnp
from jax.experimental import pallas as pl
from jax.experimental.pallas import tpu as pltpu


# ----------------------------------------------------------------------------
# Fused Pallas kernel: conv3x3 + bias + ReLU -> global-avg-pool -> MLP
# ----------------------------------------------------------------------------
def _simclr_fused_kernel(x_ref, wc_ref, bc_ref, w1_ref, b1_ref, w2_ref, b2_ref,
                         h_ref, z_ref):
    """Processes one batch sample per grid step, entirely in VMEM."""
    _, Hp, Wp, Cp = x_ref.shape          # (1, H+2, W+2, Cp) padded bf16 tile
    H, W = Hp - 2, Wp - 2
    S = H * W
    Cout = wc_ref.shape[-1]

    # 3x3 "same" conv as 9 shifted tap matmuls, accumulated in f32.
    acc = jnp.zeros((S, Cout), jnp.float32)
    for t in range(9):
        dy, dx = divmod(t, 3)
        patch = x_ref[0, dy:dy + H, dx:dx + W, :].reshape(S, Cp)       # bf16
        acc = acc + jnp.dot(patch, wc_ref[t],
                            preferred_element_type=jnp.float32)
    feat = jnp.maximum(acc + bc_ref[...], 0.0)                         # (S, Cout) f32

    # Global average pool as an MXU matmul (keeps the reduce off the XLU).
    pool = jnp.full((1, S), 1.0 / S, dtype=jnp.float32)
    h = jnp.dot(pool, feat, preferred_element_type=jnp.float32)        # (1, Cout)

    # Projection head: Linear -> ReLU -> Linear (bf16 matmuls, f32 accum).
    a = jnp.dot(h.astype(jnp.bfloat16), w1_ref[...],
                preferred_element_type=jnp.float32) + b1_ref[...]
    a = jnp.maximum(a, 0.0)
    z = jnp.dot(a.astype(jnp.bfloat16), w2_ref[...],
                preferred_element_type=jnp.float32) + b2_ref[...]

    h_ref[0] = h.astype(h_ref.dtype)
    z_ref[0] = z.astype(z_ref.dtype)


# ----------------------------------------------------------------------------
# Wrapper: layout glue (NCHW->NHWC, pads, bf16 cast) + the single pallas_call
# ----------------------------------------------------------------------------
def simclr_forward(x_nchw, params):
    """Matches SimCLR.forward with self.evaluation == False: returns (h, z)."""
    x_nhwc = jnp.transpose(x_nchw, (0, 2, 3, 1)).astype(jnp.float32)
    B, H, W, Cin = x_nhwc.shape

    conv_w = params["conv_w"]                     # (3, 3, Cin, Cout)  HWIO
    Cout = conv_w.shape[-1]
    Hd = params["proj_w1"].shape[-1]
    P = params["proj_w2"].shape[-1]

    # Pad channels 3 -> 8 (sublane-aligned per-tap contraction), pad spatially
    # for the "same" conv, cast to bf16 for the MXU.
    Cp = 8
    xp = jnp.pad(x_nhwc, ((0, 0), (1, 1), (1, 1), (0, Cp - Cin)))
    xp = xp.astype(jnp.bfloat16)                  # (B, H+2, W+2, Cp)

    # Conv weights: HWIO -> (9, Cp, Cout), tap-major / channel-minor, bf16.
    # NOTE: importing PyTorch (Cout, Cin, kh, kw) weights requires
    # w.transpose(2, 3, 1, 0) to HWIO first (verified vs lax.conv in __main__).
    wc = jnp.pad(conv_w.reshape(9, Cin, Cout), ((0, 0), (0, Cp - Cin), (0, 0)))
    wc = wc.astype(jnp.bfloat16)
    bc = params["conv_b"].reshape(1, Cout).astype(jnp.float32)

    w1 = params["proj_w1"].astype(jnp.bfloat16)
    b1 = params["proj_b1"].reshape(1, Hd).astype(jnp.float32)
    w2 = params["proj_w2"].astype(jnp.bfloat16)
    b2 = params["proj_b2"].reshape(1, P).astype(jnp.float32)

    S = H * W
    flops = B * (9 * 2 * S * Cp * Cout + 2 * S * Cout
                 + 2 * Cout * Hd + 2 * Hd * P)
    bytes_accessed = (xp.size * 2 + wc.size * 2 + w1.size * 2 + w2.size * 2
                      + (bc.size + b1.size + b2.size) * 4
                      + B * (Cout + P) * 4)

    h3, z3 = pl.pallas_call(
        _simclr_fused_kernel,
        out_shape=(jax.ShapeDtypeStruct((B, 1, Cout), jnp.float32),
                   jax.ShapeDtypeStruct((B, 1, P), jnp.float32)),
        grid=(B,),
        in_specs=[
            pl.BlockSpec((1, H + 2, W + 2, Cp), lambda b: (b, 0, 0, 0)),
            pl.BlockSpec((9, Cp, Cout), lambda b: (0, 0, 0)),   # VMEM-resident
            pl.BlockSpec((1, Cout), lambda b: (0, 0)),
            pl.BlockSpec((Cout, Hd), lambda b: (0, 0)),
            pl.BlockSpec((1, Hd), lambda b: (0, 0)),
            pl.BlockSpec((Hd, P), lambda b: (0, 0)),
            pl.BlockSpec((1, P), lambda b: (0, 0)),
        ],
        out_specs=(pl.BlockSpec((1, 1, Cout), lambda b: (b, 0, 0)),
                   pl.BlockSpec((1, 1, P), lambda b: (b, 0, 0))),
        compiler_params=pltpu.CompilerParams(
            dimension_semantics=("parallel",)),
        cost_estimate=pl.CostEstimate(flops=flops, transcendentals=0,
                                      bytes_accessed=bytes_accessed),
    )(xp, wc, bc, w1, b1, w2, b2)

    h = h3.reshape(B, Cout)        # h.view(h.size(0), -1) is a no-op here
    z = z3.reshape(B, P)
    return h, z
    # TODO(synk): evaluation branch (self.linear_classifier(h)) is not
    # exercised (evaluation == False in the reproduced path); classifier
    # weights are still initialized below for shape fidelity.


# ----------------------------------------------------------------------------
# Params + pure-JAX reference (guards conv weight-layout correctness)
# ----------------------------------------------------------------------------
def init_params(key, cin=3, enc_dim=128, hidden=128, proj_dim=128,
                num_classes=10):
    ks = jax.random.split(key, 7)
    scale = 0.1
    return {
        "conv_w":  scale * jax.random.normal(ks[0], (3, 3, cin, enc_dim), jnp.float32),
        "conv_b":  scale * jax.random.normal(ks[1], (enc_dim,), jnp.float32),
        "proj_w1": scale * jax.random.normal(ks[2], (enc_dim, hidden), jnp.float32),
        "proj_b1": scale * jax.random.normal(ks[3], (hidden,), jnp.float32),
        "proj_w2": scale * jax.random.normal(ks[4], (hidden, proj_dim), jnp.float32),
        "proj_b2": scale * jax.random.normal(ks[5], (proj_dim,), jnp.float32),
        # linear_classifier params (unused in the non-evaluation forward path)
        "cls_w":   scale * jax.random.normal(ks[6], (enc_dim, num_classes), jnp.float32),
        "cls_b":   jnp.zeros((num_classes,), jnp.float32),
    }


def _reference_forward(x_nchw, params):
    """f32 reference: lax.conv + mean pool + MLP (same math, no Pallas)."""
    x = jnp.transpose(x_nchw, (0, 2, 3, 1)).astype(jnp.float32)
    feat = jax.lax.conv_general_dilated(
        x, params["conv_w"], window_strides=(1, 1), padding="SAME",
        dimension_numbers=("NHWC", "HWIO", "NHWC"))
    feat = jnp.maximum(feat + params["conv_b"].reshape(1, 1, 1, -1), 0.0)
    h = jnp.mean(feat, axis=(1, 2))
    a = jnp.maximum(h @ params["proj_w1"] + params["proj_b1"], 0.0)
    z = a @ params["proj_w2"] + params["proj_b2"]
    return h, z


if __name__ == "__main__":
    key = jax.random.PRNGKey(0)
    k_x, k_p = jax.random.split(key)

    B, Cin, H, W = 2, 3, 16, 16
    x = jax.random.normal(k_x, (B, Cin, H, W), jnp.float32)   # NCHW like PyTorch
    params = init_params(k_p, cin=Cin)

    h, z = jax.jit(simclr_forward)(x, params)
    jax.block_until_ready((h, z))

    assert h.shape == (B, 128) and z.shape == (B, 128)
    assert h.dtype == jnp.float32 and z.dtype == jnp.float32

    # Correctness guard against the conv weight-layout pitfall (bf16 tolerance).
    h_ref, z_ref = _reference_forward(x, params)
    assert jnp.allclose(h, h_ref, atol=5e-2, rtol=5e-2), "h mismatch vs reference"
    assert jnp.allclose(z, z_ref, atol=5e-2, rtol=5e-2), "z mismatch vs reference"

    print("KERNEL_OK")
</pallas_src>

<mosaic_0001>
module attributes {stable_mosaic.version = 11 : i64} {
  func.func @_simclr_fused_kernel(%arg0: i32, %arg1: memref<1x18x18x8xbf16, #tpu.memory_space<vmem>>, %arg2: memref<9x8x128xbf16, #tpu.memory_space<vmem>>, %arg3: memref<1x128xf32, #tpu.memory_space<vmem>>, %arg4: memref<128x128xbf16, #tpu.memory_space<vmem>>, %arg5: memref<1x128xf32, #tpu.memory_space<vmem>>, %arg6: memref<128x128xbf16, #tpu.memory_space<vmem>>, %arg7: memref<1x128xf32, #tpu.memory_space<vmem>>, %arg8: memref<1x1x128xf32, #tpu.memory_space<vmem>>, %arg9: memref<1x1x128xf32, #tpu.memory_space<vmem>>) attributes {dimension_semantics = [#tpu.dimension_semantics<parallel>], iteration_bounds = array<i64: 2>, scalar_prefetch = 0 : i64, scratch_operands = 0 : i64, tpu.core_type = #tpu.core_type<tc>, window_params = [{transform_indices = @transform_0, window_bounds = array<i64: 1, 18, 18, 8>}, {pipeline_mode = #tpu.pipeline_mode<synchronous>, transform_indices = @transform_1, window_bounds = array<i64: 9, 8, 128>}, {pipeline_mode = #tpu.pipeline_mode<synchronous>, transform_indices = @transform_2, window_bounds = array<i64: 1, 128>}, {pipeline_mode = #tpu.pipeline_mode<synchronous>, transform_indices = @transform_3, window_bounds = array<i64: 128, 128>}, {pipeline_mode = #tpu.pipeline_mode<synchronous>, transform_indices = @transform_4, window_bounds = array<i64: 1, 128>}, {pipeline_mode = #tpu.pipeline_mode<synchronous>, transform_indices = @transform_5, window_bounds = array<i64: 128, 128>}, {pipeline_mode = #tpu.pipeline_mode<synchronous>, transform_indices = @transform_6, window_bounds = array<i64: 1, 128>}, {transform_indices = @transform_7, window_bounds = array<i64: 1, 1, 128>}, {transform_indices = @transform_8, window_bounds = array<i64: 1, 1, 128>}]} {
    %cst = arith.constant 0.000000e+00 : f32
    %0 = vector.broadcast %cst : f32 to vector<256x128xf32>
    %c0 = arith.constant 0 : index
    %c0_0 = arith.constant 0 : index
    %c0_1 = arith.constant 0 : index
    %c0_2 = arith.constant 0 : index
    %1 = vector.load %arg1[%c0, %c0_0, %c0_1, %c0_2] : memref<1x18x18x8xbf16, #tpu.memory_space<vmem>>, vector<1x16x16x8xbf16>
    %2 = vector.shape_cast %1 : vector<1x16x16x8xbf16> to vector<16x16x8xbf16>
    %3 = vector.shape_cast %2 : vector<16x16x8xbf16> to vector<256x8xbf16>
    %c0_3 = arith.constant 0 : index
    %c0_4 = arith.constant 0 : index
    %c0_5 = arith.constant 0 : index
    %4 = vector.load %arg2[%c0_3, %c0_4, %c0_5] : memref<9x8x128xbf16, #tpu.memory_space<vmem>>, vector<1x8x128xbf16>
    %5 = vector.shape_cast %4 : vector<1x8x128xbf16> to vector<8x128xbf16>
    %cst_6 = arith.constant dense<0.000000e+00> : vector<256x128xf32>
    %6 = tpu.matmul %3, %5, %cst_6 {dimension_numbers = #tpu.dot_dimension_numbers<[1], [0], [0], [1], [0, 0, 1, 1], [], []>} : vector<256x8xbf16>, vector<8x128xbf16>, vector<256x128xf32> -> vector<256x128xf32>
    %7 = arith.addf %0, %6 : vector<256x128xf32>
    %c0_7 = arith.constant 0 : index
    %c0_8 = arith.constant 0 : index
    %c1 = arith.constant 1 : index
    %c0_9 = arith.constant 0 : index
    %8 = vector.load %arg1[%c0_7, %c0_8, %c1, %c0_9] : memref<1x18x18x8xbf16, #tpu.memory_space<vmem>>, vector<1x16x16x8xbf16>
    %9 = vector.shape_cast %8 : vector<1x16x16x8xbf16> to vector<16x16x8xbf16>
    %10 = vector.shape_cast %9 : vector<16x16x8xbf16> to vector<256x8xbf16>
    %c1_10 = arith.constant 1 : index
    %c0_11 = arith.constant 0 : index
    %c0_12 = arith.constant 0 : index
    %11 = vector.load %arg2[%c1_10, %c0_11, %c0_12] : memref<9x8x128xbf16, #tpu.memory_space<vmem>>, vector<1x8x128xbf16>
    %12 = vector.shape_cast %11 : vector<1x8x128xbf16> to vector<8x128xbf16>
    %cst_13 = arith.constant dense<0.000000e+00> : vector<256x128xf32>
    %13 = tpu.matmul %10, %12, %cst_13 {dimension_numbers = #tpu.dot_dimension_numbers<[1], [0], [0], [1], [0, 0, 1, 1], [], []>} : vector<256x8xbf16>, vector<8x128xbf16>, vector<256x128xf32> -> vector<256x128xf32>
    %14 = arith.addf %7, %13 : vector<256x128xf32>
    %c0_14 = arith.constant 0 : index
    %c0_15 = arith.constant 0 : index
    %c2 = arith.constant 2 : index
    %c0_16 = arith.constant 0 : index
    %15 = vector.load %arg1[%c0_14, %c0_15, %c2, %c0_16] : memref<1x18x18x8xbf16, #tpu.memory_space<vmem>>, vector<1x16x16x8xbf16>
    %16 = vector.shape_cast %15 : vector<1x16x16x8xbf16> to vector<16x16x8xbf16>
    %17 = vector.shape_cast %16 : vector<16x16x8xbf16> to vector<256x8xbf16>
    %c2_17 = arith.constant 2 : index
    %c0_18 = arith.constant 0 : index
    %c0_19 = arith.constant 0 : index
    %18 = vector.load %arg2[%c2_17, %c0_18, %c0_19] : memref<9x8x128xbf16, #tpu.memory_space<vmem>>, vector<1x8x128xbf16>
    %19 = vector.shape_cast %18 : vector<1x8x128xbf16> to vector<8x128xbf16>
    %cst_20 = arith.constant dense<0.000000e+00> : vector<256x128xf32>
    %20 = tpu.matmul %17, %19, %cst_20 {dimension_numbers = #tpu.dot_dimension_numbers<[1], [0], [0], [1], [0, 0, 1, 1], [], []>} : vector<256x8xbf16>, vector<8x128xbf16>, vector<256x128xf32> -> vector<256x128xf32>
    %21 = arith.addf %14, %20 : vector<256x128xf32>
    %c0_21 = arith.constant 0 : index
    %c1_22 = arith.constant 1 : index
    %c0_23 = arith.constant 0 : index
    %c0_24 = arith.constant 0 : index
    %22 = vector.load %arg1[%c0_21, %c1_22, %c0_23, %c0_24] : memref<1x18x18x8xbf16, #tpu.memory_space<vmem>>, vector<1x16x16x8xbf16>
    %23 = vector.shape_cast %22 : vector<1x16x16x8xbf16> to vector<16x16x8xbf16>
    %24 = vector.shape_cast %23 : vector<16x16x8xbf16> to vector<256x8xbf16>
    %c3 = arith.constant 3 : index
    %c0_25 = arith.constant 0 : index
    %c0_26 = arith.constant 0 : index
    %25 = vector.load %arg2[%c3, %c0_25, %c0_26] : memref<9x8x128xbf16, #tpu.memory_space<vmem>>, vector<1x8x128xbf16>
    %26 = vector.shape_cast %25 : vector<1x8x128xbf16> to vector<8x128xbf16>
    %cst_27 = arith.constant dense<0.000000e+00> : vector<256x128xf32>
    %27 = tpu.matmul %24, %26, %cst_27 {dimension_numbers = #tpu.dot_dimension_numbers<[1], [0], [0], [1], [0, 0, 1, 1], [], []>} : vector<256x8xbf16>, vector<8x128xbf16>, vector<256x128xf32> -> vector<256x128xf32>
    %28 = arith.addf %21, %27 : vector<256x128xf32>
    %c0_28 = arith.constant 0 : index
    %c1_29 = arith.constant 1 : index
    %c1_30 = arith.constant 1 : index
    %c0_31 = arith.constant 0 : index
    %29 = vector.load %arg1[%c0_28, %c1_29, %c1_30, %c0_31] : memref<1x18x18x8xbf16, #tpu.memory_space<vmem>>, vector<1x16x16x8xbf16>
    %30 = vector.shape_cast %29 : vector<1x16x16x8xbf16> to vector<16x16x8xbf16>
    %31 = vector.shape_cast %30 : vector<16x16x8xbf16> to vector<256x8xbf16>
    %c4 = arith.constant 4 : index
    %c0_32 = arith.constant 0 : index
    %c0_33 = arith.constant 0 : index
    %32 = vector.load %arg2[%c4, %c0_32, %c0_33] : memref<9x8x128xbf16, #tpu.memory_space<vmem>>, vector<1x8x128xbf16>
    %33 = vector.shape_cast %32 : vector<1x8x128xbf16> to vector<8x128xbf16>
    %cst_34 = arith.constant dense<0.000000e+00> : vector<256x128xf32>
    %34 = tpu.matmul %31, %33, %cst_34 {dimension_numbers = #tpu.dot_dimension_numbers<[1], [0], [0], [1], [0, 0, 1, 1], [], []>} : vector<256x8xbf16>, vector<8x128xbf16>, vector<256x128xf32> -> vector<256x128xf32>
    %35 = arith.addf %28, %34 : vector<256x128xf32>
    %c0_35 = arith.constant 0 : index
    %c1_36 = arith.constant 1 : index
    %c2_37 = arith.constant 2 : index
    %c0_38 = arith.constant 0 : index
    %36 = vector.load %arg1[%c0_35, %c1_36, %c2_37, %c0_38] : memref<1x18x18x8xbf16, #tpu.memory_space<vmem>>, vector<1x16x16x8xbf16>
    %37 = vector.shape_cast %36 : vector<1x16x16x8xbf16> to vector<16x16x8xbf16>
    %38 = vector.shape_cast %37 : vector<16x16x8xbf16> to vector<256x8xbf16>
    %c5 = arith.constant 5 : index
    %c0_39 = arith.constant 0 : index
    %c0_40 = arith.constant 0 : index
    %39 = vector.load %arg2[%c5, %c0_39, %c0_40] : memref<9x8x128xbf16, #tpu.memory_space<vmem>>, vector<1x8x128xbf16>
    %40 = vector.shape_cast %39 : vector<1x8x128xbf16> to vector<8x128xbf16>
    %cst_41 = arith.constant dense<0.000000e+00> : vector<256x128xf32>
    %41 = tpu.matmul %38, %40, %cst_41 {dimension_numbers = #tpu.dot_dimension_numbers<[1], [0], [0], [1], [0, 0, 1, 1], [], []>} : vector<256x8xbf16>, vector<8x128xbf16>, vector<256x128xf32> -> vector<256x128xf32>
    %42 = arith.addf %35, %41 : vector<256x128xf32>
    %c0_42 = arith.constant 0 : index
    %c2_43 = arith.constant 2 : index
    %c0_44 = arith.constant 0 : index
    %c0_45 = arith.constant 0 : index
    %43 = vector.load %arg1[%c0_42, %c2_43, %c0_44, %c0_45] : memref<1x18x18x8xbf16, #tpu.memory_space<vmem>>, vector<1x16x16x8xbf16>
    %44 = vector.shape_cast %43 : vector<1x16x16x8xbf16> to vector<16x16x8xbf16>
    %45 = vector.shape_cast %44 : vector<16x16x8xbf16> to vector<256x8xbf16>
    %c6 = arith.constant 6 : index
    %c0_46 = arith.constant 0 : index
    %c0_47 = arith.constant 0 : index
    %46 = vector.load %arg2[%c6, %c0_46, %c0_47] : memref<9x8x128xbf16, #tpu.memory_space<vmem>>, vector<1x8x128xbf16>
    %47 = vector.shape_cast %46 : vector<1x8x128xbf16> to vector<8x128xbf16>
    %cst_48 = arith.constant dense<0.000000e+00> : vector<256x128xf32>
    %48 = tpu.matmul %45, %47, %cst_48 {dimension_numbers = #tpu.dot_dimension_numbers<[1], [0], [0], [1], [0, 0, 1, 1], [], []>} : vector<256x8xbf16>, vector<8x128xbf16>, vector<256x128xf32> -> vector<256x128xf32>
    %49 = arith.addf %42, %48 : vector<256x128xf32>
    %c0_49 = arith.constant 0 : index
    %c2_50 = arith.constant 2 : index
    %c1_51 = arith.constant 1 : index
    %c0_52 = arith.constant 0 : index
    %50 = vector.load %arg1[%c0_49, %c2_50, %c1_51, %c0_52] : memref<1x18x18x8xbf16, #tpu.memory_space<vmem>>, vector<1x16x16x8xbf16>
    %51 = vector.shape_cast %50 : vector<1x16x16x8xbf16> to vector<16x16x8xbf16>
    %52 = vector.shape_cast %51 : vector<16x16x8xbf16> to vector<256x8xbf16>
    %c7 = arith.constant 7 : index
    %c0_53 = arith.constant 0 : index
    %c0_54 = arith.constant 0 : index
    %53 = vector.load %arg2[%c7, %c0_53, %c0_54] : memref<9x8x128xbf16, #tpu.memory_space<vmem>>, vector<1x8x128xbf16>
    %54 = vector.shape_cast %53 : vector<1x8x128xbf16> to vector<8x128xbf16>
    %cst_55 = arith.constant dense<0.000000e+00> : vector<256x128xf32>
    %55 = tpu.matmul %52, %54, %cst_55 {dimension_numbers = #tpu.dot_dimension_numbers<[1], [0], [0], [1], [0, 0, 1, 1], [], []>} : vector<256x8xbf16>, vector<8x128xbf16>, vector<256x128xf32> -> vector<256x128xf32>
    %56 = arith.addf %49, %55 : vector<256x128xf32>
    %c0_56 = arith.constant 0 : index
    %c2_57 = arith.constant 2 : index
    %c2_58 = arith.constant 2 : index
    %c0_59 = arith.constant 0 : index
    %57 = vector.load %arg1[%c0_56, %c2_57, %c2_58, %c0_59] : memref<1x18x18x8xbf16, #tpu.memory_space<vmem>>, vector<1x16x16x8xbf16>
    %58 = vector.shape_cast %57 : vector<1x16x16x8xbf16> to vector<16x16x8xbf16>
    %59 = vector.shape_cast %58 : vector<16x16x8xbf16> to vector<256x8xbf16>
    %c8 = arith.constant 8 : index
    %c0_60 = arith.constant 0 : index
    %c0_61 = arith.constant 0 : index
    %60 = vector.load %arg2[%c8, %c0_60, %c0_61] : memref<9x8x128xbf16, #tpu.memory_space<vmem>>, vector<1x8x128xbf16>
    %61 = vector.shape_cast %60 : vector<1x8x128xbf16> to vector<8x128xbf16>
    %cst_62 = arith.constant dense<0.000000e+00> : vector<256x128xf32>
    %62 = tpu.matmul %59, %61, %cst_62 {dimension_numbers = #tpu.dot_dimension_numbers<[1], [0], [0], [1], [0, 0, 1, 1], [], []>} : vector<256x8xbf16>, vector<8x128xbf16>, vector<256x128xf32> -> vector<256x128xf32>
    %63 = arith.addf %56, %62 : vector<256x128xf32>
    %c0_63 = arith.constant 0 : index
    %c0_64 = arith.constant 0 : index
    %64 = vector.load %arg3[%c0_63, %c0_64] : memref<1x128xf32, #tpu.memory_space<vmem>>, vector<1x128xf32>
    %65 = vector.broadcast %64 : vector<1x128xf32> to vector<256x128xf32>
    %66 = arith.addf %63, %65 : vector<256x128xf32>
    %cst_65 = arith.constant 0.000000e+00 : f32
    %67 = vector.broadcast %cst_65 : f32 to vector<256x128xf32>
    %68 = arith.maximumf %66, %67 : vector<256x128xf32>
    %cst_66 = arith.constant 3.906250e-03 : f32
    %69 = vector.broadcast %cst_66 : f32 to vector<1x256xf32>
    %cst_67 = arith.constant dense<0.000000e+00> : vector<1x128xf32>
    %70 = tpu.matmul %69, %68, %cst_67 {dimension_numbers = #tpu.dot_dimension_numbers<[1], [0], [0], [1], [0, 0, 1, 1], [], []>} : vector<1x256xf32>, vector<256x128xf32>, vector<1x128xf32> -> vector<1x128xf32>
    %71 = arith.truncf %70 : vector<1x128xf32> to vector<1x128xbf16>
    %c0_68 = arith.constant 0 : index
    %c0_69 = arith.constant 0 : index
    %72 = vector.load %arg4[%c0_68, %c0_69] : memref<128x128xbf16, #tpu.memory_space<vmem>>, vector<128x128xbf16>
    %cst_70 = arith.constant dense<0.000000e+00> : vector<1x128xf32>
    %73 = tpu.matmul %71, %72, %cst_70 {dimension_numbers = #tpu.dot_dimension_numbers<[1], [0], [0], [1], [0, 0, 1, 1], [], []>} : vector<1x128xbf16>, vector<128x128xbf16>, vector<1x128xf32> -> vector<1x128xf32>
    %c0_71 = arith.constant 0 : index
    %c0_72 = arith.constant 0 : index
    %74 = vector.load %arg5[%c0_71, %c0_72] : memref<1x128xf32, #tpu.memory_space<vmem>>, vector<1x128xf32>
    %75 = arith.addf %73, %74 : vector<1x128xf32>
    %cst_73 = arith.constant 0.000000e+00 : f32
    %76 = vector.broadcast %cst_73 : f32 to vector<1x128xf32>
    %77 = arith.maximumf %75, %76 : vector<1x128xf32>
    %78 = arith.truncf %77 : vector<1x128xf32> to vector<1x128xbf16>
    %c0_74 = arith.constant 0 : index
    %c0_75 = arith.constant 0 : index
    %79 = vector.load %arg6[%c0_74, %c0_75] : memref<128x128xbf16, #tpu.memory_space<vmem>>, vector<128x128xbf16>
    %cst_76 = arith.constant dense<0.000000e+00> : vector<1x128xf32>
    %80 = tpu.matmul %78, %79, %cst_76 {dimension_numbers = #tpu.dot_dimension_numbers<[1], [0], [0], [1], [0, 0, 1, 1], [], []>} : vector<1x128xbf16>, vector<128x128xbf16>, vector<1x128xf32> -> vector<1x128xf32>
    %c0_77 = arith.constant 0 : index
    %c0_78 = arith.constant 0 : index
    %81 = vector.load %arg7[%c0_77, %c0_78] : memref<1x128xf32, #tpu.memory_space<vmem>>, vector<1x128xf32>
    %82 = arith.addf %80, %81 : vector<1x128xf32>
    %c0_79 = arith.constant 0 : index
    %c0_80 = arith.constant 0 : index
    %c0_81 = arith.constant 0 : index
    %83 = vector.load %arg8[%c0_79, %c0_80, %c0_81] : memref<1x1x128xf32, #tpu.memory_space<vmem>>, vector<1x1x128xf32>
    %84 = vector.shape_cast %83 : vector<1x1x128xf32> to vector<1x128xf32>
    %85 = vector.shape_cast %70 : vector<1x128xf32> to vector<1x1x128xf32>
    tpu.vector_store %arg8[%c0_79, %c0_80, %c0_81], %85 {strides = array<i32>} : memref<1x1x128xf32, #tpu.memory_space<vmem>>, vector<1x1x128xf32>,
    %c0_82 = arith.constant 0 : index
    %c0_83 = arith.constant 0 : index
    %c0_84 = arith.constant 0 : index
    %86 = vector.load %arg9[%c0_82, %c0_83, %c0_84] : memref<1x1x128xf32, #tpu.memory_space<vmem>>, vector<1x1x128xf32>
    %87 = vector.shape_cast %86 : vector<1x1x128xf32> to vector<1x128xf32>
    %88 = vector.shape_cast %82 : vector<1x128xf32> to vector<1x1x128xf32>
    tpu.vector_store %arg9[%c0_82, %c0_83, %c0_84], %88 {strides = array<i32>} : memref<1x1x128xf32, #tpu.memory_space<vmem>>, vector<1x1x128xf32>,
    return
  }
  func.func @transform_0(%arg0: i32) -> (i32, i32, i32, i32) {
    %c0_i32 = arith.constant 0 : i32
    %c0_i32_0 = arith.constant 0 : i32
    %c0_i32_1 = arith.constant 0 : i32
    %c0_i32_2 = arith.constant 0 : i32
    return %arg0, %c0_i32, %c0_i32_0, %c0_i32_1 : i32, i32, i32, i32
  }
  func.func @transform_1(%arg0: i32) -> (i32, i32, i32) {
    %c0_i32 = arith.constant 0 : i32
    %c0_i32_0 = arith.constant 0 : i32
    %c0_i32_1 = arith.constant 0 : i32
    %c0_i32_2 = arith.constant 0 : i32
    return %c0_i32, %c0_i32_0, %c0_i32_1 : i32, i32, i32
  }
  func.func @transform_2(%arg0: i32) -> (i32, i32) {
    %c0_i32 = arith.constant 0 : i32
    %c0_i32_0 = arith.constant 0 : i32
    %c0_i32_1 = arith.constant 0 : i32
    return %c0_i32, %c0_i32_0 : i32, i32
  }
  func.func @transform_3(%arg0: i32) -> (i32, i32) {
    %c0_i32 = arith.constant 0 : i32
    %c0_i32_0 = arith.constant 0 : i32
    %c0_i32_1 = arith.constant 0 : i32
    return %c0_i32, %c0_i32_0 : i32, i32
  }
  func.func @transform_4(%arg0: i32) -> (i32, i32) {
    %c0_i32 = arith.constant 0 : i32
    %c0_i32_0 = arith.constant 0 : i32
    %c0_i32_1 = arith.constant 0 : i32
    return %c0_i32, %c0_i32_0 : i32, i32
  }
  func.func @transform_5(%arg0: i32) -> (i32, i32) {
    %c0_i32 = arith.constant 0 : i32
    %c0_i32_0 = arith.constant 0 : i32
    %c0_i32_1 = arith.constant 0 : i32
    return %c0_i32, %c0_i32_0 : i32, i32
  }
  func.func @transform_6(%arg0: i32) -> (i32, i32) {
    %c0_i32 = arith.constant 0 : i32
    %c0_i32_0 = arith.constant 0 : i32
    %c0_i32_1 = arith.constant 0 : i32
    return %c0_i32, %c0_i32_0 : i32, i32
  }
  func.func @transform_7(%arg0: i32) -> (i32, i32, i32) {
    %c0_i32 = arith.constant 0 : i32
    %c0_i32_0 = arith.constant 0 : i32
    %c0_i32_1 = arith.constant 0 : i32
    return %arg0, %c0_i32, %c0_i32_0 : i32, i32, i32
  }
  func.func @transform_8(%arg0: i32) -> (i32, i32, i32) {
    %c0_i32 = arith.constant 0 : i32
    %c0_i32_0 = arith.constant 0 : i32
    %c0_i32_1 = arith.constant 0 : i32
    return %arg0, %c0_i32, %c0_i32_0 : i32, i32, i32
  }
}

</mosaic_0001>

<llo_original>
// kernel: simclr_forward.1
$region0: #{simclr_forward.1}
  #allocation0 [shape = 'u32[]', space=smem, size = 0x4, offset = 0x4, fixed_abs, tag = 'smem constant byte address 0x4 - core index']
  #allocation1 [shape = 'u32[144,128]{1,0:T(1,128)}', space=vmem, size = 0x12000, scoped, tag = 'internal scratch']
  %s0 = inlined_call_operand.vmem [shape: bf16[2,18,18,8], index: 0, kind: input, shape index: {}]
  %s1 = inlined_call_operand.vmem [shape: bf16[9,8,128], index: 1, kind: input, shape index: {}]
  %s2 = inlined_call_operand.vmem [shape: f32[1,128], index: 2, kind: input, shape index: {}]
  %s3 = inlined_call_operand.vmem [shape: bf16[128,128], index: 3, kind: input, shape index: {}]
  %s4 = inlined_call_operand.vmem [shape: f32[1,128], index: 4, kind: input, shape index: {}]
  %s5 = inlined_call_operand.vmem [shape: bf16[128,128], index: 5, kind: input, shape index: {}]
  %s6 = inlined_call_operand.vmem [shape: f32[1,128], index: 6, kind: input, shape index: {}]
  %s7 = inlined_call_operand.hbm [shape: f32[2,1,128], index: 7, kind: output, shape index: {0}]
  %s8 = inlined_call_operand.hbm [shape: f32[2,1,128], index: 8, kind: output, shape index: {1}]
  %9 = xla_tuple %s7, %s8
  %s10 = sld [smem:[#allocation0]]
  $region69: #{simclr_forward.1} parent=0
    _
  %s12 = ssub.s32 1, %s10
  %s13 = scalar_select 0, %s12, %s10
  $region1: #{simclr_forward.1} parent=0
    #allocation2 [shape = 'u8[1024]{0}', space=vmem, size = 0x400, scoped, tag = 'output window, operand 0']
    #allocation3 [shape = 's32[2]{0}', space=sflag, size = 0x8, scoped, tag = 'scoped memory for simclr_forward.1']
    #allocation4 [shape = 'u8[1024]{0}', space=vmem, size = 0x400, scoped, tag = 'output window, operand 1']
    #allocation5 [shape = 's32[2]{0}', space=sflag, size = 0x8, scoped, tag = 'scoped memory for simclr_forward.1']
    %14 = vsyncpa [#allocation3], 0
    %s15 = scalar_lea.sflag [#allocation3], 1
    %16 = vsyncpa %s15, 0
    %17 = vsyncpa [#allocation5], 0
    %s18 = scalar_lea.sflag [#allocation5], 1
    %19 = vsyncpa %s18, 0
    loop: start=0, step=1, limit=4
    $region2: #{simclr_forward.1} parent=1 // loop_pre_header
      _
    $region3: #{simclr_forward.1} parent=1 // loop_header
      %s21 = sphi 0, %s25
      %p22 = scmp.ge.s32.totalorder %s21, 4
      %s31 = sphi 0, %s33
      %s34 = sphi 0, %s31
      %s35 = sphi 0, %s34
      %s51 = sphi 0, %s35
      %s55 = sphi 0, %s55
      %s57 = sphi 0, %s55
      %s58 = sphi 0, %s57
      %s72 = sphi 0, %s58
      %s76 = sphi 0, %s76
      %s78 = sphi 0, %s76
      %s79 = sphi 0, %s78
      %s93 = sphi 0, %s79
      %s97 = sphi 0, %s97
      %s99 = sphi 0, %s97
      %s100 = sphi 0, %s99
      %s114 = sphi 0, %s100
      %s118 = sphi 0, %s118
      %s120 = sphi 0, %s118
      %s121 = sphi 0, %s120
      %s135 = sphi 0, %s121
      %s139 = sphi 0, %s139
      %s141 = sphi 0, %s139
      %s142 = sphi 0, %s141
      %s156 = sphi 0, %s142
      %s160 = sphi 0, %s160
      %s162 = sphi 0, %s160
      %s163 = sphi 0, %s162
      %s177 = sphi 0, %s163
      %s183 = sphi 0, %s185
      %s186 = sphi 0, %s183
      %s187 = sphi 0, %s186
      %s203 = sphi 0, %s187
      %s209 = sphi 0, %s211
      %s212 = sphi 0, %s209
      %s213 = sphi 0, %s212
      %s229 = sphi 0, %s213
    $region4: #{simclr_forward.1} parent=1 // loop_header_branch
      %24 = sbr.rel (%p22) target = $region8
    $region5: #{simclr_forward.1} parent=1 // loop_body
      %s26 = ssub.s32 %s21, 1
      %s27 = ssub.s32 %s21, 2
      %s28 = sadd.s32 %s21, 1
      %s29 = ssub.s32 %s21, %s28
      %p30 = scmp.eq.s32.totalorder %s29, 0
      %s32 = sadd.s32 %s31, 1
      %s33 = scalar_select %p30, %s31, %s32
      %p36 = pneg %p30
      %p37 = scmp.eq.s32.totalorder %s21, 1
      %p38 = por %p36, %p37
      %p39 = scmp.ne.s32.totalorder %s31, %s34
      %p40 = scmp.eq.s32.totalorder %s21, 0
      %p41 = por %p39, %p40
      %p42 = scmp.ne.s32.totalorder %s31, %s34
      %p43 = scmp.eq.s32.totalorder %s26, 1
      %p44 = por %p42, %p43
      %p45 = scmp.ne.s32.totalorder %s34, %s35
      %p46 = scmp.eq.s32.totalorder %s26, 0
      %p47 = por %p45, %p46
      %p48 = scmp.ne.s32.totalorder %s34, %s35
      %p49 = scmp.eq.s32.totalorder %s27, 1
      %p50 = por %p48, %p49
      %p52 = scmp.ne.s32.totalorder %s35, %s51
      %p53 = scmp.eq.s32.totalorder %s27, 0
      %p54 = por %p52, %p53
      %s56 = sadd.s32 %s55, 1
      %p59 = scmp.eq.s32.totalorder %s21, 1
      %p60 = scmp.ne.s32.totalorder %s55, %s57
      %p61 = scmp.eq.s32.totalorder %s21, 0
      %p62 = por %p60, %p61
      %p63 = scmp.ne.s32.totalorder %s55, %s57
      %p64 = scmp.eq.s32.totalorder %s26, 1
      %p65 = por %p63, %p64
      %p66 = scmp.ne.s32.totalorder %s57, %s58
      %p67 = scmp.eq.s32.totalorder %s26, 0
      %p68 = por %p66, %p67
      %p69 = scmp.ne.s32.totalorder %s57, %s58
      %p70 = scmp.eq.s32.totalorder %s27, 1
      %p71 = por %p69, %p70
      %p73 = scmp.ne.s32.totalorder %s58, %s72
      %p74 = scmp.eq.s32.totalorder %s27, 0
      %p75 = por %p73, %p74
      %s77 = sadd.s32 %s76, 1
      %p80 = scmp.eq.s32.totalorder %s21, 1
      %p81 = scmp.ne.s32.totalorder %s76, %s78
      %p82 = scmp.eq.s32.totalorder %s21, 0
      %p83 = por %p81, %p82
      %p84 = scmp.ne.s32.totalorder %s76, %s78
      %p85 = scmp.eq.s32.totalorder %s26, 1
      %p86 = por %p84, %p85
      %p87 = scmp.ne.s32.totalorder %s78, %s79
      %p88 = scmp.eq.s32.totalorder %s26, 0
      %p89 = por %p87, %p88
      %p90 = scmp.ne.s32.totalorder %s78, %s79
      %p91 = scmp.eq.s32.totalorder %s27, 1
      %p92 = por %p90, %p91
      %p94 = scmp.ne.s32.totalorder %s79, %s93
      %p95 = scmp.eq.s32.totalorder %s27, 0
      %p96 = por %p94, %p95
      %s98 = sadd.s32 %s97, 1
      %p101 = scmp.eq.s32.totalorder %s21, 1
      %p102 = scmp.ne.s32.totalorder %s97, %s99
      %p103 = scmp.eq.s32.totalorder %s21, 0
      %p104 = por %p102, %p103
      %p105 = scmp.ne.s32.totalorder %s97, %s99
      %p106 = scmp.eq.s32.totalorder %s26, 1
      %p107 = por %p105, %p106
      %p108 = scmp.ne.s32.totalorder %s99, %s100
      %p109 = scmp.eq.s32.totalorder %s26, 0
      %p110 = por %p108, %p109
      %p111 = scmp.ne.s32.totalorder %s99, %s100
      %p112 = scmp.eq.s32.totalorder %s27, 1
      %p113 = por %p111, %p112
      %p115 = scmp.ne.s32.totalorder %s100, %s114
      %p116 = scmp.eq.s32.totalorder %s27, 0
      %p117 = por %p115, %p116
      %s119 = sadd.s32 %s118, 1
      %p122 = scmp.eq.s32.totalorder %s21, 1
      %p123 = scmp.ne.s32.totalorder %s118, %s120
      %p124 = scmp.eq.s32.totalorder %s21, 0
      %p125 = por %p123, %p124
      %p126 = scmp.ne.s32.totalorder %s118, %s120
      %p127 = scmp.eq.s32.totalorder %s26, 1
      %p128 = por %p126, %p127
      %p129 = scmp.ne.s32.totalorder %s120, %s121
      %p130 = scmp.eq.s32.totalorder %s26, 0
      %p131 = por %p129, %p130
      %p132 = scmp.ne.s32.totalorder %s120, %s121
      %p133 = scmp.eq.s32.totalorder %s27, 1
      %p134 = por %p132, %p133
      %p136 = scmp.ne.s32.totalorder %s121, %s135
      %p137 = scmp.eq.s32.totalorder %s27, 0
      %p138 = por %p136, %p137
      %s140 = sadd.s32 %s139, 1
      %p143 = scmp.eq.s32.totalorder %s21, 1
      %p144 = scmp.ne.s32.totalorder %s139, %s141
      %p145 = scmp.eq.s32.totalorder %s21, 0
      %p146 = por %p144, %p145
      %p147 = scmp.ne.s32.totalorder %s139, %s141
      %p148 = scmp.eq.s32.totalorder %s26, 1
      %p149 = por %p147, %p148
      %p150 = scmp.ne.s32.totalorder %s141, %s142
      %p151 = scmp.eq.s32.totalorder %s26, 0
      %p152 = por %p150, %p151
      %p153 = scmp.ne.s32.totalorder %s141, %s142
      %p154 = scmp.eq.s32.totalorder %s27, 1
      %p155 = por %p153, %p154
      %p157 = scmp.ne.s32.totalorder %s142, %s156
      %p158 = scmp.eq.s32.totalorder %s27, 0
      %p159 = por %p157, %p158
      %s161 = sadd.s32 %s160, 1
      %p164 = scmp.eq.s32.totalorder %s21, 1
      %p165 = scmp.ne.s32.totalorder %s160, %s162
      %p166 = scmp.eq.s32.totalorder %s21, 0
      %p167 = por %p165, %p166
      %p168 = scmp.ne.s32.totalorder %s160, %s162
      %p169 = scmp.eq.s32.totalorder %s26, 1
      %p170 = por %p168, %p169
      %p171 = scmp.ne.s32.totalorder %s162, %s163
      %p172 = scmp.eq.s32.totalorder %s26, 0
      %p173 = por %p171, %p172
      %p174 = scmp.ne.s32.totalorder %s162, %s163
      %p175 = scmp.eq.s32.totalorder %s27, 1
      %p176 = por %p174, %p175
      %p178 = scmp.ne.s32.totalorder %s163, %s177
      %p179 = scmp.eq.s32.totalorder %s27, 0
      %p180 = por %p178, %p179
      %s181 = ssub.s32 %s21, %s28
      %p182 = scmp.eq.s32.totalorder %s181, 0
      %s184 = sadd.s32 %s183, 1
      %s185 = scalar_select %p182, %s183, %s184
      %p188 = pneg %p182
      %p189 = scmp.eq.s32.totalorder %s21, 1
      %p190 = por %p188, %p189
      %p191 = scmp.ne.s32.totalorder %s183, %s186
      %p192 = scmp.eq.s32.totalorder %s21, 0
      %p193 = por %p191, %p192
      %p194 = scmp.ne.s32.totalorder %s183, %s186
      %p195 = scmp.eq.s32.totalorder %s26, 1
      %p196 = por %p194, %p195
      %p197 = scmp.ne.s32.totalorder %s186, %s187
      %p198 = scmp.eq.s32.totalorder %s26, 0
      %p199 = por %p197, %p198
      %p200 = scmp.ne.s32.totalorder %s186, %s187
      %p201 = scmp.eq.s32.totalorder %s27, 1
      %p202 = por %p200, %p201
      %p204 = scmp.ne.s32.totalorder %s187, %s203
      %p205 = scmp.eq.s32.totalorder %s27, 0
      %p206 = por %p204, %p205
      %s207 = ssub.s32 %s21, %s28
      %p208 = scmp.eq.s32.totalorder %s207, 0
      %s210 = sadd.s32 %s209, 1
      %s211 = scalar_select %p208, %s209, %s210
      %p214 = pneg %p208
      %p215 = scmp.eq.s32.totalorder %s21, 1
      %p216 = por %p214, %p215
      %p217 = scmp.ne.s32.totalorder %s209, %s212
      %p218 = scmp.eq.s32.totalorder %s21, 0
      %p219 = por %p217, %p218
      %p220 = scmp.ne.s32.totalorder %s209, %s212
      %p221 = scmp.eq.s32.totalorder %s26, 1
      %p222 = por %p220, %p221
      %p223 = scmp.ne.s32.totalorder %s212, %s213
      %p224 = scmp.eq.s32.totalorder %s26, 0
      %p225 = por %p223, %p224
      %p226 = scmp.ne.s32.totalorder %s212, %s213
      %p227 = scmp.eq.s32.totalorder %s27, 1
      %p228 = por %p226, %p227
      %p230 = scmp.ne.s32.totalorder %s213, %s229
      %p231 = scmp.eq.s32.totalorder %s27, 0
      %p232 = por %p230, %p231
      %p233 = scmp.le.s32.totalorder 1, %s21
      %p234 = scmp.lt.s32.totalorder %s21, 3
      %p235 = pnand %p233, %p234
      %p236 = pneg %p235
      // Predicated region
      $region9: #{simclr_forward.1} parent=5 // pred_check
        _
      $region10: #{simclr_forward.1} parent=5 // pred_check_branch
        %238 = sbr.rel (%p235) target = $region12
      $region11: #{simclr_forward.1} parent=5 // pred_region
        %s239 = ssub.s32 %s21, 1
        // Predicated region
        $region13: #{simclr_forward.1} parent=11 // pred_check
          %p240 = pneg %p68
        $region14: #{simclr_forward.1} parent=11 // pred_check_branch
          %242 = sbr.rel (%p240) target = $region16
        $region15: #{simclr_forward.1} parent=11 // pred_region
          _
        $region16: #{simclr_forward.1} parent=11 // pred_fallthru
          _
        // Predicated region
        $region17: #{simclr_forward.1} parent=11 // pred_check
          %p243 = pneg %p89
        $region18: #{simclr_forward.1} parent=11 // pred_check_branch
          %245 = sbr.rel (%p243) target = $region20
        $region19: #{simclr_forward.1} parent=11 // pred_region
          _
        $region20: #{simclr_forward.1} parent=11 // pred_fallthru
          _
        // Predicated region
        $region21: #{simclr_forward.1} parent=11 // pred_check
          %p246 = pneg %p110
        $region22: #{simclr_forward.1} parent=11 // pred_check_branch
          %248 = sbr.rel (%p246) target = $region24
        $region23: #{simclr_forward.1} parent=11 // pred_region
          _
        $region24: #{simclr_forward.1} parent=11 // pred_fallthru
          _
        // Predicated region
        $region25: #{simclr_forward.1} parent=11 // pred_check
          %p249 = pneg %p131
        $region26: #{simclr_forward.1} parent=11 // pred_check_branch
          %251 = sbr.rel (%p249) target = $region28
        $region27: #{simclr_forward.1} parent=11 // pred_region
          _
        $region28: #{simclr_forward.1} parent=11 // pred_fallthru
          _
        // Predicated region
        $region29: #{simclr_forward.1} parent=11 // pred_check
          %p252 = pneg %p152
        $region30: #{simclr_forward.1} parent=11 // pred_check_branch
          %254 = sbr.rel (%p252) target = $region32
        $region31: #{simclr_forward.1} parent=11 // pred_region
          _
        $region32: #{simclr_forward.1} parent=11 // pred_fallthru
          _
        // Predicated region
        $region33: #{simclr_forward.1} parent=11 // pred_check
          %p255 = pneg %p173
        $region34: #{simclr_forward.1} parent=11 // pred_check_branch
          %257 = sbr.rel (%p255) target = $region36
        $region35: #{simclr_forward.1} parent=11 // pred_region
          _
        $region36: #{simclr_forward.1} parent=11 // pred_fallthru
          _
      $region12: #{simclr_forward.1} parent=5 // pred_fallthru
        _
      %p258 = scmp.lt.s32.totalorder %s21, 2
      // Predicated region
      $region37: #{simclr_forward.1} parent=5 // pred_check
        %p259 = pneg %p258
      $region38: #{simclr_forward.1} parent=5 // pred_check_branch
        %261 = sbr.rel (%p259) target = $region40
      $region39: #{simclr_forward.1} parent=5 // pred_region
        // Predicated region
        $region41: #{simclr_forward.1} parent=39 // pred_check
          %p262 = pneg %p41
        $region42: #{simclr_forward.1} parent=39 // pred_check_branch
          %264 = sbr.rel (%p262) target = $region44
        $region43: #{simclr_forward.1} parent=39 // pred_region
          %p265 = scmp.lt.s32.totalorder %s21, 1
          %s266 = scalar_select %p265, %s21, 1
          %s267 = smul.addr %s266, 54
          %s268 = smul.addr %s267, 4
          %s269 = scalar_lea.vmem %s0, %s268
        $region44: #{simclr_forward.1} parent=39 // pred_fallthru
          _
      $region40: #{simclr_forward.1} parent=5 // pred_fallthru
        _
      %p270 = scmp.le.s32.totalorder 1, %s21
      %p271 = scmp.lt.s32.totalorder %s21, 3
      %p272 = pnand %p270, %p271
      %p273 = pneg %p272
      // Predicated region
      $region45: #{simclr_forward.1} parent=5 // pred_check
        _
      $region46: #{simclr_forward.1} parent=5 // pred_check_branch
        %275 = sbr.rel (%p272) target = $region48
      $region47: #{simclr_forward.1} parent=5 // pred_region
        %s276 = ssub.s32 %s21, 1
        %p277 = scmp.lt.s32.totalorder %s26, 1
        %s278 = scalar_select %p277, %s26, 1
        %s279 = smul.addr %s278, 54
        %s280 = smul.addr %s279, 4
        %s281 = scalar_lea.vmem %s0, %s280
        %p282 = pneg %p47
        %p283 = pneg %p44
        %p284 = pneg %p68
        %p285 = pneg %p65
        %p286 = pneg %p89
        %p287 = pneg %p86
        %p288 = pneg %p110
        %p289 = pneg %p107
        %p290 = pneg %p131
        %p291 = pneg %p128
        %p292 = pneg %p152
        %p293 = pneg %p149
        %p294 = pneg %p173
        %p295 = pneg %p170
        %p296 = pneg %p199
        %p297 = pneg %p196
        %s298 = sand.u32 %s186, 1
        %s299 = scalar_lea.sflag [#allocation3], %s298
        %s300 = sand.u32 %s186, 1
        %s301 = scalar_lea.vmem [#allocation2], %s300
        %p302 = pneg %p225
        %p303 = pneg %p222
        %s304 = sand.u32 %s212, 1
        %s305 = scalar_lea.sflag [#allocation5], %s304
        %s306 = sand.u32 %s212, 1
        %s307 = scalar_lea.vmem [#allocation4], %s306
        %p308 = scmp.lt.s32.totalorder %s26, 1
        %s309 = scalar_select %p308, %s26, 1
        %s310 = smul.addr %s309, 54
        %s311 = smul.addr %s310, 4
        %s312 = scalar_lea.vmem %s0, %s311
        %v314 = vld [vmem:[%s312] sm:$0xf]
        %v315 = vld [vmem:[%s312 + $0x4] sm:$0xf]
        %v316 = vld [vmem:[%s312 + $0xc] sm:$0xf]
        %v317 = vld [vmem:[%s312 + $0x10] sm:$0xf]
        %v318 = vld [vmem:[%s312 + $0x18] sm:$0xf]
        %v319 = vld [vmem:[%s312 + $0x1c] sm:$0xf]
        %v320 = vld [vmem:[%s312 + $0x24] sm:$0xf]
        %v321 = vld [vmem:[%s312 + $0x28] sm:$0xf]
        %v322 = vld [vmem:[%s312 + $0x30] sm:$0xf]
        %v323 = vld [vmem:[%s312 + $0x34] sm:$0xf]
        %v324 = vld [vmem:[%s312 + $0x3c] sm:$0xf]
        %v325 = vld [vmem:[%s312 + $0x40] sm:$0xf]
        %v326 = vld [vmem:[%s312 + $0x48] sm:$0xf]
        %v327 = vld [vmem:[%s312 + $0x4c] sm:$0xf]
        %v328 = vld [vmem:[%s312 + $0x54] sm:$0xf]
        %v329 = vld [vmem:[%s312 + $0x58] sm:$0xf]
        %v330 = vld [vmem:[%s312 + $0x60] sm:$0xf]
        %v331 = vld [vmem:[%s312 + $0x64] sm:$0xf]
        %v332 = vld [vmem:[%s312 + $0x6c] sm:$0xf]
        %v333 = vld [vmem:[%s312 + $0x70] sm:$0xf]
        %v334 = vld [vmem:[%s312 + $0x78] sm:$0xf]
        %v335 = vld [vmem:[%s312 + $0x7c] sm:$0xf]
        %v336 = vld [vmem:[%s312 + $0x84] sm:$0xf]
        %v337 = vld [vmem:[%s312 + $0x88] sm:$0xf]
        %v338 = vld [vmem:[%s312 + $0x90] sm:$0xf]
        %v339 = vld [vmem:[%s312 + $0x94] sm:$0xf]
        %v340 = vld [vmem:[%s312 + $0x9c] sm:$0xf]
        %v341 = vld [vmem:[%s312 + $0xa0] sm:$0xf]
        %v342 = vld [vmem:[%s312 + $0xa8] sm:$0xf]
        %v343 = vld [vmem:[%s312 + $0xac] sm:$0xf]
        %v344 = vld [vmem:[%s312 + $0xb4] sm:$0xf]
        %v345 = vld [vmem:[%s312 + $0xb8] sm:$0xf]
        %v346 = vld [vmem:[%s1] sm:$0xf]
        %v347 = vld [vmem:[%s312 + $0x8] sm:$0x1]
        %v348 = vld [vmem:[%s312 + $0x14] sm:$0x1]
        %v349 = vld [vmem:[%s312 + $0x20] sm:$0x1]
        %v350 = vld [vmem:[%s312 + $0x2c] sm:$0x1]
        %v351 = vld [vmem:[%s312 + $0x38] sm:$0x1]
        %v352 = vld [vmem:[%s312 + $0x44] sm:$0x1]
        %v353 = vld [vmem:[%s312 + $0x50] sm:$0x1]
        %v354 = vld [vmem:[%s312 + $0x5c] sm:$0x1]
        %v355 = vld [vmem:[%s312 + $0x68] sm:$0x1]
        %v356 = vld [vmem:[%s312 + $0x74] sm:$0x1]
        %v357 = vld [vmem:[%s312 + $0x80] sm:$0x1]
        %v358 = vld [vmem:[%s312 + $0x8c] sm:$0x1]
        %v359 = vld [vmem:[%s312 + $0x98] sm:$0x1]
        %v360 = vld [vmem:[%s312 + $0xa4] sm:$0x1]
        %v361 = vld [vmem:[%s312 + $0xb0] sm:$0x1]
        %v362 = vld [vmem:[%s312 + $0xbc] sm:$0x1]
        %vm363 = vsmask.f32 3328
        %vm364 = vsmask.f32 7440
        %vm365 = vmor %vm363, %vm364
        %v367 = vshrl.u32 %v314, 16
        %v369 = vrot.slane %v367, 4
        %v370 = vshll.u32 %v314, 16
        %v372 = vrot.slane %v370, 5
        %v373 = vor.u32 %v369, %v372
        %v374 = vrot.slane %v373, 4
        %v376 = vshll.u32 %v315, 16
        %v378 = vrot.slane %v376, 5
        %v379 = vsel %vm365, %v374, %v378
        %v380 = vshrl.u32 %v315, 16
        %v382 = vrot.slane %v380, 4
        %v383 = vor.u32 %v382, %v378
        %v384 = vrot.slane %v383, 4
        %v386 = vshll.u32 %v347, 16
        %v388 = vrot.slane %v386, 5
        %v389 = vsel %vm365, %v384, %v388
        %v391 = vshrl.u32 %v316, 16
        %v393 = vrot.slane %v391, 4
        %v394 = vshll.u32 %v316, 16
        %v396 = vrot.slane %v394, 5
        %v397 = vor.u32 %v393, %v396
        %v398 = vrot.slane %v397, 4
        %v400 = vshll.u32 %v317, 16
        %v402 = vrot.slane %v400, 5
        %v403 = vsel %vm365, %v398, %v402
        %v404 = vshrl.u32 %v317, 16
        %v406 = vrot.slane %v404, 4
        %v407 = vor.u32 %v406, %v402
        %v408 = vrot.slane %v407, 4
        %v410 = vshll.u32 %v348, 16
        %v412 = vrot.slane %v410, 5
        %v413 = vsel %vm365, %v408, %v412
        %v415 = vshrl.u32 %v318, 16
        %v417 = vrot.slane %v415, 4
        %v418 = vshll.u32 %v318, 16
        %v420 = vrot.slane %v418, 5
        %v421 = vor.u32 %v417, %v420
        %v422 = vrot.slane %v421, 4
        %v424 = vshll.u32 %v319, 16
        %v426 = vrot.slane %v424, 5
        %v427 = vsel %vm365, %v422, %v426
        %v428 = vshrl.u32 %v319, 16
        %v430 = vrot.slane %v428, 4
        %v431 = vor.u32 %v430, %v426
        %v432 = vrot.slane %v431, 4
        %v434 = vshll.u32 %v349, 16
        %v436 = vrot.slane %v434, 5
        %v437 = vsel %vm365, %v432, %v436
        %v439 = vshrl.u32 %v320, 16
        %v441 = vrot.slane %v439, 4
        %v442 = vshll.u32 %v320, 16
        %v444 = vrot.slane %v442, 5
        %v445 = vor.u32 %v441, %v444
        %v446 = vrot.slane %v445, 4
        %v448 = vshll.u32 %v321, 16
        %v450 = vrot.slane %v448, 5
        %v451 = vsel %vm365, %v446, %v450
        %v452 = vshrl.u32 %v321, 16
        %v454 = vrot.slane %v452, 4
        %v455 = vor.u32 %v454, %v450
        %v456 = vrot.slane %v455, 4
        %v458 = vshll.u32 %v350, 16
        %v460 = vrot.slane %v458, 5
        %v461 = vsel %vm365, %v456, %v460
        %v463 = vshrl.u32 %v322, 16
        %v465 = vrot.slane %v463, 4
        %v466 = vshll.u32 %v322, 16
        %v468 = vrot.slane %v466, 5
        %v469 = vor.u32 %v465, %v468
        %v470 = vrot.slane %v469, 4
        %v472 = vshll.u32 %v323, 16
        %v474 = vrot.slane %v472, 5
        %v475 = vsel %vm365, %v470, %v474
        %v476 = vshrl.u32 %v323, 16
        %v478 = vrot.slane %v476, 4
        %v479 = vor.u32 %v478, %v474
        %v480 = vrot.slane %v479, 4
        %v482 = vshll.u32 %v351, 16
        %v484 = vrot.slane %v482, 5
        %v485 = vsel %vm365, %v480, %v484
        %v487 = vshrl.u32 %v324, 16
        %v489 = vrot.slane %v487, 4
        %v490 = vshll.u32 %v324, 16
        %v492 = vrot.slane %v490, 5
        %v493 = vor.u32 %v489, %v492
        %v494 = vrot.slane %v493, 4
        %v496 = vshll.u32 %v325, 16
        %v498 = vrot.slane %v496, 5
        %v499 = vsel %vm365, %v494, %v498
        %v500 = vshrl.u32 %v325, 16
        %v502 = vrot.slane %v500, 4
        %v503 = vor.u32 %v502, %v498
        %v504 = vrot.slane %v503, 4
        %v506 = vshll.u32 %v352, 16
        %v508 = vrot.slane %v506, 5
        %v509 = vsel %vm365, %v504, %v508
        %v511 = vshrl.u32 %v326, 16
        %v513 = vrot.slane %v511, 4
        %v514 = vshll.u32 %v326, 16
        %v516 = vrot.slane %v514, 5
        %v517 = vor.u32 %v513, %v516
        %v518 = vrot.slane %v517, 4
        %v520 = vshll.u32 %v327, 16
        %v522 = vrot.slane %v520, 5
        %v523 = vsel %vm365, %v518, %v522
        %v524 = vshrl.u32 %v327, 16
        %v526 = vrot.slane %v524, 4
        %v527 = vor.u32 %v526, %v522
        %v528 = vrot.slane %v527, 4
        %v530 = vshll.u32 %v353, 16
        %v532 = vrot.slane %v530, 5
        %v533 = vsel %vm365, %v528, %v532
        %v535 = vshrl.u32 %v328, 16
        %v537 = vrot.slane %v535, 4
        %v538 = vshll.u32 %v328, 16
        %v540 = vrot.slane %v538, 5
        %v541 = vor.u32 %v537, %v540
        %v542 = vrot.slane %v541, 4
        %v544 = vshll.u32 %v329, 16
        %v546 = vrot.slane %v544, 5
        %v547 = vsel %vm365, %v542, %v546
        %v548 = vshrl.u32 %v329, 16
        %v550 = vrot.slane %v548, 4
        %v551 = vor.u32 %v550, %v546
        %v552 = vrot.slane %v551, 4
        %v554 = vshll.u32 %v354, 16
        %v556 = vrot.slane %v554, 5
        %v557 = vsel %vm365, %v552, %v556
        %v559 = vshrl.u32 %v330, 16
        %v561 = vrot.slane %v559, 4
        %v562 = vshll.u32 %v330, 16
        %v564 = vrot.slane %v562, 5
        %v565 = vor.u32 %v561, %v564
        %v566 = vrot.slane %v565, 4
        %v568 = vshll.u32 %v331, 16
        %v570 = vrot.slane %v568, 5
        %v571 = vsel %vm365, %v566, %v570
        %v572 = vshrl.u32 %v331, 16
        %v574 = vrot.slane %v572, 4
        %v575 = vor.u32 %v574, %v570
        %v576 = vrot.slane %v575, 4
        %v578 = vshll.u32 %v355, 16
        %v580 = vrot.slane %v578, 5
        %v581 = vsel %vm365, %v576, %v580
        %v583 = vshrl.u32 %v332, 16
        %v585 = vrot.slane %v583, 4
        %v586 = vshll.u32 %v332, 16
        %v588 = vrot.slane %v586, 5
        %v589 = vor.u32 %v585, %v588
        %v590 = vrot.slane %v589, 4
        %v592 = vshll.u32 %v333, 16
        %v594 = vrot.slane %v592, 5
        %v595 = vsel %vm365, %v590, %v594
        %v596 = vshrl.u32 %v333, 16
        %v598 = vrot.slane %v596, 4
        %v599 = vor.u32 %v598, %v594
        %v600 = vrot.slane %v599, 4
        %v602 = vshll.u32 %v356, 16
        %v604 = vrot.slane %v602, 5
        %v605 = vsel %vm365, %v600, %v604
        %v607 = vshrl.u32 %v334, 16
        %v609 = vrot.slane %v607, 4
        %v610 = vshll.u32 %v334, 16
        %v612 = vrot.slane %v610, 5
        %v613 = vor.u32 %v609, %v612
        %v614 = vrot.slane %v613, 4
        %v616 = vshll.u32 %v335, 16
        %v618 = vrot.slane %v616, 5
        %v619 = vsel %vm365, %v614, %v618
        %v620 = vshrl.u32 %v335, 16
        %v622 = vrot.slane %v620, 4
        %v623 = vor.u32 %v622, %v618
        %v624 = vrot.slane %v623, 4
        %v626 = vshll.u32 %v357, 16
        %v628 = vrot.slane %v626, 5
        %v629 = vsel %vm365, %v624, %v628
        %v631 = vshrl.u32 %v336, 16
        %v633 = vrot.slane %v631, 4
        %v634 = vshll.u32 %v336, 16
        %v636 = vrot.slane %v634, 5
        %v637 = vor.u32 %v633, %v636
        %v638 = vrot.slane %v637, 4
        %v640 = vshll.u32 %v337, 16
        %v642 = vrot.slane %v640, 5
        %v643 = vsel %vm365, %v638, %v642
        %v644 = vshrl.u32 %v337, 16
        %v646 = vrot.slane %v644, 4
        %v647 = vor.u32 %v646, %v642
        %v648 = vrot.slane %v647, 4
        %v650 = vshll.u32 %v358, 16
        %v652 = vrot.slane %v650, 5
        %v653 = vsel %vm365, %v648, %v652
        %v655 = vshrl.u32 %v338, 16
        %v657 = vrot.slane %v655, 4
        %v658 = vshll.u32 %v338, 16
        %v660 = vrot.slane %v658, 5
        %v661 = vor.u32 %v657, %v660
        %v662 = vrot.slane %v661, 4
        %v664 = vshll.u32 %v339, 16
        %v666 = vrot.slane %v664, 5
        %v667 = vsel %vm365, %v662, %v666
        %v668 = vshrl.u32 %v339, 16
        %v670 = vrot.slane %v668, 4
        %v671 = vor.u32 %v670, %v666
        %v672 = vrot.slane %v671, 4
        %v674 = vshll.u32 %v359, 16
        %v676 = vrot.slane %v674, 5
        %v677 = vsel %vm365, %v672, %v676
        %v679 = vshrl.u32 %v340, 16
        %v681 = vrot.slane %v679, 4
        %v682 = vshll.u32 %v340, 16
        %v684 = vrot.slane %v682, 5
        %v685 = vor.u32 %v681, %v684
        %v686 = vrot.slane %v685, 4
        %v688 = vshll.u32 %v341, 16
        %v690 = vrot.slane %v688, 5
        %v691 = vsel %vm365, %v686, %v690
        %v692 = vshrl.u32 %v341, 16
        %v694 = vrot.slane %v692, 4
        %v695 = vor.u32 %v694, %v690
        %v696 = vrot.slane %v695, 4
        %v698 = vshll.u32 %v360, 16
        %v700 = vrot.slane %v698, 5
        %v701 = vsel %vm365, %v696, %v700
        %v703 = vshrl.u32 %v342, 16
        %v705 = vrot.slane %v703, 4
        %v706 = vshll.u32 %v342, 16
        %v708 = vrot.slane %v706, 5
        %v709 = vor.u32 %v705, %v708
        %v710 = vrot.slane %v709, 4
        %v712 = vshll.u32 %v343, 16
        %v714 = vrot.slane %v712, 5
        %v715 = vsel %vm365, %v710, %v714
        %v716 = vshrl.u32 %v343, 16
        %v718 = vrot.slane %v716, 4
        %v719 = vor.u32 %v718, %v714
        %v720 = vrot.slane %v719, 4
        %v722 = vshll.u32 %v361, 16
        %v724 = vrot.slane %v722, 5
        %v725 = vsel %vm365, %v720, %v724
        %v727 = vshrl.u32 %v344, 16
        %v729 = vrot.slane %v727, 4
        %v730 = vshll.u32 %v344, 16
        %v732 = vrot.slane %v730, 5
        %v733 = vor.u32 %v729, %v732
        %v734 = vrot.slane %v733, 4
        %v736 = vshll.u32 %v345, 16
        %v738 = vrot.slane %v736, 5
        %v739 = vsel %vm365, %v734, %v738
        %v740 = vshrl.u32 %v345, 16
        %v742 = vrot.slane %v740, 4
        %v743 = vor.u32 %v742, %v738
        %v744 = vrot.slane %v743, 4
        %v746 = vshll.u32 %v362, 16
        %v748 = vrot.slane %v746, 5
        %v749 = vsel %vm365, %v744, %v748
        %s750 = scalar_lea.vmem %s1, 4
        %v751 = vld [vmem:[%s750] sm:$0xf]
        %v752 = vunpack.c.l.b16 %v379
        %v753 = vunpack.c.l.b16 %v389
        %v754 = vunpack.c.l.b16 %v403
        %v755 = vunpack.c.l.b16 %v413
        %v756 = vunpack.c.l.b16 %v427
        %v757 = vunpack.c.l.b16 %v437
        %v758 = vunpack.c.l.b16 %v451
        %v759 = vunpack.c.l.b16 %v461
        %v760 = vunpack.c.l.b16 %v475
        %v761 = vunpack.c.l.b16 %v485
        %v762 = vunpack.c.l.b16 %v499
        %v763 = vunpack.c.l.b16 %v509
        %v764 = vunpack.c.l.b16 %v523
        %v765 = vunpack.c.l.b16 %v533
        %v766 = vunpack.c.l.b16 %v547
        %v767 = vunpack.c.l.b16 %v557
        %v768 = vunpack.c.l.b16 %v571
        %v769 = vunpack.c.l.b16 %v581
        %v770 = vunpack.c.l.b16 %v595
        %v771 = vunpack.c.l.b16 %v605
        %v772 = vunpack.c.l.b16 %v619
        %v773 = vunpack.c.l.b16 %v629
        %v774 = vunpack.c.l.b16 %v643
        %v775 = vunpack.c.l.b16 %v653
        %v776 = vunpack.c.l.b16 %v667
        %v777 = vunpack.c.l.b16 %v677
        %v778 = vunpack.c.l.b16 %v691
        %v779 = vunpack.c.l.b16 %v701
        %v780 = vunpack.c.l.b16 %v715
        %v781 = vunpack.c.l.b16 %v725
        %v782 = vunpack.c.l.b16 %v739
        %v783 = vunpack.c.l.b16 %v749
        %v784 = vpack.c.b16 %v753, %v752
        %v785 = vpack.c.b16 %v755, %v754
        %v786 = vpack.c.b16 %v757, %v756
        %v787 = vpack.c.b16 %v759, %v758
        %v788 = vpack.c.b16 %v761, %v760
        %v789 = vpack.c.b16 %v763, %v762
        %v790 = vpack.c.b16 %v765, %v764
        %v791 = vpack.c.b16 %v767, %v766
        %v792 = vpack.c.b16 %v769, %v768
        %v793 = vpack.c.b16 %v771, %v770
        %v794 = vpack.c.b16 %v773, %v772
        %v795 = vpack.c.b16 %v775, %v774
        %v796 = vpack.c.b16 %v777, %v776
        %v797 = vpack.c.b16 %v779, %v778
        %v798 = vpack.c.b16 %v781, %v780
        %v799 = vpack.c.b16 %v783, %v782
        %vm800 = vcmask 64512
        %v802 = vsel %vm800, %v784, 0
        %v805 = vsel %vm800, %v785, 0
        %v808 = vsel %vm800, %v786, 0
        %v811 = vsel %vm800, %v787, 0
        %v814 = vsel %vm800, %v788, 0
        %v817 = vsel %vm800, %v789, 0
        %v820 = vsel %vm800, %v790, 0
        %v823 = vsel %vm800, %v791, 0
        %v826 = vsel %vm800, %v792, 0
        %v829 = vsel %vm800, %v793, 0
        %v832 = vsel %vm800, %v794, 0
        %v835 = vsel %vm800, %v795, 0
        %v838 = vsel %vm800, %v796, 0
        %v841 = vsel %vm800, %v797, 0
        %v844 = vsel %vm800, %v798, 0
        %v847 = vsel %vm800, %v799, 0
        %vm849 = vcmask 1043456
        %v851 = vsel %vm849, %v751, 0
        %853 = vmatprep.subr.bf16.mxu0 0
        %854 = vmatpush1.bf16.msra.mxu0 0
        %855 = vmatprep.subr.bf16.mxu0 0
        %856 = vmatpush1.bf16.msra.mxu0 0
        %857 = vmatprep.subr.bf16.mxu0 0
        %858 = vmatpush1.bf16.msra.mxu0 0
        %859 = vmatprep.subr.bf16.mxu0 0
        %860 = vmatpush1.bf16.msra.mxu0 0
        %861 = vmatprep.subr.bf16.mxu0 0
        %862 = vmatpush1.bf16.msra.mxu0 0
        %863 = vmatprep.subr.bf16.mxu0 0
        %864 = vmatpush1.bf16.msra.mxu0 0
        %865 = vmatprep.subr.bf16.mxu0 0
        %866 = vmatpush1.bf16.msra.mxu0 0
        %867 = vmatprep.subr.bf16.mxu0 0
        %868 = vmatpush1.bf16.msra.mxu0 %v851
        %869 = vmatprep.subr.bf16.mxu0 0
        %870 = vmatpush2.bf16.msra.mxu0 0
        %871 = vmatprep.subr.bf16.mxu0 0
        %872 = vmatpush2.bf16.msra.mxu0 0
        %873 = vmatprep.subr.bf16.mxu0 0
        %874 = vmatpush2.bf16.msra.mxu0 0
        %875 = vmatprep.subr.bf16.mxu0 0
        %876 = vmatpush2.bf16.msra.mxu0 0
        %877 = vmatprep.subr.bf16.mxu0 0
        %878 = vmatpush2.bf16.msra.mxu0 0
        %879 = vmatprep.subr.bf16.mxu0 0
        %880 = vmatpush2.bf16.msra.mxu0 0
        %881 = vmatprep.subr.bf16.mxu0 0
        %882 = vmatpush2.bf16.msra.mxu0 0
        %883 = vmatprep.subr.bf16.mxu0 0
        %884 = vmatpush2.bf16.msra.mxu0 0
        %885 = vmatprep.mubr.bf16.mxu0 0
        %886 = vmatmul.mubr.bf16.gmra.mxu0 %v802
        %v887 = vpop.f32.mrf.mxu0
        %v888 = vadd.f32 0.0, %v887
        %v889 = vpop.f32.mrf.mxu0
        %v890 = vpop.f32.mrf.mxu0
        %v891 = vadd.f32 0.0, %v890
        %v892 = vpop.f32.mrf.mxu0
        %893 = vmatprep.mubr.bf16.mxu0 0
        %894 = vmatmul.mubr.bf16.gmra.mxu0 %v805
        %v895 = vpop.f32.mrf.mxu0
        %v896 = vadd.f32 0.0, %v895
        %v897 = vpop.f32.mrf.mxu0
        %v898 = vpop.f32.mrf.mxu0
        %v899 = vadd.f32 0.0, %v898
        %v900 = vpop.f32.mrf.mxu0
        %901 = vmatprep.mubr.bf16.mxu0 0
        %902 = vmatmul.mubr.bf16.gmra.mxu0 %v808
        %v903 = vpop.f32.mrf.mxu0
        %v904 = vadd.f32 0.0, %v903
        %v905 = vpop.f32.mrf.mxu0
        %v906 = vpop.f32.mrf.mxu0
        %v907 = vadd.f32 0.0, %v906
        %v908 = vpop.f32.mrf.mxu0
        %909 = vmatprep.mubr.bf16.mxu0 0
        %910 = vmatmul.mubr.bf16.gmra.mxu0 %v811
        %v911 = vpop.f32.mrf.mxu0
        %v912 = vadd.f32 0.0, %v911
        %v913 = vpop.f32.mrf.mxu0
        %v914 = vpop.f32.mrf.mxu0
        %v915 = vadd.f32 0.0, %v914
        %v916 = vpop.f32.mrf.mxu0
        %917 = vmatprep.mubr.bf16.mxu0 0
        %918 = vmatmul.mubr.bf16.gmra.mxu0 %v814
        %v919 = vpop.f32.mrf.mxu0
        %v920 = vadd.f32 0.0, %v919
        %v921 = vpop.f32.mrf.mxu0
        %v922 = vpop.f32.mrf.mxu0
        %v923 = vadd.f32 0.0, %v922
        %v924 = vpop.f32.mrf.mxu0
        %925 = vmatprep.mubr.bf16.mxu0 0
        %926 = vmatmul.mubr.bf16.gmra.mxu0 %v817
        %v927 = vpop.f32.mrf.mxu0
        %v928 = vadd.f32 0.0, %v927
        %v929 = vpop.f32.mrf.mxu0
        %v930 = vpop.f32.mrf.mxu0
        %v931 = vadd.f32 0.0, %v930
        %v932 = vpop.f32.mrf.mxu0
        %933 = vmatprep.mubr.bf16.mxu0 0
        %934 = vmatmul.mubr.bf16.gmra.mxu0 %v820
        %v935 = vpop.f32.mrf.mxu0
        %v936 = vadd.f32 0.0, %v935
        %v937 = vpop.f32.mrf.mxu0
        %v938 = vpop.f32.mrf.mxu0
        %v939 = vadd.f32 0.0, %v938
        %v940 = vpop.f32.mrf.mxu0
        %941 = vmatprep.mubr.bf16.mxu0 0
        %942 = vmatmul.mubr.bf16.gmra.mxu0 %v823
        %v943 = vpop.f32.mrf.mxu0
        %v944 = vadd.f32 0.0, %v943
        %v945 = vpop.f32.mrf.mxu0
        %v946 = vpop.f32.mrf.mxu0
        %v947 = vadd.f32 0.0, %v946
        %v948 = vpop.f32.mrf.mxu0
        %949 = vmatprep.mubr.bf16.mxu0 0
        %950 = vmatmul.mubr.bf16.gmra.mxu0 %v826
        %v951 = vpop.f32.mrf.mxu0
        %v952 = vadd.f32 0.0, %v951
        %v953 = vpop.f32.mrf.mxu0
        %v954 = vpop.f32.mrf.mxu0
        %v955 = vadd.f32 0.0, %v954
        %v956 = vpop.f32.mrf.mxu0
        %957 = vmatprep.mubr.bf16.mxu0 0
        %958 = vmatmul.mubr.bf16.gmra.mxu0 %v829
        %v959 = vpop.f32.mrf.mxu0
        %v960 = vadd.f32 0.0, %v959
        %v961 = vpop.f32.mrf.mxu0
        %v962 = vpop.f32.mrf.mxu0
        %v963 = vadd.f32 0.0, %v962
        %v964 = vpop.f32.mrf.mxu0
        %965 = vmatprep.mubr.bf16.mxu0 0
        %966 = vmatmul.mubr.bf16.gmra.mxu0 %v832
        %v967 = vpop.f32.mrf.mxu0
        %v968 = vadd.f32 0.0, %v967
        %v969 = vpop.f32.mrf.mxu0
        %v970 = vpop.f32.mrf.mxu0
        %v971 = vadd.f32 0.0, %v970
        %v972 = vpop.f32.mrf.mxu0
        %973 = vmatprep.mubr.bf16.mxu0 0
        %974 = vmatmul.mubr.bf16.gmra.mxu0 %v835
        %v975 = vpop.f32.mrf.mxu0
        %v976 = vadd.f32 0.0, %v975
        %v977 = vpop.f32.mrf.mxu0
        %v978 = vpop.f32.mrf.mxu0
        %v979 = vadd.f32 0.0, %v978
        %v980 = vpop.f32.mrf.mxu0
        %981 = vmatprep.mubr.bf16.mxu0 0
        %982 = vmatmul.mubr.bf16.gmra.mxu0 %v838
        %v983 = vpop.f32.mrf.mxu0
        %v984 = vadd.f32 0.0, %v983
        %v985 = vpop.f32.mrf.mxu0
        %v986 = vpop.f32.mrf.mxu0
        %v987 = vadd.f32 0.0, %v986
        %v988 = vpop.f32.mrf.mxu0
        %989 = vmatprep.mubr.bf16.mxu0 0
        %990 = vmatmul.mubr.bf16.gmra.mxu0 %v841
        %v991 = vpop.f32.mrf.mxu0
        %v992 = vadd.f32 0.0, %v991
        %v993 = vpop.f32.mrf.mxu0
        %v994 = vpop.f32.mrf.mxu0
        %v995 = vadd.f32 0.0, %v994
        %v996 = vpop.f32.mrf.mxu0
        %997 = vmatprep.mubr.bf16.mxu0 0
        %998 = vmatmul.mubr.bf16.gmra.mxu0 %v844
        %v999 = vpop.f32.mrf.mxu0
        %v1000 = vadd.f32 0.0, %v999
        %v1001 = vpop.f32.mrf.mxu0
        %v1002 = vpop.f32.mrf.mxu0
        %v1003 = vadd.f32 0.0, %v1002
        %v1004 = vpop.f32.mrf.mxu0
        %1005 = vmatprep.mubr.bf16.mxu0 0
        %1006 = vmatmul.mubr.bf16.gmra.mxu0 %v847
        %v1007 = vpop.f32.mrf.mxu0
        %v1008 = vadd.f32 0.0, %v1007
        %v1009 = vpop.f32.mrf.mxu0
        %v1010 = vpop.f32.mrf.mxu0
        %v1011 = vadd.f32 0.0, %v1010
        %v1012 = vpop.f32.mrf.mxu0
        %1013 = vdwg.mxu0
        %v1046 = vunpack.c.l.b16 %v314
        %v1047 = vunpack.c.l.b16 %v315
        %v1048 = vunpack.c.l.b16 %v316
        %v1049 = vunpack.c.l.b16 %v317
        %v1050 = vunpack.c.l.b16 %v318
        %v1051 = vunpack.c.l.b16 %v319
        %v1052 = vunpack.c.l.b16 %v320
        %v1053 = vunpack.c.l.b16 %v321
        %v1054 = vunpack.c.l.b16 %v322
        %v1055 = vunpack.c.l.b16 %v323
        %v1056 = vunpack.c.l.b16 %v324
        %v1057 = vunpack.c.l.b16 %v325
        %v1058 = vunpack.c.l.b16 %v326
        %v1059 = vunpack.c.l.b16 %v327
        %v1060 = vunpack.c.l.b16 %v328
        %v1061 = vunpack.c.l.b16 %v329
        %v1062 = vunpack.c.l.b16 %v330
        %v1063 = vunpack.c.l.b16 %v331
        %v1064 = vunpack.c.l.b16 %v332
        %v1065 = vunpack.c.l.b16 %v333
        %v1066 = vunpack.c.l.b16 %v334
        %v1067 = vunpack.c.l.b16 %v335
        %v1068 = vunpack.c.l.b16 %v336
        %v1069 = vunpack.c.l.b16 %v337
        %v1070 = vunpack.c.l.b16 %v338
        %v1071 = vunpack.c.l.b16 %v339
        %v1072 = vunpack.c.l.b16 %v340
        %v1073 = vunpack.c.l.b16 %v341
        %v1074 = vunpack.c.l.b16 %v342
        %v1075 = vunpack.c.l.b16 %v343
        %v1076 = vunpack.c.l.b16 %v344
        %v1077 = vunpack.c.l.b16 %v345
        %v1078 = vpack.c.b16 %v1047, %v1046
        %v1079 = vpack.c.b16 %v1049, %v1048
        %v1080 = vpack.c.b16 %v1051, %v1050
        %v1081 = vpack.c.b16 %v1053, %v1052
        %v1082 = vpack.c.b16 %v1055, %v1054
        %v1083 = vpack.c.b16 %v1057, %v1056
        %v1084 = vpack.c.b16 %v1059, %v1058
        %v1085 = vpack.c.b16 %v1061, %v1060
        %v1086 = vpack.c.b16 %v1063, %v1062
        %v1087 = vpack.c.b16 %v1065, %v1064
        %v1088 = vpack.c.b16 %v1067, %v1066
        %v1089 = vpack.c.b16 %v1069, %v1068
        %v1090 = vpack.c.b16 %v1071, %v1070
        %v1091 = vpack.c.b16 %v1073, %v1072
        %v1092 = vpack.c.b16 %v1075, %v1074
        %v1093 = vpack.c.b16 %v1077, %v1076
        %v1095 = vsel %vm800, %v1078, 0
        %v1098 = vsel %vm800, %v1079, 0
        %v1101 = vsel %vm800, %v1080, 0
        %v1104 = vsel %vm800, %v1081, 0
        %v1107 = vsel %vm800, %v1082, 0
        %v1110 = vsel %vm800, %v1083, 0
        %v1113 = vsel %vm800, %v1084, 0
        %v1116 = vsel %vm800, %v1085, 0
        %v1119 = vsel %vm800, %v1086, 0
        %v1122 = vsel %vm800, %v1087, 0
        %v1125 = vsel %vm800, %v1088, 0
        %v1128 = vsel %vm800, %v1089, 0
        %v1131 = vsel %vm800, %v1090, 0
        %v1134 = vsel %vm800, %v1091, 0
        %v1137 = vsel %vm800, %v1092, 0
        %v1140 = vsel %vm800, %v1093, 0
        %v1143 = vsel %vm849, %v346, 0
        %1145 = vmatprep.subr.bf16.mxu0 0
        %1146 = vmatpush1.bf16.msra.mxu0 0
        %1147 = vmatprep.subr.bf16.mxu0 0
        %1148 = vmatpush1.bf16.msra.mxu0 0
        %1149 = vmatprep.subr.bf16.mxu0 0
        %1150 = vmatpush1.bf16.msra.mxu0 0
        %1151 = vmatprep.subr.bf16.mxu0 0
        %1152 = vmatpush1.bf16.msra.mxu0 0
        %1153 = vmatprep.subr.bf16.mxu0 0
        %1154 = vmatpush1.bf16.msra.mxu0 0
        %1155 = vmatprep.subr.bf16.mxu0 0
        %1156 = vmatpush1.bf16.msra.mxu0 0
        %1157 = vmatprep.subr.bf16.mxu0 0
        %1158 = vmatpush1.bf16.msra.mxu0 0
        %1159 = vmatprep.subr.bf16.mxu0 0
        %1160 = vmatpush1.bf16.msra.mxu0 %v1143
        %1161 = vmatprep.subr.bf16.mxu0 0
        %1162 = vmatpush2.bf16.msra.mxu0 0
        %1163 = vmatprep.subr.bf16.mxu0 0
        %1164 = vmatpush2.bf16.msra.mxu0 0
        %1165 = vmatprep.subr.bf16.mxu0 0
        %1166 = vmatpush2.bf16.msra.mxu0 0
        %1167 = vmatprep.subr.bf16.mxu0 0
        %1168 = vmatpush2.bf16.msra.mxu0 0
        %1169 = vmatprep.subr.bf16.mxu0 0
        %1170 = vmatpush2.bf16.msra.mxu0 0
        %1171 = vmatprep.subr.bf16.mxu0 0
        %1172 = vmatpush2.bf16.msra.mxu0 0
        %1173 = vmatprep.subr.bf16.mxu0 0
        %1174 = vmatpush2.bf16.msra.mxu0 0
        %1175 = vmatprep.subr.bf16.mxu0 0
        %1176 = vmatpush2.bf16.msra.mxu0 0
        %1177 = vmatprep.mubr.bf16.mxu0 0
        %1178 = vmatmul.mubr.bf16.gmra.mxu0 %v1095
        %v1179 = vpop.f32.mrf.mxu0
        %v1180 = vadd.f32 %v888, %v1179
        %v1181 = vpop.f32.mrf.mxu0
        %v1182 = vpop.f32.mrf.mxu0
        %v1183 = vadd.f32 %v891, %v1182
        %v1184 = vpop.f32.mrf.mxu0
        %1185 = vmatprep.mubr.bf16.mxu0 0
        %1186 = vmatmul.mubr.bf16.gmra.mxu0 %v1098
        %v1187 = vpop.f32.mrf.mxu0
        %v1188 = vadd.f32 %v896, %v1187
        %v1189 = vpop.f32.mrf.mxu0
        %v1190 = vpop.f32.mrf.mxu0
        %v1191 = vadd.f32 %v899, %v1190
        %v1192 = vpop.f32.mrf.mxu0
        %1193 = vmatprep.mubr.bf16.mxu0 0
        %1194 = vmatmul.mubr.bf16.gmra.mxu0 %v1101
        %v1195 = vpop.f32.mrf.mxu0
        %v1196 = vadd.f32 %v904, %v1195
        %v1197 = vpop.f32.mrf.mxu0
        %v1198 = vpop.f32.mrf.mxu0
        %v1199 = vadd.f32 %v907, %v1198
        %v1200 = vpop.f32.mrf.mxu0
        %1201 = vmatprep.mubr.bf16.mxu0 0
        %1202 = vmatmul.mubr.bf16.gmra.mxu0 %v1104
        %v1203 = vpop.f32.mrf.mxu0
        %v1204 = vadd.f32 %v912, %v1203
        %v1205 = vpop.f32.mrf.mxu0
        %v1206 = vpop.f32.mrf.mxu0
        %v1207 = vadd.f32 %v915, %v1206
        %v1208 = vpop.f32.mrf.mxu0
        %1209 = vmatprep.mubr.bf16.mxu0 0
        %1210 = vmatmul.mubr.bf16.gmra.mxu0 %v1107
        %v1211 = vpop.f32.mrf.mxu0
        %v1212 = vadd.f32 %v920, %v1211
        %v1213 = vpop.f32.mrf.mxu0
        %v1214 = vpop.f32.mrf.mxu0
        %v1215 = vadd.f32 %v923, %v1214
        %v1216 = vpop.f32.mrf.mxu0
        %1217 = vmatprep.mubr.bf16.mxu0 0
        %1218 = vmatmul.mubr.bf16.gmra.mxu0 %v1110
        %v1219 = vpop.f32.mrf.mxu0
        %v1220 = vadd.f32 %v928, %v1219
        %v1221 = vpop.f32.mrf.mxu0
        %v1222 = vpop.f32.mrf.mxu0
        %v1223 = vadd.f32 %v931, %v1222
        %v1224 = vpop.f32.mrf.mxu0
        %1225 = vmatprep.mubr.bf16.mxu0 0
        %1226 = vmatmul.mubr.bf16.gmra.mxu0 %v1113
        %v1227 = vpop.f32.mrf.mxu0
        %v1228 = vadd.f32 %v936, %v1227
        %v1229 = vpop.f32.mrf.mxu0
        %v1230 = vpop.f32.mrf.mxu0
        %v1231 = vadd.f32 %v939, %v1230
        %v1232 = vpop.f32.mrf.mxu0
        %1233 = vmatprep.mubr.bf16.mxu0 0
        %1234 = vmatmul.mubr.bf16.gmra.mxu0 %v1116
        %v1235 = vpop.f32.mrf.mxu0
        %v1236 = vadd.f32 %v944, %v1235
        %v1237 = vpop.f32.mrf.mxu0
        %v1238 = vpop.f32.mrf.mxu0
        %v1239 = vadd.f32 %v947, %v1238
        %v1240 = vpop.f32.mrf.mxu0
        %1241 = vmatprep.mubr.bf16.mxu0 0
        %1242 = vmatmul.mubr.bf16.gmra.mxu0 %v1119
        %v1243 = vpop.f32.mrf.mxu0
        %v1244 = vadd.f32 %v952, %v1243
        %v1245 = vpop.f32.mrf.mxu0
        %v1246 = vpop.f32.mrf.mxu0
        %v1247 = vadd.f32 %v955, %v1246
        %v1248 = vpop.f32.mrf.mxu0
        %1249 = vmatprep.mubr.bf16.mxu0 0
        %1250 = vmatmul.mubr.bf16.gmra.mxu0 %v1122
        %v1251 = vpop.f32.mrf.mxu0
        %v1252 = vadd.f32 %v960, %v1251
        %v1253 = vpop.f32.mrf.mxu0
        %v1254 = vpop.f32.mrf.mxu0
        %v1255 = vadd.f32 %v963, %v1254
        %v1256 = vpop.f32.mrf.mxu0
        %1257 = vmatprep.mubr.bf16.mxu0 0
        %1258 = vmatmul.mubr.bf16.gmra.mxu0 %v1125
        %v1259 = vpop.f32.mrf.mxu0
        %v1260 = vadd.f32 %v968, %v1259
        %v1261 = vpop.f32.mrf.mxu0
        %v1262 = vpop.f32.mrf.mxu0
        %v1263 = vadd.f32 %v971, %v1262
        %v1264 = vpop.f32.mrf.mxu0
        %1265 = vmatprep.mubr.bf16.mxu0 0
        %1266 = vmatmul.mubr.bf16.gmra.mxu0 %v1128
        %v1267 = vpop.f32.mrf.mxu0
        %v1268 = vadd.f32 %v976, %v1267
        %v1269 = vpop.f32.mrf.mxu0
        %v1270 = vpop.f32.mrf.mxu0
        %v1271 = vadd.f32 %v979, %v1270
        %v1272 = vpop.f32.mrf.mxu0
        %1273 = vmatprep.mubr.bf16.mxu0 0
        %1274 = vmatmul.mubr.bf16.gmra.mxu0 %v1131
        %v1275 = vpop.f32.mrf.mxu0
        %v1276 = vadd.f32 %v984, %v1275
        %v1277 = vpop.f32.mrf.mxu0
        %v1278 = vpop.f32.mrf.mxu0
        %v1279 = vadd.f32 %v987, %v1278
        %v1280 = vpop.f32.mrf.mxu0
        %1281 = vmatprep.mubr.bf16.mxu0 0
        %1282 = vmatmul.mubr.bf16.gmra.mxu0 %v1134
        %v1283 = vpop.f32.mrf.mxu0
        %v1284 = vadd.f32 %v992, %v1283
        %v1285 = vpop.f32.mrf.mxu0
        %v1286 = vpop.f32.mrf.mxu0
        %v1287 = vadd.f32 %v995, %v1286
        %v1288 = vpop.f32.mrf.mxu0
        %1289 = vmatprep.mubr.bf16.mxu0 0
        %1290 = vmatmul.mubr.bf16.gmra.mxu0 %v1137
        %v1291 = vpop.f32.mrf.mxu0
        %v1292 = vadd.f32 %v1000, %v1291
        %v1293 = vpop.f32.mrf.mxu0
        %v1294 = vpop.f32.mrf.mxu0
        %v1295 = vadd.f32 %v1003, %v1294
        %v1296 = vpop.f32.mrf.mxu0
        %1297 = vmatprep.mubr.bf16.mxu0 0
        %1298 = vmatmul.mubr.bf16.gmra.mxu0 %v1140
        %v1299 = vpop.f32.mrf.mxu0
        %v1300 = vadd.f32 %v1008, %v1299
        %v1301 = vpop.f32.mrf.mxu0
        %v1302 = vpop.f32.mrf.mxu0
        %v1303 = vadd.f32 %v1011, %v1302
        %v1304 = vpop.f32.mrf.mxu0
        %1305 = vdwg.mxu0
        %v1306 = vld [vmem:[%s312] sm:$0xe]
        %v1307 = vld [vmem:[%s312 + $0xc] sm:$0xe]
        %v1308 = vld [vmem:[%s312 + $0x18] sm:$0xe]
        %v1309 = vld [vmem:[%s312 + $0x24] sm:$0xe]
        %v1310 = vld [vmem:[%s312 + $0x30] sm:$0xe]
        %v1311 = vld [vmem:[%s312 + $0x3c] sm:$0xe]
        %v1312 = vld [vmem:[%s312 + $0x48] sm:$0xe]
        %v1313 = vld [vmem:[%s312 + $0x54] sm:$0xe]
        %v1314 = vld [vmem:[%s312 + $0x60] sm:$0xe]
        %v1315 = vld [vmem:[%s312 + $0x6c] sm:$0xe]
        %v1316 = vld [vmem:[%s312 + $0x78] sm:$0xe]
        %v1317 = vld [vmem:[%s312 + $0x84] sm:$0xe]
        %v1318 = vld [vmem:[%s312 + $0x90] sm:$0xe]
        %v1319 = vld [vmem:[%s312 + $0x9c] sm:$0xe]
        %v1320 = vld [vmem:[%s312 + $0xa8] sm:$0xe]
        %v1321 = vld [vmem:[%s312 + $0xb4] sm:$0xe]
        %vm1354 = vcmask 1042432
        %vm1355 = vcmask 1046532
        %vm1356 = vmor %vm1354, %vm1355
        %v1357 = vrot.slane %v1306, 5
        %v1358 = vrot.slane %v1357, 4
        %v1359 = vrot.slane %v315, 5
        %v1360 = vsel %vm1356, %v1358, %v1359
        %v1361 = vrot.slane %v1359, 4
        %v1362 = vrot.slane %v347, 5
        %v1363 = vsel %vm1356, %v1361, %v1362
        %v1364 = vrot.slane %v1307, 5
        %v1365 = vrot.slane %v1364, 4
        %v1366 = vrot.slane %v317, 5
        %v1367 = vsel %vm1356, %v1365, %v1366
        %v1368 = vrot.slane %v1366, 4
        %v1369 = vrot.slane %v348, 5
        %v1370 = vsel %vm1356, %v1368, %v1369
        %v1371 = vrot.slane %v1308, 5
        %v1372 = vrot.slane %v1371, 4
        %v1373 = vrot.slane %v319, 5
        %v1374 = vsel %vm1356, %v1372, %v1373
        %v1375 = vrot.slane %v1373, 4
        %v1376 = vrot.slane %v349, 5
        %v1377 = vsel %vm1356, %v1375, %v1376
        %v1378 = vrot.slane %v1309, 5
        %v1379 = vrot.slane %v1378, 4
        %v1380 = vrot.slane %v321, 5
        %v1381 = vsel %vm1356, %v1379, %v1380
        %v1382 = vrot.slane %v1380, 4
        %v1383 = vrot.slane %v350, 5
        %v1384 = vsel %vm1356, %v1382, %v1383
        %v1385 = vrot.slane %v1310, 5
        %v1386 = vrot.slane %v1385, 4
        %v1387 = vrot.slane %v323, 5
        %v1388 = vsel %vm1356, %v1386, %v1387
        %v1389 = vrot.slane %v1387, 4
        %v1390 = vrot.slane %v351, 5
        %v1391 = vsel %vm1356, %v1389, %v1390
        %v1392 = vrot.slane %v1311, 5
        %v1393 = vrot.slane %v1392, 4
        %v1394 = vrot.slane %v325, 5
        %v1395 = vsel %vm1356, %v1393, %v1394
        %v1396 = vrot.slane %v1394, 4
        %v1397 = vrot.slane %v352, 5
        %v1398 = vsel %vm1356, %v1396, %v1397
        %v1399 = vrot.slane %v1312, 5
        %v1400 = vrot.slane %v1399, 4
        %v1401 = vrot.slane %v327, 5
        %v1402 = vsel %vm1356, %v1400, %v1401
        %v1403 = vrot.slane %v1401, 4
        %v1404 = vrot.slane %v353, 5
        %v1405 = vsel %vm1356, %v1403, %v1404
        %v1406 = vrot.slane %v1313, 5
        %v1407 = vrot.slane %v1406, 4
        %v1408 = vrot.slane %v329, 5
        %v1409 = vsel %vm1356, %v1407, %v1408
        %v1410 = vrot.slane %v1408, 4
        %v1411 = vrot.slane %v354, 5
        %v1412 = vsel %vm1356, %v1410, %v1411
        %v1413 = vrot.slane %v1314, 5
        %v1414 = vrot.slane %v1413, 4
        %v1415 = vrot.slane %v331, 5
        %v1416 = vsel %vm1356, %v1414, %v1415
        %v1417 = vrot.slane %v1415, 4
        %v1418 = vrot.slane %v355, 5
        %v1419 = vsel %vm1356, %v1417, %v1418
        %v1420 = vrot.slane %v1315, 5
        %v1421 = vrot.slane %v1420, 4
        %v1422 = vrot.slane %v333, 5
        %v1423 = vsel %vm1356, %v1421, %v1422
        %v1424 = vrot.slane %v1422, 4
        %v1425 = vrot.slane %v356, 5
        %v1426 = vsel %vm1356, %v1424, %v1425
        %v1427 = vrot.slane %v1316, 5
        %v1428 = vrot.slane %v1427, 4
        %v1429 = vrot.slane %v335, 5
        %v1430 = vsel %vm1356, %v1428, %v1429
        %v1431 = vrot.slane %v1429, 4
        %v1432 = vrot.slane %v357, 5
        %v1433 = vsel %vm1356, %v1431, %v1432
        %v1434 = vrot.slane %v1317, 5
        %v1435 = vrot.slane %v1434, 4
        %v1436 = vrot.slane %v337, 5
        %v1437 = vsel %vm1356, %v1435, %v1436
        %v1438 = vrot.slane %v1436, 4
        %v1439 = vrot.slane %v358, 5
        %v1440 = vsel %vm1356, %v1438, %v1439
        %v1441 = vrot.slane %v1318, 5
        %v1442 = vrot.slane %v1441, 4
        %v1443 = vrot.slane %v339, 5
        %v1444 = vsel %vm1356, %v1442, %v1443
        %v1445 = vrot.slane %v1443, 4
        %v1446 = vrot.slane %v359, 5
        %v1447 = vsel %vm1356, %v1445, %v1446
        %v1448 = vrot.slane %v1319, 5
        %v1449 = vrot.slane %v1448, 4
        %v1450 = vrot.slane %v341, 5
        %v1451 = vsel %vm1356, %v1449, %v1450
        %v1452 = vrot.slane %v1450, 4
        %v1453 = vrot.slane %v360, 5
        %v1454 = vsel %vm1356, %v1452, %v1453
        %v1455 = vrot.slane %v1320, 5
        %v1456 = vrot.slane %v1455, 4
        %v1457 = vrot.slane %v343, 5
        %v1458 = vsel %vm1356, %v1456, %v1457
        %v1459 = vrot.slane %v1457, 4
        %v1460 = vrot.slane %v361, 5
        %v1461 = vsel %vm1356, %v1459, %v1460
        %v1462 = vrot.slane %v1321, 5
        %v1463 = vrot.slane %v1462, 4
        %v1464 = vrot.slane %v345, 5
        %v1465 = vsel %vm1356, %v1463, %v1464
        %v1466 = vrot.slane %v1464, 4
        %v1467 = vrot.slane %v362, 5
        %v1468 = vsel %vm1356, %v1466, %v1467
        %s1469 = scalar_lea.vmem %s1, 8
        %v1470 = vld [vmem:[%s1469] sm:$0xf]
        %v1471 = vunpack.c.l.b16 %v1360
        %v1472 = vunpack.c.l.b16 %v1363
        %v1473 = vunpack.c.l.b16 %v1367
        %v1474 = vunpack.c.l.b16 %v1370
        %v1475 = vunpack.c.l.b16 %v1374
        %v1476 = vunpack.c.l.b16 %v1377
        %v1477 = vunpack.c.l.b16 %v1381
        %v1478 = vunpack.c.l.b16 %v1384
        %v1479 = vunpack.c.l.b16 %v1388
        %v1480 = vunpack.c.l.b16 %v1391
        %v1481 = vunpack.c.l.b16 %v1395
        %v1482 = vunpack.c.l.b16 %v1398
        %v1483 = vunpack.c.l.b16 %v1402
        %v1484 = vunpack.c.l.b16 %v1405
        %v1485 = vunpack.c.l.b16 %v1409
        %v1486 = vunpack.c.l.b16 %v1412
        %v1487 = vunpack.c.l.b16 %v1416
        %v1488 = vunpack.c.l.b16 %v1419
        %v1489 = vunpack.c.l.b16 %v1423
        %v1490 = vunpack.c.l.b16 %v1426
        %v1491 = vunpack.c.l.b16 %v1430
        %v1492 = vunpack.c.l.b16 %v1433
        %v1493 = vunpack.c.l.b16 %v1437
        %v1494 = vunpack.c.l.b16 %v1440
        %v1495 = vunpack.c.l.b16 %v1444
        %v1496 = vunpack.c.l.b16 %v1447
        %v1497 = vunpack.c.l.b16 %v1451
        %v1498 = vunpack.c.l.b16 %v1454
        %v1499 = vunpack.c.l.b16 %v1458
        %v1500 = vunpack.c.l.b16 %v1461
        %v1501 = vunpack.c.l.b16 %v1465
        %v1502 = vunpack.c.l.b16 %v1468
        %v1503 = vpack.c.b16 %v1472, %v1471
        %v1504 = vpack.c.b16 %v1474, %v1473
        %v1505 = vpack.c.b16 %v1476, %v1475
        %v1506 = vpack.c.b16 %v1478, %v1477
        %v1507 = vpack.c.b16 %v1480, %v1479
        %v1508 = vpack.c.b16 %v1482, %v1481
        %v1509 = vpack.c.b16 %v1484, %v1483
        %v1510 = vpack.c.b16 %v1486, %v1485
        %v1511 = vpack.c.b16 %v1488, %v1487
        %v1512 = vpack.c.b16 %v1490, %v1489
        %v1513 = vpack.c.b16 %v1492, %v1491
        %v1514 = vpack.c.b16 %v1494, %v1493
        %v1515 = vpack.c.b16 %v1496, %v1495
        %v1516 = vpack.c.b16 %v1498, %v1497
        %v1517 = vpack.c.b16 %v1500, %v1499
        %v1518 = vpack.c.b16 %v1502, %v1501
        %v1520 = vsel %vm800, %v1503, 0
        %v1523 = vsel %vm800, %v1504, 0
        %v1526 = vsel %vm800, %v1505, 0
        %v1529 = vsel %vm800, %v1506, 0
        %v1532 = vsel %vm800, %v1507, 0
        %v1535 = vsel %vm800, %v1508, 0
        %v1538 = vsel %vm800, %v1509, 0
        %v1541 = vsel %vm800, %v1510, 0
        %v1544 = vsel %vm800, %v1511, 0
        %v1547 = vsel %vm800, %v1512, 0
        %v1550 = vsel %vm800, %v1513, 0
        %v1553 = vsel %vm800, %v1514, 0
        %v1556 = vsel %vm800, %v1515, 0
        %v1559 = vsel %vm800, %v1516, 0
        %v1562 = vsel %vm800, %v1517, 0
        %v1565 = vsel %vm800, %v1518, 0
        %v1568 = vsel %vm849, %v1470, 0
        %1570 = vmatprep.subr.bf16.mxu0 0
        %1571 = vmatpush1.bf16.msra.mxu0 0
        %1572 = vmatprep.subr.bf16.mxu0 0
        %1573 = vmatpush1.bf16.msra.mxu0 0
        %1574 = vmatprep.subr.bf16.mxu0 0
        %1575 = vmatpush1.bf16.msra.mxu0 0
        %1576 = vmatprep.subr.bf16.mxu0 0
        %1577 = vmatpush1.bf16.msra.mxu0 0
        %1578 = vmatprep.subr.bf16.mxu0 0
        %1579 = vmatpush1.bf16.msra.mxu0 0
        %1580 = vmatprep.subr.bf16.mxu0 0
        %1581 = vmatpush1.bf16.msra.mxu0 0
        %1582 = vmatprep.subr.bf16.mxu0 0
        %1583 = vmatpush1.bf16.msra.mxu0 0
        %1584 = vmatprep.subr.bf16.mxu0 0
        %1585 = vmatpush1.bf16.msra.mxu0 %v1568
        %1586 = vmatprep.subr.bf16.mxu0 0
        %1587 = vmatpush2.bf16.msra.mxu0 0
        %1588 = vmatprep.subr.bf16.mxu0 0
        %1589 = vmatpush2.bf16.msra.mxu0 0
        %1590 = vmatprep.subr.bf16.mxu0 0
        %1591 = vmatpush2.bf16.msra.mxu0 0
        %1592 = vmatprep.subr.bf16.mxu0 0
        %1593 = vmatpush2.bf16.msra.mxu0 0
        %1594 = vmatprep.subr.bf16.mxu0 0
        %1595 = vmatpush2.bf16.msra.mxu0 0
        %1596 = vmatprep.subr.bf16.mxu0 0
        %1597 = vmatpush2.bf16.msra.mxu0 0
        %1598 = vmatprep.subr.bf16.mxu0 0
        %1599 = vmatpush2.bf16.msra.mxu0 0
        %1600 = vmatprep.subr.bf16.mxu0 0
        %1601 = vmatpush2.bf16.msra.mxu0 0
        %1602 = vmatprep.mubr.bf16.mxu0 0
        %1603 = vmatmul.mubr.bf16.gmra.mxu0 %v1520
        %v1604 = vpop.f32.mrf.mxu0
        %v1605 = vadd.f32 0.0, %v1604
        %v1606 = vpop.f32.mrf.mxu0
        %v1607 = vpop.f32.mrf.mxu0
        %v1608 = vadd.f32 0.0, %v1607
        %v1609 = vpop.f32.mrf.mxu0
        %1610 = vmatprep.mubr.bf16.mxu0 0
        %1611 = vmatmul.mubr.bf16.gmra.mxu0 %v1523
        %v1612 = vpop.f32.mrf.mxu0
        %v1613 = vadd.f32 0.0, %v1612
        %v1614 = vpop.f32.mrf.mxu0
        %v1615 = vpop.f32.mrf.mxu0
        %v1616 = vadd.f32 0.0, %v1615
        %v1617 = vpop.f32.mrf.mxu0
        %1618 = vmatprep.mubr.bf16.mxu0 0
        %1619 = vmatmul.mubr.bf16.gmra.mxu0 %v1526
        %v1620 = vpop.f32.mrf.mxu0
        %v1621 = vadd.f32 0.0, %v1620
        %v1622 = vpop.f32.mrf.mxu0
        %v1623 = vpop.f32.mrf.mxu0
        %v1624 = vadd.f32 0.0, %v1623
        %v1625 = vpop.f32.mrf.mxu0
        %1626 = vmatprep.mubr.bf16.mxu0 0
        %1627 = vmatmul.mubr.bf16.gmra.mxu0 %v1529
        %v1628 = vpop.f32.mrf.mxu0
        %v1629 = vadd.f32 0.0, %v1628
        %v1630 = vpop.f32.mrf.mxu0
        %v1631 = vpop.f32.mrf.mxu0
        %v1632 = vadd.f32 0.0, %v1631
        %v1633 = vpop.f32.mrf.mxu0
        %1634 = vmatprep.mubr.bf16.mxu0 0
        %1635 = vmatmul.mubr.bf16.gmra.mxu0 %v1532
        %v1636 = vpop.f32.mrf.mxu0
        %v1637 = vadd.f32 0.0, %v1636
        %v1638 = vpop.f32.mrf.mxu0
        %v1639 = vpop.f32.mrf.mxu0
        %v1640 = vadd.f32 0.0, %v1639
        %v1641 = vpop.f32.mrf.mxu0
        %1642 = vmatprep.mubr.bf16.mxu0 0
        %1643 = vmatmul.mubr.bf16.gmra.mxu0 %v1535
        %v1644 = vpop.f32.mrf.mxu0
        %v1645 = vadd.f32 0.0, %v1644
        %v1646 = vpop.f32.mrf.mxu0
        %v1647 = vpop.f32.mrf.mxu0
        %v1648 = vadd.f32 0.0, %v1647
        %v1649 = vpop.f32.mrf.mxu0
        %1650 = vmatprep.mubr.bf16.mxu0 0
        %1651 = vmatmul.mubr.bf16.gmra.mxu0 %v1538
        %v1652 = vpop.f32.mrf.mxu0
        %v1653 = vadd.f32 0.0, %v1652
        %v1654 = vpop.f32.mrf.mxu0
        %v1655 = vpop.f32.mrf.mxu0
        %v1656 = vadd.f32 0.0, %v1655
        %v1657 = vpop.f32.mrf.mxu0
        %1658 = vmatprep.mubr.bf16.mxu0 0
        %1659 = vmatmul.mubr.bf16.gmra.mxu0 %v1541
        %v1660 = vpop.f32.mrf.mxu0
        %v1661 = vadd.f32 0.0, %v1660
        %v1662 = vpop.f32.mrf.mxu0
        %v1663 = vpop.f32.mrf.mxu0
        %v1664 = vadd.f32 0.0, %v1663
        %v1665 = vpop.f32.mrf.mxu0
        %1666 = vmatprep.mubr.bf16.mxu0 0
        %1667 = vmatmul.mubr.bf16.gmra.mxu0 %v1544
        %v1668 = vpop.f32.mrf.mxu0
        %v1669 = vadd.f32 0.0, %v1668
        %v1670 = vpop.f32.mrf.mxu0
        %v1671 = vpop.f32.mrf.mxu0
        %v1672 = vadd.f32 0.0, %v1671
        %v1673 = vpop.f32.mrf.mxu0
        %1674 = vmatprep.mubr.bf16.mxu0 0
        %1675 = vmatmul.mubr.bf16.gmra.mxu0 %v1547
        %v1676 = vpop.f32.mrf.mxu0
        %v1677 = vadd.f32 0.0, %v1676
        %v1678 = vpop.f32.mrf.mxu0
        %v1679 = vpop.f32.mrf.mxu0
        %v1680 = vadd.f32 0.0, %v1679
        %v1681 = vpop.f32.mrf.mxu0
        %1682 = vmatprep.mubr.bf16.mxu0 0
        %1683 = vmatmul.mubr.bf16.gmra.mxu0 %v1550
        %v1684 = vpop.f32.mrf.mxu0
        %v1685 = vadd.f32 0.0, %v1684
        %v1686 = vpop.f32.mrf.mxu0
        %v1687 = vpop.f32.mrf.mxu0
        %v1688 = vadd.f32 0.0, %v1687
        %v1689 = vpop.f32.mrf.mxu0
        %1690 = vmatprep.mubr.bf16.mxu0 0
        %1691 = vmatmul.mubr.bf16.gmra.mxu0 %v1553
        %v1692 = vpop.f32.mrf.mxu0
        %v1693 = vadd.f32 0.0, %v1692
        %v1694 = vpop.f32.mrf.mxu0
        %v1695 = vpop.f32.mrf.mxu0
        %v1696 = vadd.f32 0.0, %v1695
        %v1697 = vpop.f32.mrf.mxu0
        %1698 = vmatprep.mubr.bf16.mxu0 0
        %1699 = vmatmul.mubr.bf16.gmra.mxu0 %v1556
        %v1700 = vpop.f32.mrf.mxu0
        %v1701 = vadd.f32 0.0, %v1700
        %v1702 = vpop.f32.mrf.mxu0
        %v1703 = vpop.f32.mrf.mxu0
        %v1704 = vadd.f32 0.0, %v1703
        %v1705 = vpop.f32.mrf.mxu0
        %1706 = vmatprep.mubr.bf16.mxu0 0
        %1707 = vmatmul.mubr.bf16.gmra.mxu0 %v1559
        %v1708 = vpop.f32.mrf.mxu0
        %v1709 = vadd.f32 0.0, %v1708
        %v1710 = vpop.f32.mrf.mxu0
        %v1711 = vpop.f32.mrf.mxu0
        %v1712 = vadd.f32 0.0, %v1711
        %v1713 = vpop.f32.mrf.mxu0
        %1714 = vmatprep.mubr.bf16.mxu0 0
        %1715 = vmatmul.mubr.bf16.gmra.mxu0 %v1562
        %v1716 = vpop.f32.mrf.mxu0
        %v1717 = vadd.f32 0.0, %v1716
        %v1718 = vpop.f32.mrf.mxu0
        %v1719 = vpop.f32.mrf.mxu0
        %v1720 = vadd.f32 0.0, %v1719
        %v1721 = vpop.f32.mrf.mxu0
        %1722 = vmatprep.mubr.bf16.mxu0 0
        %1723 = vmatmul.mubr.bf16.gmra.mxu0 %v1565
        %v1724 = vpop.f32.mrf.mxu0
        %v1725 = vadd.f32 0.0, %v1724
        %v1726 = vpop.f32.mrf.mxu0
        %v1727 = vpop.f32.mrf.mxu0
        %v1728 = vadd.f32 0.0, %v1727
        %v1729 = vpop.f32.mrf.mxu0
        %1730 = vdwg.mxu0
        %v1731 = vadd.f32 %v1180, %v1605
        %v1732 = vadd.f32 %v1183, %v1608
        %v1733 = vadd.f32 %v1188, %v1613
        %v1734 = vadd.f32 %v1191, %v1616
        %v1735 = vadd.f32 %v1196, %v1621
        %v1736 = vadd.f32 %v1199, %v1624
        %v1737 = vadd.f32 %v1204, %v1629
        %v1738 = vadd.f32 %v1207, %v1632
        %v1739 = vadd.f32 %v1212, %v1637
        %v1740 = vadd.f32 %v1215, %v1640
        %v1741 = vadd.f32 %v1220, %v1645
        %v1742 = vadd.f32 %v1223, %v1648
        %v1743 = vadd.f32 %v1228, %v1653
        %v1744 = vadd.f32 %v1231, %v1656
        %v1745 = vadd.f32 %v1236, %v1661
        %v1746 = vadd.f32 %v1239, %v1664
        %v1747 = vadd.f32 %v1244, %v1669
        %v1748 = vadd.f32 %v1247, %v1672
        %v1749 = vadd.f32 %v1252, %v1677
        %v1750 = vadd.f32 %v1255, %v1680
        %v1751 = vadd.f32 %v1260, %v1685
        %v1752 = vadd.f32 %v1263, %v1688
        %v1753 = vadd.f32 %v1268, %v1693
        %v1754 = vadd.f32 %v1271, %v1696
        %v1755 = vadd.f32 %v1276, %v1701
        %v1756 = vadd.f32 %v1279, %v1704
        %v1757 = vadd.f32 %v1284, %v1709
        %v1758 = vadd.f32 %v1287, %v1712
        %v1759 = vadd.f32 %v1292, %v1717
        %v1760 = vadd.f32 %v1295, %v1720
        %v1761 = vadd.f32 %v1300, %v1725
        %v1762 = vadd.f32 %v1303, %v1728
        %s1763 = scalar_lea.vmem %s312, 12
        %v1764 = vld [vmem:[%s1763] sm:$0xf]
        %v1765 = vld [vmem:[%s1763 + $0x4] sm:$0xf]
        %v1766 = vld [vmem:[%s1763 + $0xc] sm:$0xf]
        %v1767 = vld [vmem:[%s1763 + $0x10] sm:$0xf]
        %v1768 = vld [vmem:[%s1763 + $0x18] sm:$0xf]
        %v1769 = vld [vmem:[%s1763 + $0x1c] sm:$0xf]
        %v1770 = vld [vmem:[%s1763 + $0x24] sm:$0xf]
        %v1771 = vld [vmem:[%s1763 + $0x28] sm:$0xf]
        %v1772 = vld [vmem:[%s1763 + $0x30] sm:$0xf]
        %v1773 = vld [vmem:[%s1763 + $0x34] sm:$0xf]
        %v1774 = vld [vmem:[%s1763 + $0x3c] sm:$0xf]
        %v1775 = vld [vmem:[%s1763 + $0x40] sm:$0xf]
        %v1776 = vld [vmem:[%s1763 + $0x48] sm:$0xf]
        %v1777 = vld [vmem:[%s1763 + $0x4c] sm:$0xf]
        %v1778 = vld [vmem:[%s1763 + $0x54] sm:$0xf]
        %v1779 = vld [vmem:[%s1763 + $0x58] sm:$0xf]
        %v1780 = vld [vmem:[%s1763 + $0x60] sm:$0xf]
        %v1781 = vld [vmem:[%s1763 + $0x64] sm:$0xf]
        %v1782 = vld [vmem:[%s1763 + $0x6c] sm:$0xf]
        %v1783 = vld [vmem:[%s1763 + $0x70] sm:$0xf]
        %v1784 = vld [vmem:[%s1763 + $0x78] sm:$0xf]
        %v1785 = vld [vmem:[%s1763 + $0x7c] sm:$0xf]
        %v1786 = vld [vmem:[%s1763 + $0x84] sm:$0xf]
        %v1787 = vld [vmem:[%s1763 + $0x88] sm:$0xf]
        %v1788 = vld [vmem:[%s1763 + $0x90] sm:$0xf]
        %v1789 = vld [vmem:[%s1763 + $0x94] sm:$0xf]
        %v1790 = vld [vmem:[%s1763 + $0x9c] sm:$0xf]
        %v1791 = vld [vmem:[%s1763 + $0xa0] sm:$0xf]
        %v1792 = vld [vmem:[%s1763 + $0xa8] sm:$0xf]
        %v1793 = vld [vmem:[%s1763 + $0xac] sm:$0xf]
        %v1794 = vld [vmem:[%s1763 + $0xb4] sm:$0xf]
        %v1795 = vld [vmem:[%s1763 + $0xb8] sm:$0xf]
        %s1796 = scalar_lea.vmem %s1, 12
        %v1797 = vld [vmem:[%s1796] sm:$0xf]
        %v1830 = vunpack.c.l.b16 %v1764
        %v1831 = vunpack.c.l.b16 %v1765
        %v1832 = vunpack.c.l.b16 %v1766
        %v1833 = vunpack.c.l.b16 %v1767
        %v1834 = vunpack.c.l.b16 %v1768
        %v1835 = vunpack.c.l.b16 %v1769
        %v1836 = vunpack.c.l.b16 %v1770
        %v1837 = vunpack.c.l.b16 %v1771
        %v1838 = vunpack.c.l.b16 %v1772
        %v1839 = vunpack.c.l.b16 %v1773
        %v1840 = vunpack.c.l.b16 %v1774
        %v1841 = vunpack.c.l.b16 %v1775
        %v1842 = vunpack.c.l.b16 %v1776
        %v1843 = vunpack.c.l.b16 %v1777
        %v1844 = vunpack.c.l.b16 %v1778
        %v1845 = vunpack.c.l.b16 %v1779
        %v1846 = vunpack.c.l.b16 %v1780
        %v1847 = vunpack.c.l.b16 %v1781
        %v1848 = vunpack.c.l.b16 %v1782
        %v1849 = vunpack.c.l.b16 %v1783
        %v1850 = vunpack.c.l.b16 %v1784
        %v1851 = vunpack.c.l.b16 %v1785
        %v1852 = vunpack.c.l.b16 %v1786
        %v1853 = vunpack.c.l.b16 %v1787
        %v1854 = vunpack.c.l.b16 %v1788
        %v1855 = vunpack.c.l.b16 %v1789
        %v1856 = vunpack.c.l.b16 %v1790
        %v1857 = vunpack.c.l.b16 %v1791
        %v1858 = vunpack.c.l.b16 %v1792
        %v1859 = vunpack.c.l.b16 %v1793
        %v1860 = vunpack.c.l.b16 %v1794
        %v1861 = vunpack.c.l.b16 %v1795
        %v1862 = vpack.c.b16 %v1831, %v1830
        %v1863 = vpack.c.b16 %v1833, %v1832
        %v1864 = vpack.c.b16 %v1835, %v1834
        %v1865 = vpack.c.b16 %v1837, %v1836
        %v1866 = vpack.c.b16 %v1839, %v1838
        %v1867 = vpack.c.b16 %v1841, %v1840
        %v1868 = vpack.c.b16 %v1843, %v1842
        %v1869 = vpack.c.b16 %v1845, %v1844
        %v1870 = vpack.c.b16 %v1847, %v1846
        %v1871 = vpack.c.b16 %v1849, %v1848
        %v1872 = vpack.c.b16 %v1851, %v1850
        %v1873 = vpack.c.b16 %v1853, %v1852
        %v1874 = vpack.c.b16 %v1855, %v1854
        %v1875 = vpack.c.b16 %v1857, %v1856
        %v1876 = vpack.c.b16 %v1859, %v1858
        %v1877 = vpack.c.b16 %v1861, %v1860
        %v1879 = vsel %vm800, %v1862, 0
        %v1882 = vsel %vm800, %v1863, 0
        %v1885 = vsel %vm800, %v1864, 0
        %v1888 = vsel %vm800, %v1865, 0
        %v1891 = vsel %vm800, %v1866, 0
        %v1894 = vsel %vm800, %v1867, 0
        %v1897 = vsel %vm800, %v1868, 0
        %v1900 = vsel %vm800, %v1869, 0
        %v1903 = vsel %vm800, %v1870, 0
        %v1906 = vsel %vm800, %v1871, 0
        %v1909 = vsel %vm800, %v1872, 0
        %v1912 = vsel %vm800, %v1873, 0
        %v1915 = vsel %vm800, %v1874, 0
        %v1918 = vsel %vm800, %v1875, 0
        %v1921 = vsel %vm800, %v1876, 0
        %v1924 = vsel %vm800, %v1877, 0
        %v1927 = vsel %vm849, %v1797, 0
        %1929 = vmatprep.subr.bf16.mxu0 0
        %1930 = vmatpush1.bf16.msra.mxu0 0
        %1931 = vmatprep.subr.bf16.mxu0 0
        %1932 = vmatpush1.bf16.msra.mxu0 0
        %1933 = vmatprep.subr.bf16.mxu0 0
        %1934 = vmatpush1.bf16.msra.mxu0 0
        %1935 = vmatprep.subr.bf16.mxu0 0
        %1936 = vmatpush1.bf16.msra.mxu0 0
        %1937 = vmatprep.subr.bf16.mxu0 0
        %1938 = vmatpush1.bf16.msra.mxu0 0
        %1939 = vmatprep.subr.bf16.mxu0 0
        %1940 = vmatpush1.bf16.msra.mxu0 0
        %1941 = vmatprep.subr.bf16.mxu0 0
        %1942 = vmatpush1.bf16.msra.mxu0 0
        %1943 = vmatprep.subr.bf16.mxu0 0
        %1944 = vmatpush1.bf16.msra.mxu0 %v1927
        %1945 = vmatprep.subr.bf16.mxu0 0
        %1946 = vmatpush2.bf16.msra.mxu0 0
        %1947 = vmatprep.subr.bf16.mxu0 0
        %1948 = vmatpush2.bf16.msra.mxu0 0
        %1949 = vmatprep.subr.bf16.mxu0 0
        %1950 = vmatpush2.bf16.msra.mxu0 0
        %1951 = vmatprep.subr.bf16.mxu0 0
        %1952 = vmatpush2.bf16.msra.mxu0 0
        %1953 = vmatprep.subr.bf16.mxu0 0
        %1954 = vmatpush2.bf16.msra.mxu0 0
        %1955 = vmatprep.subr.bf16.mxu0 0
        %1956 = vmatpush2.bf16.msra.mxu0 0
        %1957 = vmatprep.subr.bf16.mxu0 0
        %1958 = vmatpush2.bf16.msra.mxu0 0
        %1959 = vmatprep.subr.bf16.mxu0 0
        %1960 = vmatpush2.bf16.msra.mxu0 0
        %1961 = vmatprep.mubr.bf16.mxu0 0
        %1962 = vmatmul.mubr.bf16.gmra.mxu0 %v1879
        %v1963 = vpop.f32.mrf.mxu0
        %v1964 = vadd.f32 0.0, %v1963
        %v1965 = vpop.f32.mrf.mxu0
        %v1966 = vpop.f32.mrf.mxu0
        %v1967 = vadd.f32 0.0, %v1966
        %v1968 = vpop.f32.mrf.mxu0
        %1969 = vmatprep.mubr.bf16.mxu0 0
        %1970 = vmatmul.mubr.bf16.gmra.mxu0 %v1882
        %v1971 = vpop.f32.mrf.mxu0
        %v1972 = vadd.f32 0.0, %v1971
        %v1973 = vpop.f32.mrf.mxu0
        %v1974 = vpop.f32.mrf.mxu0
        %v1975 = vadd.f32 0.0, %v1974
        %v1976 = vpop.f32.mrf.mxu0
        %1977 = vmatprep.mubr.bf16.mxu0 0
        %1978 = vmatmul.mubr.bf16.gmra.mxu0 %v1885
        %v1979 = vpop.f32.mrf.mxu0
        %v1980 = vadd.f32 0.0, %v1979
        %v1981 = vpop.f32.mrf.mxu0
        %v1982 = vpop.f32.mrf.mxu0
        %v1983 = vadd.f32 0.0, %v1982
        %v1984 = vpop.f32.mrf.mxu0
        %1985 = vmatprep.mubr.bf16.mxu0 0
        %1986 = vmatmul.mubr.bf16.gmra.mxu0 %v1888
        %v1987 = vpop.f32.mrf.mxu0
        %v1988 = vadd.f32 0.0, %v1987
        %v1989 = vpop.f32.mrf.mxu0
        %v1990 = vpop.f32.mrf.mxu0
        %v1991 = vadd.f32 0.0, %v1990
        %v1992 = vpop.f32.mrf.mxu0
        %1993 = vmatprep.mubr.bf16.mxu0 0
        %1994 = vmatmul.mubr.bf16.gmra.mxu0 %v1891
        %v1995 = vpop.f32.mrf.mxu0
        %v1996 = vadd.f32 0.0, %v1995
        %v1997 = vpop.f32.mrf.mxu0
        %v1998 = vpop.f32.mrf.mxu0
        %v1999 = vadd.f32 0.0, %v1998
        %v2000 = vpop.f32.mrf.mxu0
        %2001 = vmatprep.mubr.bf16.mxu0 0
        %2002 = vmatmul.mubr.bf16.gmra.mxu0 %v1894
        %v2003 = vpop.f32.mrf.mxu0
        %v2004 = vadd.f32 0.0, %v2003
        %v2005 = vpop.f32.mrf.mxu0
        %v2006 = vpop.f32.mrf.mxu0
        %v2007 = vadd.f32 0.0, %v2006
        %v2008 = vpop.f32.mrf.mxu0
        %2009 = vmatprep.mubr.bf16.mxu0 0
        %2010 = vmatmul.mubr.bf16.gmra.mxu0 %v1897
        %v2011 = vpop.f32.mrf.mxu0
        %v2012 = vadd.f32 0.0, %v2011
        %v2013 = vpop.f32.mrf.mxu0
        %v2014 = vpop.f32.mrf.mxu0
        %v2015 = vadd.f32 0.0, %v2014
        %v2016 = vpop.f32.mrf.mxu0
        %2017 = vmatprep.mubr.bf16.mxu0 0
        %2018 = vmatmul.mubr.bf16.gmra.mxu0 %v1900
        %v2019 = vpop.f32.mrf.mxu0
        %v2020 = vadd.f32 0.0, %v2019
        %v2021 = vpop.f32.mrf.mxu0
        %v2022 = vpop.f32.mrf.mxu0
        %v2023 = vadd.f32 0.0, %v2022
        %v2024 = vpop.f32.mrf.mxu0
        %2025 = vmatprep.mubr.bf16.mxu0 0
        %2026 = vmatmul.mubr.bf16.gmra.mxu0 %v1903
        %v2027 = vpop.f32.mrf.mxu0
        %v2028 = vadd.f32 0.0, %v2027
        %v2029 = vpop.f32.mrf.mxu0
        %v2030 = vpop.f32.mrf.mxu0
        %v2031 = vadd.f32 0.0, %v2030
        %v2032 = vpop.f32.mrf.mxu0
        %2033 = vmatprep.mubr.bf16.mxu0 0
        %2034 = vmatmul.mubr.bf16.gmra.mxu0 %v1906
        %v2035 = vpop.f32.mrf.mxu0
        %v2036 = vadd.f32 0.0, %v2035
        %v2037 = vpop.f32.mrf.mxu0
        %v2038 = vpop.f32.mrf.mxu0
        %v2039 = vadd.f32 0.0, %v2038
        %v2040 = vpop.f32.mrf.mxu0
        %2041 = vmatprep.mubr.bf16.mxu0 0
        %2042 = vmatmul.mubr.bf16.gmra.mxu0 %v1909
        %v2043 = vpop.f32.mrf.mxu0
        %v2044 = vadd.f32 0.0, %v2043
        %v2045 = vpop.f32.mrf.mxu0
        %v2046 = vpop.f32.mrf.mxu0
        %v2047 = vadd.f32 0.0, %v2046
        %v2048 = vpop.f32.mrf.mxu0
        %2049 = vmatprep.mubr.bf16.mxu0 0
        %2050 = vmatmul.mubr.bf16.gmra.mxu0 %v1912
        %v2051 = vpop.f32.mrf.mxu0
        %v2052 = vadd.f32 0.0, %v2051
        %v2053 = vpop.f32.mrf.mxu0
        %v2054 = vpop.f32.mrf.mxu0
        %v2055 = vadd.f32 0.0, %v2054
        %v2056 = vpop.f32.mrf.mxu0
        %2057 = vmatprep.mubr.bf16.mxu0 0
        %2058 = vmatmul.mubr.bf16.gmra.mxu0 %v1915
        %v2059 = vpop.f32.mrf.mxu0
        %v2060 = vadd.f32 0.0, %v2059
        %v2061 = vpop.f32.mrf.mxu0
        %v2062 = vpop.f32.mrf.mxu0
        %v2063 = vadd.f32 0.0, %v2062
        %v2064 = vpop.f32.mrf.mxu0
        %2065 = vmatprep.mubr.bf16.mxu0 0
        %2066 = vmatmul.mubr.bf16.gmra.mxu0 %v1918
        %v2067 = vpop.f32.mrf.mxu0
        %v2068 = vadd.f32 0.0, %v2067
        %v2069 = vpop.f32.mrf.mxu0
        %v2070 = vpop.f32.mrf.mxu0
        %v2071 = vadd.f32 0.0, %v2070
        %v2072 = vpop.f32.mrf.mxu0
        %2073 = vmatprep.mubr.bf16.mxu0 0
        %2074 = vmatmul.mubr.bf16.gmra.mxu0 %v1921
        %v2075 = vpop.f32.mrf.mxu0
        %v2076 = vadd.f32 0.0, %v2075
        %v2077 = vpop.f32.mrf.mxu0
        %v2078 = vpop.f32.mrf.mxu0
        %v2079 = vadd.f32 0.0, %v2078
        %v2080 = vpop.f32.mrf.mxu0
        %2081 = vmatprep.mubr.bf16.mxu0 0
        %2082 = vmatmul.mubr.bf16.gmra.mxu0 %v1924
        %v2083 = vpop.f32.mrf.mxu0
        %v2084 = vadd.f32 0.0, %v2083
        %v2085 = vpop.f32.mrf.mxu0
        %v2086 = vpop.f32.mrf.mxu0
        %v2087 = vadd.f32 0.0, %v2086
        %v2088 = vpop.f32.mrf.mxu0
        %2089 = vdwg.mxu0
        %v2090 = vadd.f32 %v1731, %v1964
        %v2091 = vadd.f32 %v1732, %v1967
        %v2092 = vadd.f32 %v1733, %v1972
        %v2093 = vadd.f32 %v1734, %v1975
        %v2094 = vadd.f32 %v1735, %v1980
        %v2095 = vadd.f32 %v1736, %v1983
        %v2096 = vadd.f32 %v1737, %v1988
        %v2097 = vadd.f32 %v1738, %v1991
        %v2098 = vadd.f32 %v1739, %v1996
        %v2099 = vadd.f32 %v1740, %v1999
        %v2100 = vadd.f32 %v1741, %v2004
        %v2101 = vadd.f32 %v1742, %v2007
        %v2102 = vadd.f32 %v1743, %v2012
        %v2103 = vadd.f32 %v1744, %v2015
        %v2104 = vadd.f32 %v1745, %v2020
        %v2105 = vadd.f32 %v1746, %v2023
        %v2106 = vadd.f32 %v1747, %v2028
        %v2107 = vadd.f32 %v1748, %v2031
        %v2108 = vadd.f32 %v1749, %v2036
        %v2109 = vadd.f32 %v1750, %v2039
        %v2110 = vadd.f32 %v1751, %v2044
        %v2111 = vadd.f32 %v1752, %v2047
        %v2112 = vadd.f32 %v1753, %v2052
        %v2113 = vadd.f32 %v1754, %v2055
        %v2114 = vadd.f32 %v1755, %v2060
        %v2115 = vadd.f32 %v1756, %v2063
        %v2116 = vadd.f32 %v1757, %v2068
        %v2117 = vadd.f32 %v1758, %v2071
        %v2118 = vadd.f32 %v1759, %v2076
        %v2119 = vadd.f32 %v1760, %v2079
        %v2120 = vadd.f32 %v1761, %v2084
        %v2121 = vadd.f32 %v1762, %v2087
        %v2122 = vld [vmem:[%s1763] sm:$0xf]
        %v2123 = vld [vmem:[%s1763 + $0x4] sm:$0xf]
        %v2124 = vld [vmem:[%s1763 + $0x8] sm:$0x1]
        %v2125 = vld [vmem:[%s1763 + $0xc] sm:$0xf]
        %v2126 = vld [vmem:[%s1763 + $0x10] sm:$0xf]
        %v2127 = vld [vmem:[%s1763 + $0x14] sm:$0x1]
        %v2128 = vld [vmem:[%s1763 + $0x18] sm:$0xf]
        %v2129 = vld [vmem:[%s1763 + $0x1c] sm:$0xf]
        %v2130 = vld [vmem:[%s1763 + $0x20] sm:$0x1]
        %v2131 = vld [vmem:[%s1763 + $0x24] sm:$0xf]
        %v2132 = vld [vmem:[%s1763 + $0x28] sm:$0xf]
        %v2133 = vld [vmem:[%s1763 + $0x2c] sm:$0x1]
        %v2134 = vld [vmem:[%s1763 + $0x30] sm:$0xf]
        %v2135 = vld [vmem:[%s1763 + $0x34] sm:$0xf]
        %v2136 = vld [vmem:[%s1763 + $0x38] sm:$0x1]
        %v2137 = vld [vmem:[%s1763 + $0x3c] sm:$0xf]
        %v2138 = vld [vmem:[%s1763 + $0x40] sm:$0xf]
        %v2139 = vld [vmem:[%s1763 + $0x44] sm:$0x1]
        %v2140 = vld [vmem:[%s1763 + $0x48] sm:$0xf]
        %v2141 = vld [vmem:[%s1763 + $0x4c] sm:$0xf]
        %v2142 = vld [vmem:[%s1763 + $0x50] sm:$0x1]
        %v2143 = vld [vmem:[%s1763 + $0x54] sm:$0xf]
        %v2144 = vld [vmem:[%s1763 + $0x58] sm:$0xf]
        %v2145 = vld [vmem:[%s1763 + $0x5c] sm:$0x1]
        %v2146 = vld [vmem:[%s1763 + $0x60] sm:$0xf]
        %v2147 = vld [vmem:[%s1763 + $0x64] sm:$0xf]
        %v2148 = vld [vmem:[%s1763 + $0x68] sm:$0x1]
        %v2149 = vld [vmem:[%s1763 + $0x6c] sm:$0xf]
        %v2150 = vld [vmem:[%s1763 + $0x70] sm:$0xf]
        %v2151 = vld [vmem:[%s1763 + $0x74] sm:$0x1]
        %v2152 = vld [vmem:[%s1763 + $0x78] sm:$0xf]
        %v2153 = vld [vmem:[%s1763 + $0x7c] sm:$0xf]
        %v2154 = vld [vmem:[%s1763 + $0x80] sm:$0x1]
        %v2155 = vld [vmem:[%s1763 + $0x84] sm:$0xf]
        %v2156 = vld [vmem:[%s1763 + $0x88] sm:$0xf]
        %v2157 = vld [vmem:[%s1763 + $0x8c] sm:$0x1]
        %v2158 = vld [vmem:[%s1763 + $0x90] sm:$0xf]
        %v2159 = vld [vmem:[%s1763 + $0x94] sm:$0xf]
        %v2160 = vld [vmem:[%s1763 + $0x98] sm:$0x1]
        %v2161 = vld [vmem:[%s1763 + $0x9c] sm:$0xf]
        %v2162 = vld [vmem:[%s1763 + $0xa0] sm:$0xf]
        %v2163 = vld [vmem:[%s1763 + $0xa4] sm:$0x1]
        %v2164 = vld [vmem:[%s1763 + $0xa8] sm:$0xf]
        %v2165 = vld [vmem:[%s1763 + $0xac] sm:$0xf]
        %v2166 = vld [vmem:[%s1763 + $0xb0] sm:$0x1]
        %v2167 = vld [vmem:[%s1763 + $0xb4] sm:$0xf]
        %v2168 = vld [vmem:[%s1763 + $0xb8] sm:$0xf]
        %v2169 = vld [vmem:[%s1763 + $0xbc] sm:$0x1]
        %v2171 = vshrl.u32 %v2122, 16
        %v2173 = vrot.slane %v2171, 4
        %v2174 = vshll.u32 %v2122, 16
        %v2176 = vrot.slane %v2174, 5
        %v2177 = vor.u32 %v2173, %v2176
        %v2178 = vrot.slane %v2177, 4
        %v2180 = vshll.u32 %v2123, 16
        %v2182 = vrot.slane %v2180, 5
        %v2183 = vsel %vm365, %v2178, %v2182
        %v2184 = vshrl.u32 %v2123, 16
        %v2186 = vrot.slane %v2184, 4
        %v2187 = vor.u32 %v2186, %v2182
        %v2188 = vrot.slane %v2187, 4
        %v2190 = vshll.u32 %v2124, 16
        %v2192 = vrot.slane %v2190, 5
        %v2193 = vsel %vm365, %v2188, %v2192
        %v2195 = vshrl.u32 %v2125, 16
        %v2197 = vrot.slane %v2195, 4
        %v2198 = vshll.u32 %v2125, 16
        %v2200 = vrot.slane %v2198, 5
        %v2201 = vor.u32 %v2197, %v2200
        %v2202 = vrot.slane %v2201, 4
        %v2204 = vshll.u32 %v2126, 16
        %v2206 = vrot.slane %v2204, 5
        %v2207 = vsel %vm365, %v2202, %v2206
        %v2208 = vshrl.u32 %v2126, 16
        %v2210 = vrot.slane %v2208, 4
        %v2211 = vor.u32 %v2210, %v2206
        %v2212 = vrot.slane %v2211, 4
        %v2214 = vshll.u32 %v2127, 16
        %v2216 = vrot.slane %v2214, 5
        %v2217 = vsel %vm365, %v2212, %v2216
        %v2219 = vshrl.u32 %v2128, 16
        %v2221 = vrot.slane %v2219, 4
        %v2222 = vshll.u32 %v2128, 16
        %v2224 = vrot.slane %v2222, 5
        %v2225 = vor.u32 %v2221, %v2224
        %v2226 = vrot.slane %v2225, 4
        %v2228 = vshll.u32 %v2129, 16
        %v2230 = vrot.slane %v2228, 5
        %v2231 = vsel %vm365, %v2226, %v2230
        %v2232 = vshrl.u32 %v2129, 16
        %v2234 = vrot.slane %v2232, 4
        %v2235 = vor.u32 %v2234, %v2230
        %v2236 = vrot.slane %v2235, 4
        %v2238 = vshll.u32 %v2130, 16
        %v2240 = vrot.slane %v2238, 5
        %v2241 = vsel %vm365, %v2236, %v2240
        %v2243 = vshrl.u32 %v2131, 16
        %v2245 = vrot.slane %v2243, 4
        %v2246 = vshll.u32 %v2131, 16
        %v2248 = vrot.slane %v2246, 5
        %v2249 = vor.u32 %v2245, %v2248
        %v2250 = vrot.slane %v2249, 4
        %v2252 = vshll.u32 %v2132, 16
        %v2254 = vrot.slane %v2252, 5
        %v2255 = vsel %vm365, %v2250, %v2254
        %v2256 = vshrl.u32 %v2132, 16
        %v2258 = vrot.slane %v2256, 4
        %v2259 = vor.u32 %v2258, %v2254
        %v2260 = vrot.slane %v2259, 4
        %v2262 = vshll.u32 %v2133, 16
        %v2264 = vrot.slane %v2262, 5
        %v2265 = vsel %vm365, %v2260, %v2264
        %v2267 = vshrl.u32 %v2134, 16
        %v2269 = vrot.slane %v2267, 4
        %v2270 = vshll.u32 %v2134, 16
        %v2272 = vrot.slane %v2270, 5
        %v2273 = vor.u32 %v2269, %v2272
        %v2274 = vrot.slane %v2273, 4
        %v2276 = vshll.u32 %v2135, 16
        %v2278 = vrot.slane %v2276, 5
        %v2279 = vsel %vm365, %v2274, %v2278
        %v2280 = vshrl.u32 %v2135, 16
        %v2282 = vrot.slane %v2280, 4
        %v2283 = vor.u32 %v2282, %v2278
        %v2284 = vrot.slane %v2283, 4
        %v2286 = vshll.u32 %v2136, 16
        %v2288 = vrot.slane %v2286, 5
        %v2289 = vsel %vm365, %v2284, %v2288
        %v2291 = vshrl.u32 %v2137, 16
        %v2293 = vrot.slane %v2291, 4
        %v2294 = vshll.u32 %v2137, 16
        %v2296 = vrot.slane %v2294, 5
        %v2297 = vor.u32 %v2293, %v2296
        %v2298 = vrot.slane %v2297, 4
        %v2300 = vshll.u32 %v2138, 16
        %v2302 = vrot.slane %v2300, 5
        %v2303 = vsel %vm365, %v2298, %v2302
        %v2304 = vshrl.u32 %v2138, 16
        %v2306 = vrot.slane %v2304, 4
        %v2307 = vor.u32 %v2306, %v2302
        %v2308 = vrot.slane %v2307, 4
        %v2310 = vshll.u32 %v2139, 16
        %v2312 = vrot.slane %v2310, 5
        %v2313 = vsel %vm365, %v2308, %v2312
        %v2315 = vshrl.u32 %v2140, 16
        %v2317 = vrot.slane %v2315, 4
        %v2318 = vshll.u32 %v2140, 16
        %v2320 = vrot.slane %v2318, 5
        %v2321 = vor.u32 %v2317, %v2320
        %v2322 = vrot.slane %v2321, 4
        %v2324 = vshll.u32 %v2141, 16
        %v2326 = vrot.slane %v2324, 5
        %v2327 = vsel %vm365, %v2322, %v2326
        %v2328 = vshrl.u32 %v2141, 16
        %v2330 = vrot.slane %v2328, 4
        %v2331 = vor.u32 %v2330, %v2326
        %v2332 = vrot.slane %v2331, 4
        %v2334 = vshll.u32 %v2142, 16
        %v2336 = vrot.slane %v2334, 5
        %v2337 = vsel %vm365, %v2332, %v2336
        %v2339 = vshrl.u32 %v2143, 16
        %v2341 = vrot.slane %v2339, 4
        %v2342 = vshll.u32 %v2143, 16
        %v2344 = vrot.slane %v2342, 5
        %v2345 = vor.u32 %v2341, %v2344
        %v2346 = vrot.slane %v2345, 4
        %v2348 = vshll.u32 %v2144, 16
        %v2350 = vrot.slane %v2348, 5
        %v2351 = vsel %vm365, %v2346, %v2350
        %v2352 = vshrl.u32 %v2144, 16
        %v2354 = vrot.slane %v2352, 4
        %v2355 = vor.u32 %v2354, %v2350
        %v2356 = vrot.slane %v2355, 4
        %v2358 = vshll.u32 %v2145, 16
        %v2360 = vrot.slane %v2358, 5
        %v2361 = vsel %vm365, %v2356, %v2360
        %v2363 = vshrl.u32 %v2146, 16
        %v2365 = vrot.slane %v2363, 4
        %v2366 = vshll.u32 %v2146, 16
        %v2368 = vrot.slane %v2366, 5
        %v2369 = vor.u32 %v2365, %v2368
        %v2370 = vrot.slane %v2369, 4
        %v2372 = vshll.u32 %v2147, 16
        %v2374 = vrot.slane %v2372, 5
        %v2375 = vsel %vm365, %v2370, %v2374
        %v2376 = vshrl.u32 %v2147, 16
        %v2378 = vrot.slane %v2376, 4
        %v2379 = vor.u32 %v2378, %v2374
        %v2380 = vrot.slane %v2379, 4
        %v2382 = vshll.u32 %v2148, 16
        %v2384 = vrot.slane %v2382, 5
        %v2385 = vsel %vm365, %v2380, %v2384
        %v2387 = vshrl.u32 %v2149, 16
        %v2389 = vrot.slane %v2387, 4
        %v2390 = vshll.u32 %v2149, 16
        %v2392 = vrot.slane %v2390, 5
        %v2393 = vor.u32 %v2389, %v2392
        %v2394 = vrot.slane %v2393, 4
        %v2396 = vshll.u32 %v2150, 16
        %v2398 = vrot.slane %v2396, 5
        %v2399 = vsel %vm365, %v2394, %v2398
        %v2400 = vshrl.u32 %v2150, 16
        %v2402 = vrot.slane %v2400, 4
        %v2403 = vor.u32 %v2402, %v2398
        %v2404 = vrot.slane %v2403, 4
        %v2406 = vshll.u32 %v2151, 16
        %v2408 = vrot.slane %v2406, 5
        %v2409 = vsel %vm365, %v2404, %v2408
        %v2411 = vshrl.u32 %v2152, 16
        %v2413 = vrot.slane %v2411, 4
        %v2414 = vshll.u32 %v2152, 16
        %v2416 = vrot.slane %v2414, 5
        %v2417 = vor.u32 %v2413, %v2416
        %v2418 = vrot.slane %v2417, 4
        %v2420 = vshll.u32 %v2153, 16
        %v2422 = vrot.slane %v2420, 5
        %v2423 = vsel %vm365, %v2418, %v2422
        %v2424 = vshrl.u32 %v2153, 16
        %v2426 = vrot.slane %v2424, 4
        %v2427 = vor.u32 %v2426, %v2422
        %v2428 = vrot.slane %v2427, 4
        %v2430 = vshll.u32 %v2154, 16
        %v2432 = vrot.slane %v2430, 5
        %v2433 = vsel %vm365, %v2428, %v2432
        %v2435 = vshrl.u32 %v2155, 16
        %v2437 = vrot.slane %v2435, 4
        %v2438 = vshll.u32 %v2155, 16
        %v2440 = vrot.slane %v2438, 5
        %v2441 = vor.u32 %v2437, %v2440
        %v2442 = vrot.slane %v2441, 4
        %v2444 = vshll.u32 %v2156, 16
        %v2446 = vrot.slane %v2444, 5
        %v2447 = vsel %vm365, %v2442, %v2446
        %v2448 = vshrl.u32 %v2156, 16
        %v2450 = vrot.slane %v2448, 4
        %v2451 = vor.u32 %v2450, %v2446
        %v2452 = vrot.slane %v2451, 4
        %v2454 = vshll.u32 %v2157, 16
        %v2456 = vrot.slane %v2454, 5
        %v2457 = vsel %vm365, %v2452, %v2456
        %v2459 = vshrl.u32 %v2158, 16
        %v2461 = vrot.slane %v2459, 4
        %v2462 = vshll.u32 %v2158, 16
        %v2464 = vrot.slane %v2462, 5
        %v2465 = vor.u32 %v2461, %v2464
        %v2466 = vrot.slane %v2465, 4
        %v2468 = vshll.u32 %v2159, 16
        %v2470 = vrot.slane %v2468, 5
        %v2471 = vsel %vm365, %v2466, %v2470
        %v2472 = vshrl.u32 %v2159, 16
        %v2474 = vrot.slane %v2472, 4
        %v2475 = vor.u32 %v2474, %v2470
        %v2476 = vrot.slane %v2475, 4
        %v2478 = vshll.u32 %v2160, 16
        %v2480 = vrot.slane %v2478, 5
        %v2481 = vsel %vm365, %v2476, %v2480
        %v2483 = vshrl.u32 %v2161, 16
        %v2485 = vrot.slane %v2483, 4
        %v2486 = vshll.u32 %v2161, 16
        %v2488 = vrot.slane %v2486, 5
        %v2489 = vor.u32 %v2485, %v2488
        %v2490 = vrot.slane %v2489, 4
        %v2492 = vshll.u32 %v2162, 16
        %v2494 = vrot.slane %v2492, 5
        %v2495 = vsel %vm365, %v2490, %v2494
        %v2496 = vshrl.u32 %v2162, 16
        %v2498 = vrot.slane %v2496, 4
        %v2499 = vor.u32 %v2498, %v2494
        %v2500 = vrot.slane %v2499, 4
        %v2502 = vshll.u32 %v2163, 16
        %v2504 = vrot.slane %v2502, 5
        %v2505 = vsel %vm365, %v2500, %v2504
        %v2507 = vshrl.u32 %v2164, 16
        %v2509 = vrot.slane %v2507, 4
        %v2510 = vshll.u32 %v2164, 16
        %v2512 = vrot.slane %v2510, 5
        %v2513 = vor.u32 %v2509, %v2512
        %v2514 = vrot.slane %v2513, 4
        %v2516 = vshll.u32 %v2165, 16
        %v2518 = vrot.slane %v2516, 5
        %v2519 = vsel %vm365, %v2514, %v2518
        %v2520 = vshrl.u32 %v2165, 16
        %v2522 = vrot.slane %v2520, 4
        %v2523 = vor.u32 %v2522, %v2518
        %v2524 = vrot.slane %v2523, 4
        %v2526 = vshll.u32 %v2166, 16
        %v2528 = vrot.slane %v2526, 5
        %v2529 = vsel %vm365, %v2524, %v2528
        %v2531 = vshrl.u32 %v2167, 16
        %v2533 = vrot.slane %v2531, 4
        %v2534 = vshll.u32 %v2167, 16
        %v2536 = vrot.slane %v2534, 5
        %v2537 = vor.u32 %v2533, %v2536
        %v2538 = vrot.slane %v2537, 4
        %v2540 = vshll.u32 %v2168, 16
        %v2542 = vrot.slane %v2540, 5
        %v2543 = vsel %vm365, %v2538, %v2542
        %v2544 = vshrl.u32 %v2168, 16
        %v2546 = vrot.slane %v2544, 4
        %v2547 = vor.u32 %v2546, %v2542
        %v2548 = vrot.slane %v2547, 4
        %v2550 = vshll.u32 %v2169, 16
        %v2552 = vrot.slane %v2550, 5
        %v2553 = vsel %vm365, %v2548, %v2552
        %s2554 = scalar_lea.vmem %s1, 16
        %v2555 = vld [vmem:[%s2554] sm:$0xf]
        %v2556 = vunpack.c.l.b16 %v2183
        %v2557 = vunpack.c.l.b16 %v2193
        %v2558 = vunpack.c.l.b16 %v2207
        %v2559 = vunpack.c.l.b16 %v2217
        %v2560 = vunpack.c.l.b16 %v2231
        %v2561 = vunpack.c.l.b16 %v2241
        %v2562 = vunpack.c.l.b16 %v2255
        %v2563 = vunpack.c.l.b16 %v2265
        %v2564 = vunpack.c.l.b16 %v2279
        %v2565 = vunpack.c.l.b16 %v2289
        %v2566 = vunpack.c.l.b16 %v2303
        %v2567 = vunpack.c.l.b16 %v2313
        %v2568 = vunpack.c.l.b16 %v2327
        %v2569 = vunpack.c.l.b16 %v2337
        %v2570 = vunpack.c.l.b16 %v2351
        %v2571 = vunpack.c.l.b16 %v2361
        %v2572 = vunpack.c.l.b16 %v2375
        %v2573 = vunpack.c.l.b16 %v2385
        %v2574 = vunpack.c.l.b16 %v2399
        %v2575 = vunpack.c.l.b16 %v2409
        %v2576 = vunpack.c.l.b16 %v2423
        %v2577 = vunpack.c.l.b16 %v2433
        %v2578 = vunpack.c.l.b16 %v2447
        %v2579 = vunpack.c.l.b16 %v2457
        %v2580 = vunpack.c.l.b16 %v2471
        %v2581 = vunpack.c.l.b16 %v2481
        %v2582 = vunpack.c.l.b16 %v2495
        %v2583 = vunpack.c.l.b16 %v2505
        %v2584 = vunpack.c.l.b16 %v2519
        %v2585 = vunpack.c.l.b16 %v2529
        %v2586 = vunpack.c.l.b16 %v2543
        %v2587 = vunpack.c.l.b16 %v2553
        %v2588 = vpack.c.b16 %v2557, %v2556
        %v2589 = vpack.c.b16 %v2559, %v2558
        %v2590 = vpack.c.b16 %v2561, %v2560
        %v2591 = vpack.c.b16 %v2563, %v2562
        %v2592 = vpack.c.b16 %v2565, %v2564
        %v2593 = vpack.c.b16 %v2567, %v2566
        %v2594 = vpack.c.b16 %v2569, %v2568
        %v2595 = vpack.c.b16 %v2571, %v2570
        %v2596 = vpack.c.b16 %v2573, %v2572
        %v2597 = vpack.c.b16 %v2575, %v2574
        %v2598 = vpack.c.b16 %v2577, %v2576
        %v2599 = vpack.c.b16 %v2579, %v2578
        %v2600 = vpack.c.b16 %v2581, %v2580
        %v2601 = vpack.c.b16 %v2583, %v2582
        %v2602 = vpack.c.b16 %v2585, %v2584
        %v2603 = vpack.c.b16 %v2587, %v2586
        %v2605 = vsel %vm800, %v2588, 0
        %v2608 = vsel %vm800, %v2589, 0
        %v2611 = vsel %vm800, %v2590, 0
        %v2614 = vsel %vm800, %v2591, 0
        %v2617 = vsel %vm800, %v2592, 0
        %v2620 = vsel %vm800, %v2593, 0
        %v2623 = vsel %vm800, %v2594, 0
        %v2626 = vsel %vm800, %v2595, 0
        %v2629 = vsel %vm800, %v2596, 0
        %v2632 = vsel %vm800, %v2597, 0
        %v2635 = vsel %vm800, %v2598, 0
        %v2638 = vsel %vm800, %v2599, 0
        %v2641 = vsel %vm800, %v2600, 0
        %v2644 = vsel %vm800, %v2601, 0
        %v2647 = vsel %vm800, %v2602, 0
        %v2650 = vsel %vm800, %v2603, 0
        %v2653 = vsel %vm849, %v2555, 0
        %2655 = vmatprep.subr.bf16.mxu0 0
        %2656 = vmatpush1.bf16.msra.mxu0 0
        %2657 = vmatprep.subr.bf16.mxu0 0
        %2658 = vmatpush1.bf16.msra.mxu0 0
        %2659 = vmatprep.subr.bf16.mxu0 0
        %2660 = vmatpush1.bf16.msra.mxu0 0
        %2661 = vmatprep.subr.bf16.mxu0 0
        %2662 = vmatpush1.bf16.msra.mxu0 0
        %2663 = vmatprep.subr.bf16.mxu0 0
        %2664 = vmatpush1.bf16.msra.mxu0 0
        %2665 = vmatprep.subr.bf16.mxu0 0
        %2666 = vmatpush1.bf16.msra.mxu0 0
        %2667 = vmatprep.subr.bf16.mxu0 0
        %2668 = vmatpush1.bf16.msra.mxu0 0
        %2669 = vmatprep.subr.bf16.mxu0 0
        %2670 = vmatpush1.bf16.msra.mxu0 %v2653
        %2671 = vmatprep.subr.bf16.mxu0 0
        %2672 = vmatpush2.bf16.msra.mxu0 0
        %2673 = vmatprep.subr.bf16.mxu0 0
        %2674 = vmatpush2.bf16.msra.mxu0 0
        %2675 = vmatprep.subr.bf16.mxu0 0
        %2676 = vmatpush2.bf16.msra.mxu0 0
        %2677 = vmatprep.subr.bf16.mxu0 0
        %2678 = vmatpush2.bf16.msra.mxu0 0
        %2679 = vmatprep.subr.bf16.mxu0 0
        %2680 = vmatpush2.bf16.msra.mxu0 0
        %2681 = vmatprep.subr.bf16.mxu0 0
        %2682 = vmatpush2.bf16.msra.mxu0 0
        %2683 = vmatprep.subr.bf16.mxu0 0
        %2684 = vmatpush2.bf16.msra.mxu0 0
        %2685 = vmatprep.subr.bf16.mxu0 0
        %2686 = vmatpush2.bf16.msra.mxu0 0
        %2687 = vmatprep.mubr.bf16.mxu0 0
        %2688 = vmatmul.mubr.bf16.gmra.mxu0 %v2605
        %v2689 = vpop.f32.mrf.mxu0
        %v2690 = vadd.f32 0.0, %v2689
        %v2691 = vpop.f32.mrf.mxu0
        %v2692 = vpop.f32.mrf.mxu0
        %v2693 = vadd.f32 0.0, %v2692
        %v2694 = vpop.f32.mrf.mxu0
        %2695 = vmatprep.mubr.bf16.mxu0 0
        %2696 = vmatmul.mubr.bf16.gmra.mxu0 %v2608
        %v2697 = vpop.f32.mrf.mxu0
        %v2698 = vadd.f32 0.0, %v2697
        %v2699 = vpop.f32.mrf.mxu0
        %v2700 = vpop.f32.mrf.mxu0
        %v2701 = vadd.f32 0.0, %v2700
        %v2702 = vpop.f32.mrf.mxu0
        %2703 = vmatprep.mubr.bf16.mxu0 0
        %2704 = vmatmul.mubr.bf16.gmra.mxu0 %v2611
        %v2705 = vpop.f32.mrf.mxu0
        %v2706 = vadd.f32 0.0, %v2705
        %v2707 = vpop.f32.mrf.mxu0
        %v2708 = vpop.f32.mrf.mxu0
        %v2709 = vadd.f32 0.0, %v2708
        %v2710 = vpop.f32.mrf.mxu0
        %2711 = vmatprep.mubr.bf16.mxu0 0
        %2712 = vmatmul.mubr.bf16.gmra.mxu0 %v2614
        %v2713 = vpop.f32.mrf.mxu0
        %v2714 = vadd.f32 0.0, %v2713
        %v2715 = vpop.f32.mrf.mxu0
        %v2716 = vpop.f32.mrf.mxu0
        %v2717 = vadd.f32 0.0, %v2716
        %v2718 = vpop.f32.mrf.mxu0
        %2719 = vmatprep.mubr.bf16.mxu0 0
        %2720 = vmatmul.mubr.bf16.gmra.mxu0 %v2617
        %v2721 = vpop.f32.mrf.mxu0
        %v2722 = vadd.f32 0.0, %v2721
        %v2723 = vpop.f32.mrf.mxu0
        %v2724 = vpop.f32.mrf.mxu0
        %v2725 = vadd.f32 0.0, %v2724
        %v2726 = vpop.f32.mrf.mxu0
        %2727 = vmatprep.mubr.bf16.mxu0 0
        %2728 = vmatmul.mubr.bf16.gmra.mxu0 %v2620
        %v2729 = vpop.f32.mrf.mxu0
        %v2730 = vadd.f32 0.0, %v2729
        %v2731 = vpop.f32.mrf.mxu0
        %v2732 = vpop.f32.mrf.mxu0
        %v2733 = vadd.f32 0.0, %v2732
        %v2734 = vpop.f32.mrf.mxu0
        %2735 = vmatprep.mubr.bf16.mxu0 0
        %2736 = vmatmul.mubr.bf16.gmra.mxu0 %v2623
        %v2737 = vpop.f32.mrf.mxu0
        %v2738 = vadd.f32 0.0, %v2737
        %v2739 = vpop.f32.mrf.mxu0
        %v2740 = vpop.f32.mrf.mxu0
        %v2741 = vadd.f32 0.0, %v2740
        %v2742 = vpop.f32.mrf.mxu0
        %2743 = vmatprep.mubr.bf16.mxu0 0
        %2744 = vmatmul.mubr.bf16.gmra.mxu0 %v2626
        %v2745 = vpop.f32.mrf.mxu0
        %v2746 = vadd.f32 0.0, %v2745
        %v2747 = vpop.f32.mrf.mxu0
        %v2748 = vpop.f32.mrf.mxu0
        %v2749 = vadd.f32 0.0, %v2748
        %v2750 = vpop.f32.mrf.mxu0
        %2751 = vmatprep.mubr.bf16.mxu0 0
        %2752 = vmatmul.mubr.bf16.gmra.mxu0 %v2629
        %v2753 = vpop.f32.mrf.mxu0
        %v2754 = vadd.f32 0.0, %v2753
        %v2755 = vpop.f32.mrf.mxu0
        %v2756 = vpop.f32.mrf.mxu0
        %v2757 = vadd.f32 0.0, %v2756
        %v2758 = vpop.f32.mrf.mxu0
        %2759 = vmatprep.mubr.bf16.mxu0 0
        %2760 = vmatmul.mubr.bf16.gmra.mxu0 %v2632
        %v2761 = vpop.f32.mrf.mxu0
        %v2762 = vadd.f32 0.0, %v2761
        %v2763 = vpop.f32.mrf.mxu0
        %v2764 = vpop.f32.mrf.mxu0
        %v2765 = vadd.f32 0.0, %v2764
        %v2766 = vpop.f32.mrf.mxu0
        %2767 = vmatprep.mubr.bf16.mxu0 0
        %2768 = vmatmul.mubr.bf16.gmra.mxu0 %v2635
        %v2769 = vpop.f32.mrf.mxu0
        %v2770 = vadd.f32 0.0, %v2769
        %v2771 = vpop.f32.mrf.mxu0
        %v2772 = vpop.f32.mrf.mxu0
        %v2773 = vadd.f32 0.0, %v2772
        %v2774 = vpop.f32.mrf.mxu0
        %2775 = vmatprep.mubr.bf16.mxu0 0
        %2776 = vmatmul.mubr.bf16.gmra.mxu0 %v2638
        %v2777 = vpop.f32.mrf.mxu0
        %v2778 = vadd.f32 0.0, %v2777
        %v2779 = vpop.f32.mrf.mxu0
        %v2780 = vpop.f32.mrf.mxu0
        %v2781 = vadd.f32 0.0, %v2780
        %v2782 = vpop.f32.mrf.mxu0
        %2783 = vmatprep.mubr.bf16.mxu0 0
        %2784 = vmatmul.mubr.bf16.gmra.mxu0 %v2641
        %v2785 = vpop.f32.mrf.mxu0
        %v2786 = vadd.f32 0.0, %v2785
        %v2787 = vpop.f32.mrf.mxu0
        %v2788 = vpop.f32.mrf.mxu0
        %v2789 = vadd.f32 0.0, %v2788
        %v2790 = vpop.f32.mrf.mxu0
        %2791 = vmatprep.mubr.bf16.mxu0 0
        %2792 = vmatmul.mubr.bf16.gmra.mxu0 %v2644
        %v2793 = vpop.f32.mrf.mxu0
        %v2794 = vadd.f32 0.0, %v2793
        %v2795 = vpop.f32.mrf.mxu0
        %v2796 = vpop.f32.mrf.mxu0
        %v2797 = vadd.f32 0.0, %v2796
        %v2798 = vpop.f32.mrf.mxu0
        %2799 = vmatprep.mubr.bf16.mxu0 0
        %2800 = vmatmul.mubr.bf16.gmra.mxu0 %v2647
        %v2801 = vpop.f32.mrf.mxu0
        %v2802 = vadd.f32 0.0, %v2801
        %v2803 = vpop.f32.mrf.mxu0
        %v2804 = vpop.f32.mrf.mxu0
        %v2805 = vadd.f32 0.0, %v2804
        %v2806 = vpop.f32.mrf.mxu0
        %2807 = vmatprep.mubr.bf16.mxu0 0
        %2808 = vmatmul.mubr.bf16.gmra.mxu0 %v2650
        %v2809 = vpop.f32.mrf.mxu0
        %v2810 = vadd.f32 0.0, %v2809
        %v2811 = vpop.f32.mrf.mxu0
        %v2812 = vpop.f32.mrf.mxu0
        %v2813 = vadd.f32 0.0, %v2812
        %v2814 = vpop.f32.mrf.mxu0
        %2815 = vdwg.mxu0
        %v2816 = vadd.f32 %v2090, %v2690
        %v2817 = vadd.f32 %v2091, %v2693
        %v2818 = vadd.f32 %v2092, %v2698
        %v2819 = vadd.f32 %v2093, %v2701
        %v2820 = vadd.f32 %v2094, %v2706
        %v2821 = vadd.f32 %v2095, %v2709
        %v2822 = vadd.f32 %v2096, %v2714
        %v2823 = vadd.f32 %v2097, %v2717
        %v2824 = vadd.f32 %v2098, %v2722
        %v2825 = vadd.f32 %v2099, %v2725
        %v2826 = vadd.f32 %v2100, %v2730
        %v2827 = vadd.f32 %v2101, %v2733
        %v2828 = vadd.f32 %v2102, %v2738
        %v2829 = vadd.f32 %v2103, %v2741
        %v2830 = vadd.f32 %v2104, %v2746
        %v2831 = vadd.f32 %v2105, %v2749
        %v2832 = vadd.f32 %v2106, %v2754
        %v2833 = vadd.f32 %v2107, %v2757
        %v2834 = vadd.f32 %v2108, %v2762
        %v2835 = vadd.f32 %v2109, %v2765
        %v2836 = vadd.f32 %v2110, %v2770
        %v2837 = vadd.f32 %v2111, %v2773
        %v2838 = vadd.f32 %v2112, %v2778
        %v2839 = vadd.f32 %v2113, %v2781
        %v2840 = vadd.f32 %v2114, %v2786
        %v2841 = vadd.f32 %v2115, %v2789
        %v2842 = vadd.f32 %v2116, %v2794
        %v2843 = vadd.f32 %v2117, %v2797
        %v2844 = vadd.f32 %v2118, %v2802
        %v2845 = vadd.f32 %v2119, %v2805
        %v2846 = vadd.f32 %v2120, %v2810
        %v2847 = vadd.f32 %v2121, %v2813
        %v2848 = vld [vmem:[%s1763] sm:$0xe]
        %v2849 = vld [vmem:[%s1763 + $0xc] sm:$0xe]
        %v2850 = vld [vmem:[%s1763 + $0x18] sm:$0xe]
        %v2851 = vld [vmem:[%s1763 + $0x24] sm:$0xe]
        %v2852 = vld [vmem:[%s1763 + $0x30] sm:$0xe]
        %v2853 = vld [vmem:[%s1763 + $0x3c] sm:$0xe]
        %v2854 = vld [vmem:[%s1763 + $0x48] sm:$0xe]
        %v2855 = vld [vmem:[%s1763 + $0x54] sm:$0xe]
        %v2856 = vld [vmem:[%s1763 + $0x60] sm:$0xe]
        %v2857 = vld [vmem:[%s1763 + $0x6c] sm:$0xe]
        %v2858 = vld [vmem:[%s1763 + $0x78] sm:$0xe]
        %v2859 = vld [vmem:[%s1763 + $0x84] sm:$0xe]
        %v2860 = vld [vmem:[%s1763 + $0x90] sm:$0xe]
        %v2861 = vld [vmem:[%s1763 + $0x9c] sm:$0xe]
        %v2862 = vld [vmem:[%s1763 + $0xa8] sm:$0xe]
        %v2863 = vld [vmem:[%s1763 + $0xb4] sm:$0xe]
        %v2912 = vrot.slane %v2848, 5
        %v2913 = vrot.slane %v2912, 4
        %v2914 = vrot.slane %v2123, 5
        %v2915 = vsel %vm1356, %v2913, %v2914
        %v2916 = vrot.slane %v2914, 4
        %v2917 = vrot.slane %v2124, 5
        %v2918 = vsel %vm1356, %v2916, %v2917
        %v2919 = vrot.slane %v2849, 5
        %v2920 = vrot.slane %v2919, 4
        %v2921 = vrot.slane %v2126, 5
        %v2922 = vsel %vm1356, %v2920, %v2921
        %v2923 = vrot.slane %v2921, 4
        %v2924 = vrot.slane %v2127, 5
        %v2925 = vsel %vm1356, %v2923, %v2924
        %v2926 = vrot.slane %v2850, 5
        %v2927 = vrot.slane %v2926, 4
        %v2928 = vrot.slane %v2129, 5
        %v2929 = vsel %vm1356, %v2927, %v2928
        %v2930 = vrot.slane %v2928, 4
        %v2931 = vrot.slane %v2130, 5
        %v2932 = vsel %vm1356, %v2930, %v2931
        %v2933 = vrot.slane %v2851, 5
        %v2934 = vrot.slane %v2933, 4
        %v2935 = vrot.slane %v2132, 5
        %v2936 = vsel %vm1356, %v2934, %v2935
        %v2937 = vrot.slane %v2935, 4
        %v2938 = vrot.slane %v2133, 5
        %v2939 = vsel %vm1356, %v2937, %v2938
        %v2940 = vrot.slane %v2852, 5
        %v2941 = vrot.slane %v2940, 4
        %v2942 = vrot.slane %v2135, 5
        %v2943 = vsel %vm1356, %v2941, %v2942
        %v2944 = vrot.slane %v2942, 4
        %v2945 = vrot.slane %v2136, 5
        %v2946 = vsel %vm1356, %v2944, %v2945
        %v2947 = vrot.slane %v2853, 5
        %v2948 = vrot.slane %v2947, 4
        %v2949 = vrot.slane %v2138, 5
        %v2950 = vsel %vm1356, %v2948, %v2949
        %v2951 = vrot.slane %v2949, 4
        %v2952 = vrot.slane %v2139, 5
        %v2953 = vsel %vm1356, %v2951, %v2952
        %v2954 = vrot.slane %v2854, 5
        %v2955 = vrot.slane %v2954, 4
        %v2956 = vrot.slane %v2141, 5
        %v2957 = vsel %vm1356, %v2955, %v2956
        %v2958 = vrot.slane %v2956, 4
        %v2959 = vrot.slane %v2142, 5
        %v2960 = vsel %vm1356, %v2958, %v2959
        %v2961 = vrot.slane %v2855, 5
        %v2962 = vrot.slane %v2961, 4
        %v2963 = vrot.slane %v2144, 5
        %v2964 = vsel %vm1356, %v2962, %v2963
        %v2965 = vrot.slane %v2963, 4
        %v2966 = vrot.slane %v2145, 5
        %v2967 = vsel %vm1356, %v2965, %v2966
        %v2968 = vrot.slane %v2856, 5
        %v2969 = vrot.slane %v2968, 4
        %v2970 = vrot.slane %v2147, 5
        %v2971 = vsel %vm1356, %v2969, %v2970
        %v2972 = vrot.slane %v2970, 4
        %v2973 = vrot.slane %v2148, 5
        %v2974 = vsel %vm1356, %v2972, %v2973
        %v2975 = vrot.slane %v2857, 5
        %v2976 = vrot.slane %v2975, 4
        %v2977 = vrot.slane %v2150, 5
        %v2978 = vsel %vm1356, %v2976, %v2977
        %v2979 = vrot.slane %v2977, 4
        %v2980 = vrot.slane %v2151, 5
        %v2981 = vsel %vm1356, %v2979, %v2980
        %v2982 = vrot.slane %v2858, 5
        %v2983 = vrot.slane %v2982, 4
        %v2984 = vrot.slane %v2153, 5
        %v2985 = vsel %vm1356, %v2983, %v2984
        %v2986 = vrot.slane %v2984, 4
        %v2987 = vrot.slane %v2154, 5
        %v2988 = vsel %vm1356, %v2986, %v2987
        %v2989 = vrot.slane %v2859, 5
        %v2990 = vrot.slane %v2989, 4
        %v2991 = vrot.slane %v2156, 5
        %v2992 = vsel %vm1356, %v2990, %v2991
        %v2993 = vrot.slane %v2991, 4
        %v2994 = vrot.slane %v2157, 5
        %v2995 = vsel %vm1356, %v2993, %v2994
        %v2996 = vrot.slane %v2860, 5
        %v2997 = vrot.slane %v2996, 4
        %v2998 = vrot.slane %v2159, 5
        %v2999 = vsel %vm1356, %v2997, %v2998
        %v3000 = vrot.slane %v2998, 4
        %v3001 = vrot.slane %v2160, 5
        %v3002 = vsel %vm1356, %v3000, %v3001
        %v3003 = vrot.slane %v2861, 5
        %v3004 = vrot.slane %v3003, 4
        %v3005 = vrot.slane %v2162, 5
        %v3006 = vsel %vm1356, %v3004, %v3005
        %v3007 = vrot.slane %v3005, 4
        %v3008 = vrot.slane %v2163, 5
        %v3009 = vsel %vm1356, %v3007, %v3008
        %v3010 = vrot.slane %v2862, 5
        %v3011 = vrot.slane %v3010, 4
        %v3012 = vrot.slane %v2165, 5
        %v3013 = vsel %vm1356, %v3011, %v3012
        %v3014 = vrot.slane %v3012, 4
        %v3015 = vrot.slane %v2166, 5
        %v3016 = vsel %vm1356, %v3014, %v3015
        %v3017 = vrot.slane %v2863, 5
        %v3018 = vrot.slane %v3017, 4
        %v3019 = vrot.slane %v2168, 5
        %v3020 = vsel %vm1356, %v3018, %v3019
        %v3021 = vrot.slane %v3019, 4
        %v3022 = vrot.slane %v2169, 5
        %v3023 = vsel %vm1356, %v3021, %v3022
        %s3024 = scalar_lea.vmem %s1, 20
        %v3025 = vld [vmem:[%s3024] sm:$0xf]
        %v3026 = vunpack.c.l.b16 %v2915
        %v3027 = vunpack.c.l.b16 %v2918
        %v3028 = vunpack.c.l.b16 %v2922
        %v3029 = vunpack.c.l.b16 %v2925
        %v3030 = vunpack.c.l.b16 %v2929
        %v3031 = vunpack.c.l.b16 %v2932
        %v3032 = vunpack.c.l.b16 %v2936
        %v3033 = vunpack.c.l.b16 %v2939
        %v3034 = vunpack.c.l.b16 %v2943
        %v3035 = vunpack.c.l.b16 %v2946
        %v3036 = vunpack.c.l.b16 %v2950
        %v3037 = vunpack.c.l.b16 %v2953
        %v3038 = vunpack.c.l.b16 %v2957
        %v3039 = vunpack.c.l.b16 %v2960
        %v3040 = vunpack.c.l.b16 %v2964
        %v3041 = vunpack.c.l.b16 %v2967
        %v3042 = vunpack.c.l.b16 %v2971
        %v3043 = vunpack.c.l.b16 %v2974
        %v3044 = vunpack.c.l.b16 %v2978
        %v3045 = vunpack.c.l.b16 %v2981
        %v3046 = vunpack.c.l.b16 %v2985
        %v3047 = vunpack.c.l.b16 %v2988
        %v3048 = vunpack.c.l.b16 %v2992
        %v3049 = vunpack.c.l.b16 %v2995
        %v3050 = vunpack.c.l.b16 %v2999
        %v3051 = vunpack.c.l.b16 %v3002
        %v3052 = vunpack.c.l.b16 %v3006
        %v3053 = vunpack.c.l.b16 %v3009
        %v3054 = vunpack.c.l.b16 %v3013
        %v3055 = vunpack.c.l.b16 %v3016
        %v3056 = vunpack.c.l.b16 %v3020
        %v3057 = vunpack.c.l.b16 %v3023
        %v3058 = vpack.c.b16 %v3027, %v3026
        %v3059 = vpack.c.b16 %v3029, %v3028
        %v3060 = vpack.c.b16 %v3031, %v3030
        %v3061 = vpack.c.b16 %v3033, %v3032
        %v3062 = vpack.c.b16 %v3035, %v3034
        %v3063 = vpack.c.b16 %v3037, %v3036
        %v3064 = vpack.c.b16 %v3039, %v3038
        %v3065 = vpack.c.b16 %v3041, %v3040
        %v3066 = vpack.c.b16 %v3043, %v3042
        %v3067 = vpack.c.b16 %v3045, %v3044
        %v3068 = vpack.c.b16 %v3047, %v3046
        %v3069 = vpack.c.b16 %v3049, %v3048
        %v3070 = vpack.c.b16 %v3051, %v3050
        %v3071 = vpack.c.b16 %v3053, %v3052
        %v3072 = vpack.c.b16 %v3055, %v3054
        %v3073 = vpack.c.b16 %v3057, %v3056
        %v3075 = vsel %vm800, %v3058, 0
        %v3078 = vsel %vm800, %v3059, 0
        %v3081 = vsel %vm800, %v3060, 0
        %v3084 = vsel %vm800, %v3061, 0
        %v3087 = vsel %vm800, %v3062, 0
        %v3090 = vsel %vm800, %v3063, 0
        %v3093 = vsel %vm800, %v3064, 0
        %v3096 = vsel %vm800, %v3065, 0
        %v3099 = vsel %vm800, %v3066, 0
        %v3102 = vsel %vm800, %v3067, 0
        %v3105 = vsel %vm800, %v3068, 0
        %v3108 = vsel %vm800, %v3069, 0
        %v3111 = vsel %vm800, %v3070, 0
        %v3114 = vsel %vm800, %v3071, 0
        %v3117 = vsel %vm800, %v3072, 0
        %v3120 = vsel %vm800, %v3073, 0
        %v3123 = vsel %vm849, %v3025, 0
        %3125 = vmatprep.subr.bf16.mxu0 0
        %3126 = vmatpush1.bf16.msra.mxu0 0
        %3127 = vmatprep.subr.bf16.mxu0 0
        %3128 = vmatpush1.bf16.msra.mxu0 0
        %3129 = vmatprep.subr.bf16.mxu0 0
        %3130 = vmatpush1.bf16.msra.mxu0 0
        %3131 = vmatprep.subr.bf16.mxu0 0
        %3132 = vmatpush1.bf16.msra.mxu0 0
        %3133 = vmatprep.subr.bf16.mxu0 0
        %3134 = vmatpush1.bf16.msra.mxu0 0
        %3135 = vmatprep.subr.bf16.mxu0 0
        %3136 = vmatpush1.bf16.msra.mxu0 0
        %3137 = vmatprep.subr.bf16.mxu0 0
        %3138 = vmatpush1.bf16.msra.mxu0 0
        %3139 = vmatprep.subr.bf16.mxu0 0
        %3140 = vmatpush1.bf16.msra.mxu0 %v3123
        %3141 = vmatprep.subr.bf16.mxu0 0
        %3142 = vmatpush2.bf16.msra.mxu0 0
        %3143 = vmatprep.subr.bf16.mxu0 0
        %3144 = vmatpush2.bf16.msra.mxu0 0
        %3145 = vmatprep.subr.bf16.mxu0 0
        %3146 = vmatpush2.bf16.msra.mxu0 0
        %3147 = vmatprep.subr.bf16.mxu0 0
        %3148 = vmatpush2.bf16.msra.mxu0 0
        %3149 = vmatprep.subr.bf16.mxu0 0
        %3150 = vmatpush2.bf16.msra.mxu0 0
        %3151 = vmatprep.subr.bf16.mxu0 0
        %3152 = vmatpush2.bf16.msra.mxu0 0
        %3153 = vmatprep.subr.bf16.mxu0 0
        %3154 = vmatpush2.bf16.msra.mxu0 0
        %3155 = vmatprep.subr.bf16.mxu0 0
        %3156 = vmatpush2.bf16.msra.mxu0 0
        %3157 = vmatprep.mubr.bf16.mxu0 0
        %3158 = vmatmul.mubr.bf16.gmra.mxu0 %v3075
        %v3159 = vpop.f32.mrf.mxu0
        %v3160 = vadd.f32 0.0, %v3159
        %v3161 = vpop.f32.mrf.mxu0
        %v3162 = vpop.f32.mrf.mxu0
        %v3163 = vadd.f32 0.0, %v3162
        %v3164 = vpop.f32.mrf.mxu0
        %3165 = vmatprep.mubr.bf16.mxu0 0
        %3166 = vmatmul.mubr.bf16.gmra.mxu0 %v3078
        %v3167 = vpop.f32.mrf.mxu0
        %v3168 = vadd.f32 0.0, %v3167
        %v3169 = vpop.f32.mrf.mxu0
        %v3170 = vpop.f32.mrf.mxu0
        %v3171 = vadd.f32 0.0, %v3170
        %v3172 = vpop.f32.mrf.mxu0
        %3173 = vmatprep.mubr.bf16.mxu0 0
        %3174 = vmatmul.mubr.bf16.gmra.mxu0 %v3081
        %v3175 = vpop.f32.mrf.mxu0
        %v3176 = vadd.f32 0.0, %v3175
        %v3177 = vpop.f32.mrf.mxu0
        %v3178 = vpop.f32.mrf.mxu0
        %v3179 = vadd.f32 0.0, %v3178
        %v3180 = vpop.f32.mrf.mxu0
        %3181 = vmatprep.mubr.bf16.mxu0 0
        %3182 = vmatmul.mubr.bf16.gmra.mxu0 %v3084
        %v3183 = vpop.f32.mrf.mxu0
        %v3184 = vadd.f32 0.0, %v3183
        %v3185 = vpop.f32.mrf.mxu0
        %v3186 = vpop.f32.mrf.mxu0
        %v3187 = vadd.f32 0.0, %v3186
        %v3188 = vpop.f32.mrf.mxu0
        %3189 = vmatprep.mubr.bf16.mxu0 0
        %3190 = vmatmul.mubr.bf16.gmra.mxu0 %v3087
        %v3191 = vpop.f32.mrf.mxu0
        %v3192 = vadd.f32 0.0, %v3191
        %v3193 = vpop.f32.mrf.mxu0
        %v3194 = vpop.f32.mrf.mxu0
        %v3195 = vadd.f32 0.0, %v3194
        %v3196 = vpop.f32.mrf.mxu0
        %3197 = vmatprep.mubr.bf16.mxu0 0
        %3198 = vmatmul.mubr.bf16.gmra.mxu0 %v3090
        %v3199 = vpop.f32.mrf.mxu0
        %v3200 = vadd.f32 0.0, %v3199
        %v3201 = vpop.f32.mrf.mxu0
        %v3202 = vpop.f32.mrf.mxu0
        %v3203 = vadd.f32 0.0, %v3202
        %v3204 = vpop.f32.mrf.mxu0
        %3205 = vmatprep.mubr.bf16.mxu0 0
        %3206 = vmatmul.mubr.bf16.gmra.mxu0 %v3093
        %v3207 = vpop.f32.mrf.mxu0
        %v3208 = vadd.f32 0.0, %v3207
        %v3209 = vpop.f32.mrf.mxu0
        %v3210 = vpop.f32.mrf.mxu0
        %v3211 = vadd.f32 0.0, %v3210
        %v3212 = vpop.f32.mrf.mxu0
        %3213 = vmatprep.mubr.bf16.mxu0 0
        %3214 = vmatmul.mubr.bf16.gmra.mxu0 %v3096
        %v3215 = vpop.f32.mrf.mxu0
        %v3216 = vadd.f32 0.0, %v3215
        %v3217 = vpop.f32.mrf.mxu0
        %v3218 = vpop.f32.mrf.mxu0
        %v3219 = vadd.f32 0.0, %v3218
        %v3220 = vpop.f32.mrf.mxu0
        %3221 = vmatprep.mubr.bf16.mxu0 0
        %3222 = vmatmul.mubr.bf16.gmra.mxu0 %v3099
        %v3223 = vpop.f32.mrf.mxu0
        %v3224 = vadd.f32 0.0, %v3223
        %v3225 = vpop.f32.mrf.mxu0
        %v3226 = vpop.f32.mrf.mxu0
        %v3227 = vadd.f32 0.0, %v3226
        %v3228 = vpop.f32.mrf.mxu0
        %3229 = vmatprep.mubr.bf16.mxu0 0
        %3230 = vmatmul.mubr.bf16.gmra.mxu0 %v3102
        %v3231 = vpop.f32.mrf.mxu0
        %v3232 = vadd.f32 0.0, %v3231
        %v3233 = vpop.f32.mrf.mxu0
        %v3234 = vpop.f32.mrf.mxu0
        %v3235 = vadd.f32 0.0, %v3234
        %v3236 = vpop.f32.mrf.mxu0
        %3237 = vmatprep.mubr.bf16.mxu0 0
        %3238 = vmatmul.mubr.bf16.gmra.mxu0 %v3105
        %v3239 = vpop.f32.mrf.mxu0
        %v3240 = vadd.f32 0.0, %v3239
        %v3241 = vpop.f32.mrf.mxu0
        %v3242 = vpop.f32.mrf.mxu0
        %v3243 = vadd.f32 0.0, %v3242
        %v3244 = vpop.f32.mrf.mxu0
        %3245 = vmatprep.mubr.bf16.mxu0 0
        %3246 = vmatmul.mubr.bf16.gmra.mxu0 %v3108
        %v3247 = vpop.f32.mrf.mxu0
        %v3248 = vadd.f32 0.0, %v3247
        %v3249 = vpop.f32.mrf.mxu0
        %v3250 = vpop.f32.mrf.mxu0
        %v3251 = vadd.f32 0.0, %v3250
        %v3252 = vpop.f32.mrf.mxu0
        %3253 = vmatprep.mubr.bf16.mxu0 0
        %3254 = vmatmul.mubr.bf16.gmra.mxu0 %v3111
        %v3255 = vpop.f32.mrf.mxu0
        %v3256 = vadd.f32 0.0, %v3255
        %v3257 = vpop.f32.mrf.mxu0
        %v3258 = vpop.f32.mrf.mxu0
        %v3259 = vadd.f32 0.0, %v3258
        %v3260 = vpop.f32.mrf.mxu0
        %3261 = vmatprep.mubr.bf16.mxu0 0
        %3262 = vmatmul.mubr.bf16.gmra.mxu0 %v3114
        %v3263 = vpop.f32.mrf.mxu0
        %v3264 = vadd.f32 0.0, %v3263
        %v3265 = vpop.f32.mrf.mxu0
        %v3266 = vpop.f32.mrf.mxu0
        %v3267 = vadd.f32 0.0, %v3266
        %v3268 = vpop.f32.mrf.mxu0
        %3269 = vmatprep.mubr.bf16.mxu0 0
        %3270 = vmatmul.mubr.bf16.gmra.mxu0 %v3117
        %v3271 = vpop.f32.mrf.mxu0
        %v3272 = vadd.f32 0.0, %v3271
        %v3273 = vpop.f32.mrf.mxu0
        %v3274 = vpop.f32.mrf.mxu0
        %v3275 = vadd.f32 0.0, %v3274
        %v3276 = vpop.f32.mrf.mxu0
        %3277 = vmatprep.mubr.bf16.mxu0 0
        %3278 = vmatmul.mubr.bf16.gmra.mxu0 %v3120
        %v3279 = vpop.f32.mrf.mxu0
        %v3280 = vadd.f32 0.0, %v3279
        %v3281 = vpop.f32.mrf.mxu0
        %v3282 = vpop.f32.mrf.mxu0
        %v3283 = vadd.f32 0.0, %v3282
        %v3284 = vpop.f32.mrf.mxu0
        %3285 = vdwg.mxu0
        %v3286 = vadd.f32 %v2816, %v3160
        %v3287 = vadd.f32 %v2817, %v3163
        %v3288 = vadd.f32 %v2818, %v3168
        %v3289 = vadd.f32 %v2819, %v3171
        %v3290 = vadd.f32 %v2820, %v3176
        %v3291 = vadd.f32 %v2821, %v3179
        %v3292 = vadd.f32 %v2822, %v3184
        %v3293 = vadd.f32 %v2823, %v3187
        %v3294 = vadd.f32 %v2824, %v3192
        %v3295 = vadd.f32 %v2825, %v3195
        %v3296 = vadd.f32 %v2826, %v3200
        %v3297 = vadd.f32 %v2827, %v3203
        %v3298 = vadd.f32 %v2828, %v3208
        %v3299 = vadd.f32 %v2829, %v3211
        %v3300 = vadd.f32 %v2830, %v3216
        %v3301 = vadd.f32 %v2831, %v3219
        %v3302 = vadd.f32 %v2832, %v3224
        %v3303 = vadd.f32 %v2833, %v3227
        %v3304 = vadd.f32 %v2834, %v3232
        %v3305 = vadd.f32 %v2835, %v3235
        %v3306 = vadd.f32 %v2836, %v3240
        %v3307 = vadd.f32 %v2837, %v3243
        %v3308 = vadd.f32 %v2838, %v3248
        %v3309 = vadd.f32 %v2839, %v3251
        %v3310 = vadd.f32 %v2840, %v3256
        %v3311 = vadd.f32 %v2841, %v3259
        %v3312 = vadd.f32 %v2842, %v3264
        %v3313 = vadd.f32 %v2843, %v3267
        %v3314 = vadd.f32 %v2844, %v3272
        %v3315 = vadd.f32 %v2845, %v3275
        %v3316 = vadd.f32 %v2846, %v3280
        %v3317 = vadd.f32 %v2847, %v3283
        %s3318 = scalar_lea.vmem %s312, 24
        %v3319 = vld [vmem:[%s3318] sm:$0xf]
        %v3320 = vld [vmem:[%s3318 + $0x4] sm:$0xf]
        %v3321 = vld [vmem:[%s3318 + $0xc] sm:$0xf]
        %v3322 = vld [vmem:[%s3318 + $0x10] sm:$0xf]
        %v3323 = vld [vmem:[%s3318 + $0x18] sm:$0xf]
        %v3324 = vld [vmem:[%s3318 + $0x1c] sm:$0xf]
        %v3325 = vld [vmem:[%s3318 + $0x24] sm:$0xf]
        %v3326 = vld [vmem:[%s3318 + $0x28] sm:$0xf]
        %v3327 = vld [vmem:[%s3318 + $0x30] sm:$0xf]
        %v3328 = vld [vmem:[%s3318 + $0x34] sm:$0xf]
        %v3329 = vld [vmem:[%s3318 + $0x3c] sm:$0xf]
        %v3330 = vld [vmem:[%s3318 + $0x40] sm:$0xf]
        %v3331 = vld [vmem:[%s3318 + $0x48] sm:$0xf]
        %v3332 = vld [vmem:[%s3318 + $0x4c] sm:$0xf]
        %v3333 = vld [vmem:[%s3318 + $0x54] sm:$0xf]
        %v3334 = vld [vmem:[%s3318 + $0x58] sm:$0xf]
        %v3335 = vld [vmem:[%s3318 + $0x60] sm:$0xf]
        %v3336 = vld [vmem:[%s3318 + $0x64] sm:$0xf]
        %v3337 = vld [vmem:[%s3318 + $0x6c] sm:$0xf]
        %v3338 = vld [vmem:[%s3318 + $0x70] sm:$0xf]
        %v3339 = vld [vmem:[%s3318 + $0x78] sm:$0xf]
        %v3340 = vld [vmem:[%s3318 + $0x7c] sm:$0xf]
        %v3341 = vld [vmem:[%s3318 + $0x84] sm:$0xf]
        %v3342 = vld [vmem:[%s3318 + $0x88] sm:$0xf]
        %v3343 = vld [vmem:[%s3318 + $0x90] sm:$0xf]
        %v3344 = vld [vmem:[%s3318 + $0x94] sm:$0xf]
        %v3345 = vld [vmem:[%s3318 + $0x9c] sm:$0xf]
        %v3346 = vld [vmem:[%s3318 + $0xa0] sm:$0xf]
        %v3347 = vld [vmem:[%s3318 + $0xa8] sm:$0xf]
        %v3348 = vld [vmem:[%s3318 + $0xac] sm:$0xf]
        %v3349 = vld [vmem:[%s3318 + $0xb4] sm:$0xf]
        %v3350 = vld [vmem:[%s3318 + $0xb8] sm:$0xf]
        %s3351 = scalar_lea.vmem %s1, 24
        %v3352 = vld [vmem:[%s3351] sm:$0xf]
        %v3385 = vunpack.c.l.b16 %v3319
        %v3386 = vunpack.c.l.b16 %v3320
        %v3387 = vunpack.c.l.b16 %v3321
        %v3388 = vunpack.c.l.b16 %v3322
        %v3389 = vunpack.c.l.b16 %v3323
        %v3390 = vunpack.c.l.b16 %v3324
        %v3391 = vunpack.c.l.b16 %v3325
        %v3392 = vunpack.c.l.b16 %v3326
        %v3393 = vunpack.c.l.b16 %v3327
        %v3394 = vunpack.c.l.b16 %v3328
        %v3395 = vunpack.c.l.b16 %v3329
        %v3396 = vunpack.c.l.b16 %v3330
        %v3397 = vunpack.c.l.b16 %v3331
        %v3398 = vunpack.c.l.b16 %v3332
        %v3399 = vunpack.c.l.b16 %v3333
        %v3400 = vunpack.c.l.b16 %v3334
        %v3401 = vunpack.c.l.b16 %v3335
        %v3402 = vunpack.c.l.b16 %v3336
        %v3403 = vunpack.c.l.b16 %v3337
        %v3404 = vunpack.c.l.b16 %v3338
        %v3405 = vunpack.c.l.b16 %v3339
        %v3406 = vunpack.c.l.b16 %v3340
        %v3407 = vunpack.c.l.b16 %v3341
        %v3408 = vunpack.c.l.b16 %v3342
        %v3409 = vunpack.c.l.b16 %v3343
        %v3410 = vunpack.c.l.b16 %v3344
        %v3411 = vunpack.c.l.b16 %v3345
        %v3412 = vunpack.c.l.b16 %v3346
        %v3413 = vunpack.c.l.b16 %v3347
        %v3414 = vunpack.c.l.b16 %v3348
        %v3415 = vunpack.c.l.b16 %v3349
        %v3416 = vunpack.c.l.b16 %v3350
        %v3417 = vpack.c.b16 %v3386, %v3385
        %v3418 = vpack.c.b16 %v3388, %v3387
        %v3419 = vpack.c.b16 %v3390, %v3389
        %v3420 = vpack.c.b16 %v3392, %v3391
        %v3421 = vpack.c.b16 %v3394, %v3393
        %v3422 = vpack.c.b16 %v3396, %v3395
        %v3423 = vpack.c.b16 %v3398, %v3397
        %v3424 = vpack.c.b16 %v3400, %v3399
        %v3425 = vpack.c.b16 %v3402, %v3401
        %v3426 = vpack.c.b16 %v3404, %v3403
        %v3427 = vpack.c.b16 %v3406, %v3405
        %v3428 = vpack.c.b16 %v3408, %v3407
        %v3429 = vpack.c.b16 %v3410, %v3409
        %v3430 = vpack.c.b16 %v3412, %v3411
        %v3431 = vpack.c.b16 %v3414, %v3413
        %v3432 = vpack.c.b16 %v3416, %v3415
        %v3434 = vsel %vm800, %v3417, 0
        %v3437 = vsel %vm800, %v3418, 0
        %v3440 = vsel %vm800, %v3419, 0
        %v3443 = vsel %vm800, %v3420, 0
        %v3446 = vsel %vm800, %v3421, 0
        %v3449 = vsel %vm800, %v3422, 0
        %v3452 = vsel %vm800, %v3423, 0
        %v3455 = vsel %vm800, %v3424, 0
        %v3458 = vsel %vm800, %v3425, 0
        %v3461 = vsel %vm800, %v3426, 0
        %v3464 = vsel %vm800, %v3427, 0
        %v3467 = vsel %vm800, %v3428, 0
        %v3470 = vsel %vm800, %v3429, 0
        %v3473 = vsel %vm800, %v3430, 0
        %v3476 = vsel %vm800, %v3431, 0
        %v3479 = vsel %vm800, %v3432, 0
        %v3482 = vsel %vm849, %v3352, 0
        %3484 = vmatprep.subr.bf16.mxu0 0
        %3485 = vmatpush1.bf16.msra.mxu0 0
        %3486 = vmatprep.subr.bf16.mxu0 0
        %3487 = vmatpush1.bf16.msra.mxu0 0
        %3488 = vmatprep.subr.bf16.mxu0 0
        %3489 = vmatpush1.bf16.msra.mxu0 0
        %3490 = vmatprep.subr.bf16.mxu0 0
        %3491 = vmatpush1.bf16.msra.mxu0 0
        %3492 = vmatprep.subr.bf16.mxu0 0
        %3493 = vmatpush1.bf16.msra.mxu0 0
        %3494 = vmatprep.subr.bf16.mxu0 0
        %3495 = vmatpush1.bf16.msra.mxu0 0
        %3496 = vmatprep.subr.bf16.mxu0 0
        %3497 = vmatpush1.bf16.msra.mxu0 0
        %3498 = vmatprep.subr.bf16.mxu0 0
        %3499 = vmatpush1.bf16.msra.mxu0 %v3482
        %3500 = vmatprep.subr.bf16.mxu0 0
        %3501 = vmatpush2.bf16.msra.mxu0 0
        %3502 = vmatprep.subr.bf16.mxu0 0
        %3503 = vmatpush2.bf16.msra.mxu0 0
        %3504 = vmatprep.subr.bf16.mxu0 0
        %3505 = vmatpush2.bf16.msra.mxu0 0
        %3506 = vmatprep.subr.bf16.mxu0 0
        %3507 = vmatpush2.bf16.msra.mxu0 0
        %3508 = vmatprep.subr.bf16.mxu0 0
        %3509 = vmatpush2.bf16.msra.mxu0 0
        %3510 = vmatprep.subr.bf16.mxu0 0
        %3511 = vmatpush2.bf16.msra.mxu0 0
        %3512 = vmatprep.subr.bf16.mxu0 0
        %3513 = vmatpush2.bf16.msra.mxu0 0
        %3514 = vmatprep.subr.bf16.mxu0 0
        %3515 = vmatpush2.bf16.msra.mxu0 0
        %3516 = vmatprep.mubr.bf16.mxu0 0
        %3517 = vmatmul.mubr.bf16.gmra.mxu0 %v3434
        %v3518 = vpop.f32.mrf.mxu0
        %v3519 = vadd.f32 0.0, %v3518
        %v3520 = vpop.f32.mrf.mxu0
        %v3521 = vpop.f32.mrf.mxu0
        %v3522 = vadd.f32 0.0, %v3521
        %v3523 = vpop.f32.mrf.mxu0
        %3524 = vmatprep.mubr.bf16.mxu0 0
        %3525 = vmatmul.mubr.bf16.gmra.mxu0 %v3437
        %v3526 = vpop.f32.mrf.mxu0
        %v3527 = vadd.f32 0.0, %v3526
        %v3528 = vpop.f32.mrf.mxu0
        %v3529 = vpop.f32.mrf.mxu0
        %v3530 = vadd.f32 0.0, %v3529
        %v3531 = vpop.f32.mrf.mxu0
        %3532 = vmatprep.mubr.bf16.mxu0 0
        %3533 = vmatmul.mubr.bf16.gmra.mxu0 %v3440
        %v3534 = vpop.f32.mrf.mxu0
        %v3535 = vadd.f32 0.0, %v3534
        %v3536 = vpop.f32.mrf.mxu0
        %v3537 = vpop.f32.mrf.mxu0
        %v3538 = vadd.f32 0.0, %v3537
        %v3539 = vpop.f32.mrf.mxu0
        %3540 = vmatprep.mubr.bf16.mxu0 0
        %3541 = vmatmul.mubr.bf16.gmra.mxu0 %v3443
        %v3542 = vpop.f32.mrf.mxu0
        %v3543 = vadd.f32 0.0, %v3542
        %v3544 = vpop.f32.mrf.mxu0
        %v3545 = vpop.f32.mrf.mxu0
        %v3546 = vadd.f32 0.0, %v3545
        %v3547 = vpop.f32.mrf.mxu0
        %3548 = vmatprep.mubr.bf16.mxu0 0
        %3549 = vmatmul.mubr.bf16.gmra.mxu0 %v3446
        %v3550 = vpop.f32.mrf.mxu0
        %v3551 = vadd.f32 0.0, %v3550
        %v3552 = vpop.f32.mrf.mxu0
        %v3553 = vpop.f32.mrf.mxu0
        %v3554 = vadd.f32 0.0, %v3553
        %v3555 = vpop.f32.mrf.mxu0
        %3556 = vmatprep.mubr.bf16.mxu0 0
        %3557 = vmatmul.mubr.bf16.gmra.mxu0 %v3449
        %v3558 = vpop.f32.mrf.mxu0
        %v3559 = vadd.f32 0.0, %v3558
        %v3560 = vpop.f32.mrf.mxu0
        %v3561 = vpop.f32.mrf.mxu0
        %v3562 = vadd.f32 0.0, %v3561
        %v3563 = vpop.f32.mrf.mxu0
        %3564 = vmatprep.mubr.bf16.mxu0 0
        %3565 = vmatmul.mubr.bf16.gmra.mxu0 %v3452
        %v3566 = vpop.f32.mrf.mxu0
        %v3567 = vadd.f32 0.0, %v3566
        %v3568 = vpop.f32.mrf.mxu0
        %v3569 = vpop.f32.mrf.mxu0
        %v3570 = vadd.f32 0.0, %v3569
        %v3571 = vpop.f32.mrf.mxu0
        %3572 = vmatprep.mubr.bf16.mxu0 0
        %3573 = vmatmul.mubr.bf16.gmra.mxu0 %v3455
        %v3574 = vpop.f32.mrf.mxu0
        %v3575 = vadd.f32 0.0, %v3574
        %v3576 = vpop.f32.mrf.mxu0
        %v3577 = vpop.f32.mrf.mxu0
        %v3578 = vadd.f32 0.0, %v3577
        %v3579 = vpop.f32.mrf.mxu0
        %3580 = vmatprep.mubr.bf16.mxu0 0
        %3581 = vmatmul.mubr.bf16.gmra.mxu0 %v3458
        %v3582 = vpop.f32.mrf.mxu0
        %v3583 = vadd.f32 0.0, %v3582
        %v3584 = vpop.f32.mrf.mxu0
        %v3585 = vpop.f32.mrf.mxu0
        %v3586 = vadd.f32 0.0, %v3585
        %v3587 = vpop.f32.mrf.mxu0
        %3588 = vmatprep.mubr.bf16.mxu0 0
        %3589 = vmatmul.mubr.bf16.gmra.mxu0 %v3461
        %v3590 = vpop.f32.mrf.mxu0
        %v3591 = vadd.f32 0.0, %v3590
        %v3592 = vpop.f32.mrf.mxu0
        %v3593 = vpop.f32.mrf.mxu0
        %v3594 = vadd.f32 0.0, %v3593
        %v3595 = vpop.f32.mrf.mxu0
        %3596 = vmatprep.mubr.bf16.mxu0 0
        %3597 = vmatmul.mubr.bf16.gmra.mxu0 %v3464
        %v3598 = vpop.f32.mrf.mxu0
        %v3599 = vadd.f32 0.0, %v3598
        %v3600 = vpop.f32.mrf.mxu0
        %v3601 = vpop.f32.mrf.mxu0
        %v3602 = vadd.f32 0.0, %v3601
        %v3603 = vpop.f32.mrf.mxu0
        %3604 = vmatprep.mubr.bf16.mxu0 0
        %3605 = vmatmul.mubr.bf16.gmra.mxu0 %v3467
        %v3606 = vpop.f32.mrf.mxu0
        %v3607 = vadd.f32 0.0, %v3606
        %v3608 = vpop.f32.mrf.mxu0
        %v3609 = vpop.f32.mrf.mxu0
        %v3610 = vadd.f32 0.0, %v3609
        %v3611 = vpop.f32.mrf.mxu0
        %3612 = vmatprep.mubr.bf16.mxu0 0
        %3613 = vmatmul.mubr.bf16.gmra.mxu0 %v3470
        %v3614 = vpop.f32.mrf.mxu0
        %v3615 = vadd.f32 0.0, %v3614
        %v3616 = vpop.f32.mrf.mxu0
        %v3617 = vpop.f32.mrf.mxu0
        %v3618 = vadd.f32 0.0, %v3617
        %v3619 = vpop.f32.mrf.mxu0
        %3620 = vmatprep.mubr.bf16.mxu0 0
        %3621 = vmatmul.mubr.bf16.gmra.mxu0 %v3473
        %v3622 = vpop.f32.mrf.mxu0
        %v3623 = vadd.f32 0.0, %v3622
        %v3624 = vpop.f32.mrf.mxu0
        %v3625 = vpop.f32.mrf.mxu0
        %v3626 = vadd.f32 0.0, %v3625
        %v3627 = vpop.f32.mrf.mxu0
        %3628 = vmatprep.mubr.bf16.mxu0 0
        %3629 = vmatmul.mubr.bf16.gmra.mxu0 %v3476
        %v3630 = vpop.f32.mrf.mxu0
        %v3631 = vadd.f32 0.0, %v3630
        %v3632 = vpop.f32.mrf.mxu0
        %v3633 = vpop.f32.mrf.mxu0
        %v3634 = vadd.f32 0.0, %v3633
        %v3635 = vpop.f32.mrf.mxu0
        %3636 = vmatprep.mubr.bf16.mxu0 0
        %3637 = vmatmul.mubr.bf16.gmra.mxu0 %v3479
        %v3638 = vpop.f32.mrf.mxu0
        %v3639 = vadd.f32 0.0, %v3638
        %v3640 = vpop.f32.mrf.mxu0
        %v3641 = vpop.f32.mrf.mxu0
        %v3642 = vadd.f32 0.0, %v3641
        %v3643 = vpop.f32.mrf.mxu0
        %3644 = vdwg.mxu0
        %v3645 = vadd.f32 %v3286, %v3519
        %v3646 = vadd.f32 %v3287, %v3522
        %v3647 = vadd.f32 %v3288, %v3527
        %v3648 = vadd.f32 %v3289, %v3530
        %v3649 = vadd.f32 %v3290, %v3535
        %v3650 = vadd.f32 %v3291, %v3538
        %v3651 = vadd.f32 %v3292, %v3543
        %v3652 = vadd.f32 %v3293, %v3546
        %v3653 = vadd.f32 %v3294, %v3551
        %v3654 = vadd.f32 %v3295, %v3554
        %v3655 = vadd.f32 %v3296, %v3559
        %v3656 = vadd.f32 %v3297, %v3562
        %v3657 = vadd.f32 %v3298, %v3567
        %v3658 = vadd.f32 %v3299, %v3570
        %v3659 = vadd.f32 %v3300, %v3575
        %v3660 = vadd.f32 %v3301, %v3578
        %v3661 = vadd.f32 %v3302, %v3583
        %v3662 = vadd.f32 %v3303, %v3586
        %v3663 = vadd.f32 %v3304, %v3591
        %v3664 = vadd.f32 %v3305, %v3594
        %v3665 = vadd.f32 %v3306, %v3599
        %v3666 = vadd.f32 %v3307, %v3602
        %v3667 = vadd.f32 %v3308, %v3607
        %v3668 = vadd.f32 %v3309, %v3610
        %v3669 = vadd.f32 %v3310, %v3615
        %v3670 = vadd.f32 %v3311, %v3618
        %v3671 = vadd.f32 %v3312, %v3623
        %v3672 = vadd.f32 %v3313, %v3626
        %v3673 = vadd.f32 %v3314, %v3631
        %v3674 = vadd.f32 %v3315, %v3634
        %v3675 = vadd.f32 %v3316, %v3639
        %v3676 = vadd.f32 %v3317, %v3642
        %v3677 = vld [vmem:[%s3318] sm:$0xf]
        %v3678 = vld [vmem:[%s3318 + $0x4] sm:$0xf]
        %v3679 = vld [vmem:[%s3318 + $0x8] sm:$0x1]
        %v3680 = vld [vmem:[%s3318 + $0xc] sm:$0xf]
        %v3681 = vld [vmem:[%s3318 + $0x10] sm:$0xf]
        %v3682 = vld [vmem:[%s3318 + $0x14] sm:$0x1]
        %v3683 = vld [vmem:[%s3318 + $0x18] sm:$0xf]
        %v3684 = vld [vmem:[%s3318 + $0x1c] sm:$0xf]
        %v3685 = vld [vmem:[%s3318 + $0x20] sm:$0x1]
        %v3686 = vld [vmem:[%s3318 + $0x24] sm:$0xf]
        %v3687 = vld [vmem:[%s3318 + $0x28] sm:$0xf]
        %v3688 = vld [vmem:[%s3318 + $0x2c] sm:$0x1]
        %v3689 = vld [vmem:[%s3318 + $0x30] sm:$0xf]
        %v3690 = vld [vmem:[%s3318 + $0x34] sm:$0xf]
        %v3691 = vld [vmem:[%s3318 + $0x38] sm:$0x1]
        %v3692 = vld [vmem:[%s3318 + $0x3c] sm:$0xf]
        %v3693 = vld [vmem:[%s3318 + $0x40] sm:$0xf]
        %v3694 = vld [vmem:[%s3318 + $0x44] sm:$0x1]
        %v3695 = vld [vmem:[%s3318 + $0x48] sm:$0xf]
        %v3696 = vld [vmem:[%s3318 + $0x4c] sm:$0xf]
        %v3697 = vld [vmem:[%s3318 + $0x50] sm:$0x1]
        %v3698 = vld [vmem:[%s3318 + $0x54] sm:$0xf]
        %v3699 = vld [vmem:[%s3318 + $0x58] sm:$0xf]
        %v3700 = vld [vmem:[%s3318 + $0x5c] sm:$0x1]
        %v3701 = vld [vmem:[%s3318 + $0x60] sm:$0xf]
        %v3702 = vld [vmem:[%s3318 + $0x64] sm:$0xf]
        %v3703 = vld [vmem:[%s3318 + $0x68] sm:$0x1]
        %v3704 = vld [vmem:[%s3318 + $0x6c] sm:$0xf]
        %v3705 = vld [vmem:[%s3318 + $0x70] sm:$0xf]
        %v3706 = vld [vmem:[%s3318 + $0x74] sm:$0x1]
        %v3707 = vld [vmem:[%s3318 + $0x78] sm:$0xf]
        %v3708 = vld [vmem:[%s3318 + $0x7c] sm:$0xf]
        %v3709 = vld [vmem:[%s3318 + $0x80] sm:$0x1]
        %v3710 = vld [vmem:[%s3318 + $0x84] sm:$0xf]
        %v3711 = vld [vmem:[%s3318 + $0x88] sm:$0xf]
        %v3712 = vld [vmem:[%s3318 + $0x8c] sm:$0x1]
        %v3713 = vld [vmem:[%s3318 + $0x90] sm:$0xf]
        %v3714 = vld [vmem:[%s3318 + $0x94] sm:$0xf]
        %v3715 = vld [vmem:[%s3318 + $0x98] sm:$0x1]
        %v3716 = vld [vmem:[%s3318 + $0x9c] sm:$0xf]
        %v3717 = vld [vmem:[%s3318 + $0xa0] sm:$0xf]
        %v3718 = vld [vmem:[%s3318 + $0xa4] sm:$0x1]
        %v3719 = vld [vmem:[%s3318 + $0xa8] sm:$0xf]
        %v3720 = vld [vmem:[%s3318 + $0xac] sm:$0xf]
        %v3721 = vld [vmem:[%s3318 + $0xb0] sm:$0x1]
        %v3722 = vld [vmem:[%s3318 + $0xb4] sm:$0xf]
        %v3723 = vld [vmem:[%s3318 + $0xb8] sm:$0xf]
        %v3724 = vld [vmem:[%s3318 + $0xbc] sm:$0x1]
        %v3726 = vshrl.u32 %v3677, 16
        %v3728 = vrot.slane %v3726, 4
        %v3729 = vshll.u32 %v3677, 16
        %v3731 = vrot.slane %v3729, 5
        %v3732 = vor.u32 %v3728, %v3731
        %v3733 = vrot.slane %v3732, 4
        %v3735 = vshll.u32 %v3678, 16
        %v3737 = vrot.slane %v3735, 5
        %v3738 = vsel %vm365, %v3733, %v3737
        %v3739 = vshrl.u32 %v3678, 16
        %v3741 = vrot.slane %v3739, 4
        %v3742 = vor.u32 %v3741, %v3737
        %v3743 = vrot.slane %v3742, 4
        %v3745 = vshll.u32 %v3679, 16
        %v3747 = vrot.slane %v3745, 5
        %v3748 = vsel %vm365, %v3743, %v3747
        %v3750 = vshrl.u32 %v3680, 16
        %v3752 = vrot.slane %v3750, 4
        %v3753 = vshll.u32 %v3680, 16
        %v3755 = vrot.slane %v3753, 5
        %v3756 = vor.u32 %v3752, %v3755
        %v3757 = vrot.slane %v3756, 4
        %v3759 = vshll.u32 %v3681, 16
        %v3761 = vrot.slane %v3759, 5
        %v3762 = vsel %vm365, %v3757, %v3761
        %v3763 = vshrl.u32 %v3681, 16
        %v3765 = vrot.slane %v3763, 4
        %v3766 = vor.u32 %v3765, %v3761
        %v3767 = vrot.slane %v3766, 4
        %v3769 = vshll.u32 %v3682, 16
        %v3771 = vrot.slane %v3769, 5
        %v3772 = vsel %vm365, %v3767, %v3771
        %v3774 = vshrl.u32 %v3683, 16
        %v3776 = vrot.slane %v3774, 4
        %v3777 = vshll.u32 %v3683, 16
        %v3779 = vrot.slane %v3777, 5
        %v3780 = vor.u32 %v3776, %v3779
        %v3781 = vrot.slane %v3780, 4
        %v3783 = vshll.u32 %v3684, 16
        %v3785 = vrot.slane %v3783, 5
        %v3786 = vsel %vm365, %v3781, %v3785
        %v3787 = vshrl.u32 %v3684, 16
        %v3789 = vrot.slane %v3787, 4
        %v3790 = vor.u32 %v3789, %v3785
        %v3791 = vrot.slane %v3790, 4
        %v3793 = vshll.u32 %v3685, 16
        %v3795 = vrot.slane %v3793, 5
        %v3796 = vsel %vm365, %v3791, %v3795
        %v3798 = vshrl.u32 %v3686, 16
        %v3800 = vrot.slane %v3798, 4
        %v3801 = vshll.u32 %v3686, 16
        %v3803 = vrot.slane %v3801, 5
        %v3804 = vor.u32 %v3800, %v3803
        %v3805 = vrot.slane %v3804, 4
        %v3807 = vshll.u32 %v3687, 16
        %v3809 = vrot.slane %v3807, 5
        %v3810 = vsel %vm365, %v3805, %v3809
        %v3811 = vshrl.u32 %v3687, 16
        %v3813 = vrot.slane %v3811, 4
        %v3814 = vor.u32 %v3813, %v3809
        %v3815 = vrot.slane %v3814, 4
        %v3817 = vshll.u32 %v3688, 16
        %v3819 = vrot.slane %v3817, 5
        %v3820 = vsel %vm365, %v3815, %v3819
        %v3822 = vshrl.u32 %v3689, 16
        %v3824 = vrot.slane %v3822, 4
        %v3825 = vshll.u32 %v3689, 16
        %v3827 = vrot.slane %v3825, 5
        %v3828 = vor.u32 %v3824, %v3827
        %v3829 = vrot.slane %v3828, 4
        %v3831 = vshll.u32 %v3690, 16
        %v3833 = vrot.slane %v3831, 5
        %v3834 = vsel %vm365, %v3829, %v3833
        %v3835 = vshrl.u32 %v3690, 16
        %v3837 = vrot.slane %v3835, 4
        %v3838 = vor.u32 %v3837, %v3833
        %v3839 = vrot.slane %v3838, 4
        %v3841 = vshll.u32 %v3691, 16
        %v3843 = vrot.slane %v3841, 5
        %v3844 = vsel %vm365, %v3839, %v3843
        %v3846 = vshrl.u32 %v3692, 16
        %v3848 = vrot.slane %v3846, 4
        %v3849 = vshll.u32 %v3692, 16
        %v3851 = vrot.slane %v3849, 5
        %v3852 = vor.u32 %v3848, %v3851
        %v3853 = vrot.slane %v3852, 4
        %v3855 = vshll.u32 %v3693, 16
        %v3857 = vrot.slane %v3855, 5
        %v3858 = vsel %vm365, %v3853, %v3857
        %v3859 = vshrl.u32 %v3693, 16
        %v3861 = vrot.slane %v3859, 4
        %v3862 = vor.u32 %v3861, %v3857
        %v3863 = vrot.slane %v3862, 4
        %v3865 = vshll.u32 %v3694, 16
        %v3867 = vrot.slane %v3865, 5
        %v3868 = vsel %vm365, %v3863, %v3867
        %v3870 = vshrl.u32 %v3695, 16
        %v3872 = vrot.slane %v3870, 4
        %v3873 = vshll.u32 %v3695, 16
        %v3875 = vrot.slane %v3873, 5
        %v3876 = vor.u32 %v3872, %v3875
        %v3877 = vrot.slane %v3876, 4
        %v3879 = vshll.u32 %v3696, 16
        %v3881 = vrot.slane %v3879, 5
        %v3882 = vsel %vm365, %v3877, %v3881
        %v3883 = vshrl.u32 %v3696, 16
        %v3885 = vrot.slane %v3883, 4
        %v3886 = vor.u32 %v3885, %v3881
        %v3887 = vrot.slane %v3886, 4
        %v3889 = vshll.u32 %v3697, 16
        %v3891 = vrot.slane %v3889, 5
        %v3892 = vsel %vm365, %v3887, %v3891
        %v3894 = vshrl.u32 %v3698, 16
        %v3896 = vrot.slane %v3894, 4
        %v3897 = vshll.u32 %v3698, 16
        %v3899 = vrot.slane %v3897, 5
        %v3900 = vor.u32 %v3896, %v3899
        %v3901 = vrot.slane %v3900, 4
        %v3903 = vshll.u32 %v3699, 16
        %v3905 = vrot.slane %v3903, 5
        %v3906 = vsel %vm365, %v3901, %v3905
        %v3907 = vshrl.u32 %v3699, 16
        %v3909 = vrot.slane %v3907, 4
        %v3910 = vor.u32 %v3909, %v3905
        %v3911 = vrot.slane %v3910, 4
        %v3913 = vshll.u32 %v3700, 16
        %v3915 = vrot.slane %v3913, 5
        %v3916 = vsel %vm365, %v3911, %v3915
        %v3918 = vshrl.u32 %v3701, 16
        %v3920 = vrot.slane %v3918, 4
        %v3921 = vshll.u32 %v3701, 16
        %v3923 = vrot.slane %v3921, 5
        %v3924 = vor.u32 %v3920, %v3923
        %v3925 = vrot.slane %v3924, 4
        %v3927 = vshll.u32 %v3702, 16
        %v3929 = vrot.slane %v3927, 5
        %v3930 = vsel %vm365, %v3925, %v3929
        %v3931 = vshrl.u32 %v3702, 16
        %v3933 = vrot.slane %v3931, 4
        %v3934 = vor.u32 %v3933, %v3929
        %v3935 = vrot.slane %v3934, 4
        %v3937 = vshll.u32 %v3703, 16
        %v3939 = vrot.slane %v3937, 5
        %v3940 = vsel %vm365, %v3935, %v3939
        %v3942 = vshrl.u32 %v3704, 16
        %v3944 = vrot.slane %v3942, 4
        %v3945 = vshll.u32 %v3704, 16
        %v3947 = vrot.slane %v3945, 5
        %v3948 = vor.u32 %v3944, %v3947
        %v3949 = vrot.slane %v3948, 4
        %v3951 = vshll.u32 %v3705, 16
        %v3953 = vrot.slane %v3951, 5
        %v3954 = vsel %vm365, %v3949, %v3953
        %v3955 = vshrl.u32 %v3705, 16
        %v3957 = vrot.slane %v3955, 4
        %v3958 = vor.u32 %v3957, %v3953
        %v3959 = vrot.slane %v3958, 4
        %v3961 = vshll.u32 %v3706, 16
        %v3963 = vrot.slane %v3961, 5
        %v3964 = vsel %vm365, %v3959, %v3963
        %v3966 = vshrl.u32 %v3707, 16
        %v3968 = vrot.slane %v3966, 4
        %v3969 = vshll.u32 %v3707, 16
        %v3971 = vrot.slane %v3969, 5
        %v3972 = vor.u32 %v3968, %v3971
        %v3973 = vrot.slane %v3972, 4
        %v3975 = vshll.u32 %v3708, 16
        %v3977 = vrot.slane %v3975, 5
        %v3978 = vsel %vm365, %v3973, %v3977
        %v3979 = vshrl.u32 %v3708, 16
        %v3981 = vrot.slane %v3979, 4
        %v3982 = vor.u32 %v3981, %v3977
        %v3983 = vrot.slane %v3982, 4
        %v3985 = vshll.u32 %v3709, 16
        %v3987 = vrot.slane %v3985, 5
        %v3988 = vsel %vm365, %v3983, %v3987
        %v3990 = vshrl.u32 %v3710, 16
        %v3992 = vrot.slane %v3990, 4
        %v3993 = vshll.u32 %v3710, 16
        %v3995 = vrot.slane %v3993, 5
        %v3996 = vor.u32 %v3992, %v3995
        %v3997 = vrot.slane %v3996, 4
        %v3999 = vshll.u32 %v3711, 16
        %v4001 = vrot.slane %v3999, 5
        %v4002 = vsel %vm365, %v3997, %v4001
        %v4003 = vshrl.u32 %v3711, 16
        %v4005 = vrot.slane %v4003, 4
        %v4006 = vor.u32 %v4005, %v4001
        %v4007 = vrot.slane %v4006, 4
        %v4009 = vshll.u32 %v3712, 16
        %v4011 = vrot.slane %v4009, 5
        %v4012 = vsel %vm365, %v4007, %v4011
        %v4014 = vshrl.u32 %v3713, 16
        %v4016 = vrot.slane %v4014, 4
        %v4017 = vshll.u32 %v3713, 16
        %v4019 = vrot.slane %v4017, 5
        %v4020 = vor.u32 %v4016, %v4019
        %v4021 = vrot.slane %v4020, 4
        %v4023 = vshll.u32 %v3714, 16
        %v4025 = vrot.slane %v4023, 5
        %v4026 = vsel %vm365, %v4021, %v4025
        %v4027 = vshrl.u32 %v3714, 16
        %v4029 = vrot.slane %v4027, 4
        %v4030 = vor.u32 %v4029, %v4025
        %v4031 = vrot.slane %v4030, 4
        %v4033 = vshll.u32 %v3715, 16
        %v4035 = vrot.slane %v4033, 5
        %v4036 = vsel %vm365, %v4031, %v4035
        %v4038 = vshrl.u32 %v3716, 16
        %v4040 = vrot.slane %v4038, 4
        %v4041 = vshll.u32 %v3716, 16
        %v4043 = vrot.slane %v4041, 5
        %v4044 = vor.u32 %v4040, %v4043
        %v4045 = vrot.slane %v4044, 4
        %v4047 = vshll.u32 %v3717, 16
        %v4049 = vrot.slane %v4047, 5
        %v4050 = vsel %vm365, %v4045, %v4049
        %v4051 = vshrl.u32 %v3717, 16
        %v4053 = vrot.slane %v4051, 4
        %v4054 = vor.u32 %v4053, %v4049
        %v4055 = vrot.slane %v4054, 4
        %v4057 = vshll.u32 %v3718, 16
        %v4059 = vrot.slane %v4057, 5
        %v4060 = vsel %vm365, %v4055, %v4059
        %v4062 = vshrl.u32 %v3719, 16
        %v4064 = vrot.slane %v4062, 4
        %v4065 = vshll.u32 %v3719, 16
        %v4067 = vrot.slane %v4065, 5
        %v4068 = vor.u32 %v4064, %v4067
        %v4069 = vrot.slane %v4068, 4
        %v4071 = vshll.u32 %v3720, 16
        %v4073 = vrot.slane %v4071, 5
        %v4074 = vsel %vm365, %v4069, %v4073
        %v4075 = vshrl.u32 %v3720, 16
        %v4077 = vrot.slane %v4075, 4
        %v4078 = vor.u32 %v4077, %v4073
        %v4079 = vrot.slane %v4078, 4
        %v4081 = vshll.u32 %v3721, 16
        %v4083 = vrot.slane %v4081, 5
        %v4084 = vsel %vm365, %v4079, %v4083
        %v4086 = vshrl.u32 %v3722, 16
        %v4088 = vrot.slane %v4086, 4
        %v4089 = vshll.u32 %v3722, 16
        %v4091 = vrot.slane %v4089, 5
        %v4092 = vor.u32 %v4088, %v4091
        %v4093 = vrot.slane %v4092, 4
        %v4095 = vshll.u32 %v3723, 16
        %v4097 = vrot.slane %v4095, 5
        %v4098 = vsel %vm365, %v4093, %v4097
        %v4099 = vshrl.u32 %v3723, 16
        %v4101 = vrot.slane %v4099, 4
        %v4102 = vor.u32 %v4101, %v4097
        %v4103 = vrot.slane %v4102, 4
        %v4105 = vshll.u32 %v3724, 16
        %v4107 = vrot.slane %v4105, 5
        %v4108 = vsel %vm365, %v4103, %v4107
        %s4109 = scalar_lea.vmem %s1, 28
        %v4110 = vld [vmem:[%s4109] sm:$0xf]
        %v4111 = vunpack.c.l.b16 %v3738
        %v4112 = vunpack.c.l.b16 %v3748
        %v4113 = vunpack.c.l.b16 %v3762
        %v4114 = vunpack.c.l.b16 %v3772
        %v4115 = vunpack.c.l.b16 %v3786
        %v4116 = vunpack.c.l.b16 %v3796
        %v4117 = vunpack.c.l.b16 %v3810
        %v4118 = vunpack.c.l.b16 %v3820
        %v4119 = vunpack.c.l.b16 %v3834
        %v4120 = vunpack.c.l.b16 %v3844
        %v4121 = vunpack.c.l.b16 %v3858
        %v4122 = vunpack.c.l.b16 %v3868
        %v4123 = vunpack.c.l.b16 %v3882
        %v4124 = vunpack.c.l.b16 %v3892
        %v4125 = vunpack.c.l.b16 %v3906
        %v4126 = vunpack.c.l.b16 %v3916
        %v4127 = vunpack.c.l.b16 %v3930
        %v4128 = vunpack.c.l.b16 %v3940
        %v4129 = vunpack.c.l.b16 %v3954
        %v4130 = vunpack.c.l.b16 %v3964
        %v4131 = vunpack.c.l.b16 %v3978
        %v4132 = vunpack.c.l.b16 %v3988
        %v4133 = vunpack.c.l.b16 %v4002
        %v4134 = vunpack.c.l.b16 %v4012
        %v4135 = vunpack.c.l.b16 %v4026
        %v4136 = vunpack.c.l.b16 %v4036
        %v4137 = vunpack.c.l.b16 %v4050
        %v4138 = vunpack.c.l.b16 %v4060
        %v4139 = vunpack.c.l.b16 %v4074
        %v4140 = vunpack.c.l.b16 %v4084
        %v4141 = vunpack.c.l.b16 %v4098
        %v4142 = vunpack.c.l.b16 %v4108
        %v4143 = vpack.c.b16 %v4112, %v4111
        %v4144 = vpack.c.b16 %v4114, %v4113
        %v4145 = vpack.c.b16 %v4116, %v4115
        %v4146 = vpack.c.b16 %v4118, %v4117
        %v4147 = vpack.c.b16 %v4120, %v4119
        %v4148 = vpack.c.b16 %v4122, %v4121
        %v4149 = vpack.c.b16 %v4124, %v4123
        %v4150 = vpack.c.b16 %v4126, %v4125
        %v4151 = vpack.c.b16 %v4128, %v4127
        %v4152 = vpack.c.b16 %v4130, %v4129
        %v4153 = vpack.c.b16 %v4132, %v4131
        %v4154 = vpack.c.b16 %v4134, %v4133
        %v4155 = vpack.c.b16 %v4136, %v4135
        %v4156 = vpack.c.b16 %v4138, %v4137
        %v4157 = vpack.c.b16 %v4140, %v4139
        %v4158 = vpack.c.b16 %v4142, %v4141
        %v4160 = vsel %vm800, %v4143, 0
        %v4163 = vsel %vm800, %v4144, 0
        %v4166 = vsel %vm800, %v4145, 0
        %v4169 = vsel %vm800, %v4146, 0
        %v4172 = vsel %vm800, %v4147, 0
        %v4175 = vsel %vm800, %v4148, 0
        %v4178 = vsel %vm800, %v4149, 0
        %v4181 = vsel %vm800, %v4150, 0
        %v4184 = vsel %vm800, %v4151, 0
        %v4187 = vsel %vm800, %v4152, 0
        %v4190 = vsel %vm800, %v4153, 0
        %v4193 = vsel %vm800, %v4154, 0
        %v4196 = vsel %vm800, %v4155, 0
        %v4199 = vsel %vm800, %v4156, 0
        %v4202 = vsel %vm800, %v4157, 0
        %v4205 = vsel %vm800, %v4158, 0
        %v4208 = vsel %vm849, %v4110, 0
        %4210 = vmatprep.subr.bf16.mxu0 0
        %4211 = vmatpush1.bf16.msra.mxu0 0
        %4212 = vmatprep.subr.bf16.mxu0 0
        %4213 = vmatpush1.bf16.msra.mxu0 0
        %4214 = vmatprep.subr.bf16.mxu0 0
        %4215 = vmatpush1.bf16.msra.mxu0 0
        %4216 = vmatprep.subr.bf16.mxu0 0
        %4217 = vmatpush1.bf16.msra.mxu0 0
        %4218 = vmatprep.subr.bf16.mxu0 0
        %4219 = vmatpush1.bf16.msra.mxu0 0
        %4220 = vmatprep.subr.bf16.mxu0 0
        %4221 = vmatpush1.bf16.msra.mxu0 0
        %4222 = vmatprep.subr.bf16.mxu0 0
        %4223 = vmatpush1.bf16.msra.mxu0 0
        %4224 = vmatprep.subr.bf16.mxu0 0
        %4225 = vmatpush1.bf16.msra.mxu0 %v4208
        %4226 = vmatprep.subr.bf16.mxu0 0
        %4227 = vmatpush2.bf16.msra.mxu0 0
        %4228 = vmatprep.subr.bf16.mxu0 0
        %4229 = vmatpush2.bf16.msra.mxu0 0
        %4230 = vmatprep.subr.bf16.mxu0 0
        %4231 = vmatpush2.bf16.msra.mxu0 0
        %4232 = vmatprep.subr.bf16.mxu0 0
        %4233 = vmatpush2.bf16.msra.mxu0 0
        %4234 = vmatprep.subr.bf16.mxu0 0
        %4235 = vmatpush2.bf16.msra.mxu0 0
        %4236 = vmatprep.subr.bf16.mxu0 0
        %4237 = vmatpush2.bf16.msra.mxu0 0
        %4238 = vmatprep.subr.bf16.mxu0 0
        %4239 = vmatpush2.bf16.msra.mxu0 0
        %4240 = vmatprep.subr.bf16.mxu0 0
        %4241 = vmatpush2.bf16.msra.mxu0 0
        %4242 = vmatprep.mubr.bf16.mxu0 0
        %4243 = vmatmul.mubr.bf16.gmra.mxu0 %v4160
        %v4244 = vpop.f32.mrf.mxu0
        %v4245 = vadd.f32 0.0, %v4244
        %v4246 = vpop.f32.mrf.mxu0
        %v4247 = vpop.f32.mrf.mxu0
        %v4248 = vadd.f32 0.0, %v4247
        %v4249 = vpop.f32.mrf.mxu0
        %4250 = vmatprep.mubr.bf16.mxu0 0
        %4251 = vmatmul.mubr.bf16.gmra.mxu0 %v4163
        %v4252 = vpop.f32.mrf.mxu0
        %v4253 = vadd.f32 0.0, %v4252
        %v4254 = vpop.f32.mrf.mxu0
        %v4255 = vpop.f32.mrf.mxu0
        %v4256 = vadd.f32 0.0, %v4255
        %v4257 = vpop.f32.mrf.mxu0
        %4258 = vmatprep.mubr.bf16.mxu0 0
        %4259 = vmatmul.mubr.bf16.gmra.mxu0 %v4166
        %v4260 = vpop.f32.mrf.mxu0
        %v4261 = vadd.f32 0.0, %v4260
        %v4262 = vpop.f32.mrf.mxu0
        %v4263 = vpop.f32.mrf.mxu0
        %v4264 = vadd.f32 0.0, %v4263
        %v4265 = vpop.f32.mrf.mxu0
        %4266 = vmatprep.mubr.bf16.mxu0 0
        %4267 = vmatmul.mubr.bf16.gmra.mxu0 %v4169
        %v4268 = vpop.f32.mrf.mxu0
        %v4269 = vadd.f32 0.0, %v4268
        %v4270 = vpop.f32.mrf.mxu0
        %v4271 = vpop.f32.mrf.mxu0
        %v4272 = vadd.f32 0.0, %v4271
        %v4273 = vpop.f32.mrf.mxu0
        %4274 = vmatprep.mubr.bf16.mxu0 0
        %4275 = vmatmul.mubr.bf16.gmra.mxu0 %v4172
        %v4276 = vpop.f32.mrf.mxu0
        %v4277 = vadd.f32 0.0, %v4276
        %v4278 = vpop.f32.mrf.mxu0
        %v4279 = vpop.f32.mrf.mxu0
        %v4280 = vadd.f32 0.0, %v4279
        %v4281 = vpop.f32.mrf.mxu0
        %4282 = vmatprep.mubr.bf16.mxu0 0
        %4283 = vmatmul.mubr.bf16.gmra.mxu0 %v4175
        %v4284 = vpop.f32.mrf.mxu0
        %v4285 = vadd.f32 0.0, %v4284
        %v4286 = vpop.f32.mrf.mxu0
        %v4287 = vpop.f32.mrf.mxu0
        %v4288 = vadd.f32 0.0, %v4287
        %v4289 = vpop.f32.mrf.mxu0
        %4290 = vmatprep.mubr.bf16.mxu0 0
        %4291 = vmatmul.mubr.bf16.gmra.mxu0 %v4178
        %v4292 = vpop.f32.mrf.mxu0
        %v4293 = vadd.f32 0.0, %v4292
        %v4294 = vpop.f32.mrf.mxu0
        %v4295 = vpop.f32.mrf.mxu0
        %v4296 = vadd.f32 0.0, %v4295
        %v4297 = vpop.f32.mrf.mxu0
        %4298 = vmatprep.mubr.bf16.mxu0 0
        %4299 = vmatmul.mubr.bf16.gmra.mxu0 %v4181
        %v4300 = vpop.f32.mrf.mxu0
        %v4301 = vadd.f32 0.0, %v4300
        %v4302 = vpop.f32.mrf.mxu0
        %v4303 = vpop.f32.mrf.mxu0
        %v4304 = vadd.f32 0.0, %v4303
        %v4305 = vpop.f32.mrf.mxu0
        %4306 = vmatprep.mubr.bf16.mxu0 0
        %4307 = vmatmul.mubr.bf16.gmra.mxu0 %v4184
        %v4308 = vpop.f32.mrf.mxu0
        %v4309 = vadd.f32 0.0, %v4308
        %v4310 = vpop.f32.mrf.mxu0
        %v4311 = vpop.f32.mrf.mxu0
        %v4312 = vadd.f32 0.0, %v4311
        %v4313 = vpop.f32.mrf.mxu0
        %4314 = vmatprep.mubr.bf16.mxu0 0
        %4315 = vmatmul.mubr.bf16.gmra.mxu0 %v4187
        %v4316 = vpop.f32.mrf.mxu0
        %v4317 = vadd.f32 0.0, %v4316
        %v4318 = vpop.f32.mrf.mxu0
        %v4319 = vpop.f32.mrf.mxu0
        %v4320 = vadd.f32 0.0, %v4319
        %v4321 = vpop.f32.mrf.mxu0
        %4322 = vmatprep.mubr.bf16.mxu0 0
        %4323 = vmatmul.mubr.bf16.gmra.mxu0 %v4190
        %v4324 = vpop.f32.mrf.mxu0
        %v4325 = vadd.f32 0.0, %v4324
        %v4326 = vpop.f32.mrf.mxu0
        %v4327 = vpop.f32.mrf.mxu0
        %v4328 = vadd.f32 0.0, %v4327
        %v4329 = vpop.f32.mrf.mxu0
        %4330 = vmatprep.mubr.bf16.mxu0 0
        %4331 = vmatmul.mubr.bf16.gmra.mxu0 %v4193
        %v4332 = vpop.f32.mrf.mxu0
        %v4333 = vadd.f32 0.0, %v4332
        %v4334 = vpop.f32.mrf.mxu0
        %v4335 = vpop.f32.mrf.mxu0
        %v4336 = vadd.f32 0.0, %v4335
        %v4337 = vpop.f32.mrf.mxu0
        %4338 = vmatprep.mubr.bf16.mxu0 0
        %4339 = vmatmul.mubr.bf16.gmra.mxu0 %v4196
        %v4340 = vpop.f32.mrf.mxu0
        %v4341 = vadd.f32 0.0, %v4340
        %v4342 = vpop.f32.mrf.mxu0
        %v4343 = vpop.f32.mrf.mxu0
        %v4344 = vadd.f32 0.0, %v4343
        %v4345 = vpop.f32.mrf.mxu0
        %4346 = vmatprep.mubr.bf16.mxu0 0
        %4347 = vmatmul.mubr.bf16.gmra.mxu0 %v4199
        %v4348 = vpop.f32.mrf.mxu0
        %v4349 = vadd.f32 0.0, %v4348
        %v4350 = vpop.f32.mrf.mxu0
        %v4351 = vpop.f32.mrf.mxu0
        %v4352 = vadd.f32 0.0, %v4351
        %v4353 = vpop.f32.mrf.mxu0
        %4354 = vmatprep.mubr.bf16.mxu0 0
        %4355 = vmatmul.mubr.bf16.gmra.mxu0 %v4202
        %v4356 = vpop.f32.mrf.mxu0
        %v4357 = vadd.f32 0.0, %v4356
        %v4358 = vpop.f32.mrf.mxu0
        %v4359 = vpop.f32.mrf.mxu0
        %v4360 = vadd.f32 0.0, %v4359
        %v4361 = vpop.f32.mrf.mxu0
        %4362 = vmatprep.mubr.bf16.mxu0 0
        %4363 = vmatmul.mubr.bf16.gmra.mxu0 %v4205
        %v4364 = vpop.f32.mrf.mxu0
        %v4365 = vadd.f32 0.0, %v4364
        %v4366 = vpop.f32.mrf.mxu0
        %v4367 = vpop.f32.mrf.mxu0
        %v4368 = vadd.f32 0.0, %v4367
        %v4369 = vpop.f32.mrf.mxu0
        %4370 = vdwg.mxu0
        %v4371 = vadd.f32 %v3645, %v4245
        %v4372 = vadd.f32 %v3646, %v4248
        %v4373 = vadd.f32 %v3647, %v4253
        %v4374 = vadd.f32 %v3648, %v4256
        %v4375 = vadd.f32 %v3649, %v4261
        %v4376 = vadd.f32 %v3650, %v4264
        %v4377 = vadd.f32 %v3651, %v4269
        %v4378 = vadd.f32 %v3652, %v4272
        %v4379 = vadd.f32 %v3653, %v4277
        %v4380 = vadd.f32 %v3654, %v4280
        %v4381 = vadd.f32 %v3655, %v4285
        %v4382 = vadd.f32 %v3656, %v4288
        %v4383 = vadd.f32 %v3657, %v4293
        %v4384 = vadd.f32 %v3658, %v4296
        %v4385 = vadd.f32 %v3659, %v4301
        %v4386 = vadd.f32 %v3660, %v4304
        %v4387 = vadd.f32 %v3661, %v4309
        %v4388 = vadd.f32 %v3662, %v4312
        %v4389 = vadd.f32 %v3663, %v4317
        %v4390 = vadd.f32 %v3664, %v4320
        %v4391 = vadd.f32 %v3665, %v4325
        %v4392 = vadd.f32 %v3666, %v4328
        %v4393 = vadd.f32 %v3667, %v4333
        %v4394 = vadd.f32 %v3668, %v4336
        %v4395 = vadd.f32 %v3669, %v4341
        %v4396 = vadd.f32 %v3670, %v4344
        %v4397 = vadd.f32 %v3671, %v4349
        %v4398 = vadd.f32 %v3672, %v4352
        %v4399 = vadd.f32 %v3673, %v4357
        %v4400 = vadd.f32 %v3674, %v4360
        %v4401 = vadd.f32 %v3675, %v4365
        %v4402 = vadd.f32 %v3676, %v4368
        %v4403 = vld [vmem:[%s3318] sm:$0xe]
        %v4404 = vld [vmem:[%s3318 + $0xc] sm:$0xe]
        %v4405 = vld [vmem:[%s3318 + $0x18] sm:$0xe]
        %v4406 = vld [vmem:[%s3318 + $0x24] sm:$0xe]
        %v4407 = vld [vmem:[%s3318 + $0x30] sm:$0xe]
        %v4408 = vld [vmem:[%s3318 + $0x3c] sm:$0xe]
        %v4409 = vld [vmem:[%s3318 + $0x48] sm:$0xe]
        %v4410 = vld [vmem:[%s3318 + $0x54] sm:$0xe]
        %v4411 = vld [vmem:[%s3318 + $0x60] sm:$0xe]
        %v4412 = vld [vmem:[%s3318 + $0x6c] sm:$0xe]
        %v4413 = vld [vmem:[%s3318 + $0x78] sm:$0xe]
        %v4414 = vld [vmem:[%s3318 + $0x84] sm:$0xe]
        %v4415 = vld [vmem:[%s3318 + $0x90] sm:$0xe]
        %v4416 = vld [vmem:[%s3318 + $0x9c] sm:$0xe]
        %v4417 = vld [vmem:[%s3318 + $0xa8] sm:$0xe]
        %v4418 = vld [vmem:[%s3318 + $0xb4] sm:$0xe]
        %v4467 = vrot.slane %v4403, 5
        %v4468 = vrot.slane %v4467, 4
        %v4469 = vrot.slane %v3678, 5
        %v4470 = vsel %vm1356, %v4468, %v4469
        %v4471 = vrot.slane %v4469, 4
        %v4472 = vrot.slane %v3679, 5
        %v4473 = vsel %vm1356, %v4471, %v4472
        %v4474 = vrot.slane %v4404, 5
        %v4475 = vrot.slane %v4474, 4
        %v4476 = vrot.slane %v3681, 5
        %v4477 = vsel %vm1356, %v4475, %v4476
        %v4478 = vrot.slane %v4476, 4
        %v4479 = vrot.slane %v3682, 5
        %v4480 = vsel %vm1356, %v4478, %v4479
        %v4481 = vrot.slane %v4405, 5
        %v4482 = vrot.slane %v4481, 4
        %v4483 = vrot.slane %v3684, 5
        %v4484 = vsel %vm1356, %v4482, %v4483
        %v4485 = vrot.slane %v4483, 4
        %v4486 = vrot.slane %v3685, 5
        %v4487 = vsel %vm1356, %v4485, %v4486
        %v4488 = vrot.slane %v4406, 5
        %v4489 = vrot.slane %v4488, 4
        %v4490 = vrot.slane %v3687, 5
        %v4491 = vsel %vm1356, %v4489, %v4490
        %v4492 = vrot.slane %v4490, 4
        %v4493 = vrot.slane %v3688, 5
        %v4494 = vsel %vm1356, %v4492, %v4493
        %v4495 = vrot.slane %v4407, 5
        %v4496 = vrot.slane %v4495, 4
        %v4497 = vrot.slane %v3690, 5
        %v4498 = vsel %vm1356, %v4496, %v4497
        %v4499 = vrot.slane %v4497, 4
        %v4500 = vrot.slane %v3691, 5
        %v4501 = vsel %vm1356, %v4499, %v4500
        %v4502 = vrot.slane %v4408, 5
        %v4503 = vrot.slane %v4502, 4
        %v4504 = vrot.slane %v3693, 5
        %v4505 = vsel %vm1356, %v4503, %v4504
        %v4506 = vrot.slane %v4504, 4
        %v4507 = vrot.slane %v3694, 5
        %v4508 = vsel %vm1356, %v4506, %v4507
        %v4509 = vrot.slane %v4409, 5
        %v4510 = vrot.slane %v4509, 4
        %v4511 = vrot.slane %v3696, 5
        %v4512 = vsel %vm1356, %v4510, %v4511
        %v4513 = vrot.slane %v4511, 4
        %v4514 = vrot.slane %v3697, 5
        %v4515 = vsel %vm1356, %v4513, %v4514
        %v4516 = vrot.slane %v4410, 5
        %v4517 = vrot.slane %v4516, 4
        %v4518 = vrot.slane %v3699, 5
        %v4519 = vsel %vm1356, %v4517, %v4518
        %v4520 = vrot.slane %v4518, 4
        %v4521 = vrot.slane %v3700, 5
        %v4522 = vsel %vm1356, %v4520, %v4521
        %v4523 = vrot.slane %v4411, 5
        %v4524 = vrot.slane %v4523, 4
        %v4525 = vrot.slane %v3702, 5
        %v4526 = vsel %vm1356, %v4524, %v4525
        %v4527 = vrot.slane %v4525, 4
        %v4528 = vrot.slane %v3703, 5
        %v4529 = vsel %vm1356, %v4527, %v4528
        %v4530 = vrot.slane %v4412, 5
        %v4531 = vrot.slane %v4530, 4
        %v4532 = vrot.slane %v3705, 5
        %v4533 = vsel %vm1356, %v4531, %v4532
        %v4534 = vrot.slane %v4532, 4
        %v4535 = vrot.slane %v3706, 5
        %v4536 = vsel %vm1356, %v4534, %v4535
        %v4537 = vrot.slane %v4413, 5
        %v4538 = vrot.slane %v4537, 4
        %v4539 = vrot.slane %v3708, 5
        %v4540 = vsel %vm1356, %v4538, %v4539
        %v4541 = vrot.slane %v4539, 4
        %v4542 = vrot.slane %v3709, 5
        %v4543 = vsel %vm1356, %v4541, %v4542
        %v4544 = vrot.slane %v4414, 5
        %v4545 = vrot.slane %v4544, 4
        %v4546 = vrot.slane %v3711, 5
        %v4547 = vsel %vm1356, %v4545, %v4546
        %v4548 = vrot.slane %v4546, 4
        %v4549 = vrot.slane %v3712, 5
        %v4550 = vsel %vm1356, %v4548, %v4549
        %v4551 = vrot.slane %v4415, 5
        %v4552 = vrot.slane %v4551, 4
        %v4553 = vrot.slane %v3714, 5
        %v4554 = vsel %vm1356, %v4552, %v4553
        %v4555 = vrot.slane %v4553, 4
        %v4556 = vrot.slane %v3715, 5
        %v4557 = vsel %vm1356, %v4555, %v4556
        %v4558 = vrot.slane %v4416, 5
        %v4559 = vrot.slane %v4558, 4
        %v4560 = vrot.slane %v3717, 5
        %v4561 = vsel %vm1356, %v4559, %v4560
        %v4562 = vrot.slane %v4560, 4
        %v4563 = vrot.slane %v3718, 5
        %v4564 = vsel %vm1356, %v4562, %v4563
        %v4565 = vrot.slane %v4417, 5
        %v4566 = vrot.slane %v4565, 4
        %v4567 = vrot.slane %v3720, 5
        %v4568 = vsel %vm1356, %v4566, %v4567
        %v4569 = vrot.slane %v4567, 4
        %v4570 = vrot.slane %v3721, 5
        %v4571 = vsel %vm1356, %v4569, %v4570
        %v4572 = vrot.slane %v4418, 5
        %v4573 = vrot.slane %v4572, 4
        %v4574 = vrot.slane %v3723, 5
        %v4575 = vsel %vm1356, %v4573, %v4574
        %v4576 = vrot.slane %v4574, 4
        %v4577 = vrot.slane %v3724, 5
        %v4578 = vsel %vm1356, %v4576, %v4577
        %s4579 = scalar_lea.vmem %s1, 32
        %v4580 = vld [vmem:[%s4579] sm:$0xf]
        %v4581 = vunpack.c.l.b16 %v4470
        %v4582 = vunpack.c.l.b16 %v4473
        %v4583 = vunpack.c.l.b16 %v4477
        %v4584 = vunpack.c.l.b16 %v4480
        %v4585 = vunpack.c.l.b16 %v4484
        %v4586 = vunpack.c.l.b16 %v4487
        %v4587 = vunpack.c.l.b16 %v4491
        %v4588 = vunpack.c.l.b16 %v4494
        %v4589 = vunpack.c.l.b16 %v4498
        %v4590 = vunpack.c.l.b16 %v4501
        %v4591 = vunpack.c.l.b16 %v4505
        %v4592 = vunpack.c.l.b16 %v4508
        %v4593 = vunpack.c.l.b16 %v4512
        %v4594 = vunpack.c.l.b16 %v4515
        %v4595 = vunpack.c.l.b16 %v4519
        %v4596 = vunpack.c.l.b16 %v4522
        %v4597 = vunpack.c.l.b16 %v4526
        %v4598 = vunpack.c.l.b16 %v4529
        %v4599 = vunpack.c.l.b16 %v4533
        %v4600 = vunpack.c.l.b16 %v4536
        %v4601 = vunpack.c.l.b16 %v4540
        %v4602 = vunpack.c.l.b16 %v4543
        %v4603 = vunpack.c.l.b16 %v4547
        %v4604 = vunpack.c.l.b16 %v4550
        %v4605 = vunpack.c.l.b16 %v4554
        %v4606 = vunpack.c.l.b16 %v4557
        %v4607 = vunpack.c.l.b16 %v4561
        %v4608 = vunpack.c.l.b16 %v4564
        %v4609 = vunpack.c.l.b16 %v4568
        %v4610 = vunpack.c.l.b16 %v4571
        %v4611 = vunpack.c.l.b16 %v4575
        %v4612 = vunpack.c.l.b16 %v4578
        %v4613 = vpack.c.b16 %v4582, %v4581
        %v4614 = vpack.c.b16 %v4584, %v4583
        %v4615 = vpack.c.b16 %v4586, %v4585
        %v4616 = vpack.c.b16 %v4588, %v4587
        %v4617 = vpack.c.b16 %v4590, %v4589
        %v4618 = vpack.c.b16 %v4592, %v4591
        %v4619 = vpack.c.b16 %v4594, %v4593
        %v4620 = vpack.c.b16 %v4596, %v4595
        %v4621 = vpack.c.b16 %v4598, %v4597
        %v4622 = vpack.c.b16 %v4600, %v4599
        %v4623 = vpack.c.b16 %v4602, %v4601
        %v4624 = vpack.c.b16 %v4604, %v4603
        %v4625 = vpack.c.b16 %v4606, %v4605
        %v4626 = vpack.c.b16 %v4608, %v4607
        %v4627 = vpack.c.b16 %v4610, %v4609
        %v4628 = vpack.c.b16 %v4612, %v4611
        %v4630 = vsel %vm800, %v4613, 0
        %v4633 = vsel %vm800, %v4614, 0
        %v4636 = vsel %vm800, %v4615, 0
        %v4639 = vsel %vm800, %v4616, 0
        %v4642 = vsel %vm800, %v4617, 0
        %v4645 = vsel %vm800, %v4618, 0
        %v4648 = vsel %vm800, %v4619, 0
        %v4651 = vsel %vm800, %v4620, 0
        %v4654 = vsel %vm800, %v4621, 0
        %v4657 = vsel %vm800, %v4622, 0
        %v4660 = vsel %vm800, %v4623, 0
        %v4663 = vsel %vm800, %v4624, 0
        %v4666 = vsel %vm800, %v4625, 0
        %v4669 = vsel %vm800, %v4626, 0
        %v4672 = vsel %vm800, %v4627, 0
        %v4675 = vsel %vm800, %v4628, 0
        %v4678 = vsel %vm849, %v4580, 0
        %4680 = vmatprep.subr.bf16.mxu0 0
        %4681 = vmatpush1.bf16.msra.mxu0 0
        %4682 = vmatprep.subr.bf16.mxu0 0
        %4683 = vmatpush1.bf16.msra.mxu0 0
        %4684 = vmatprep.subr.bf16.mxu0 0
        %4685 = vmatpush1.bf16.msra.mxu0 0
        %4686 = vmatprep.subr.bf16.mxu0 0
        %4687 = vmatpush1.bf16.msra.mxu0 0
        %4688 = vmatprep.subr.bf16.mxu0 0
        %4689 = vmatpush1.bf16.msra.mxu0 0
        %4690 = vmatprep.subr.bf16.mxu0 0
        %4691 = vmatpush1.bf16.msra.mxu0 0
        %4692 = vmatprep.subr.bf16.mxu0 0
        %4693 = vmatpush1.bf16.msra.mxu0 0
        %4694 = vmatprep.subr.bf16.mxu0 0
        %4695 = vmatpush1.bf16.msra.mxu0 %v4678
        %4696 = vmatprep.subr.bf16.mxu0 0
        %4697 = vmatpush2.bf16.msra.mxu0 0
        %4698 = vmatprep.subr.bf16.mxu0 0
        %4699 = vmatpush2.bf16.msra.mxu0 0
        %4700 = vmatprep.subr.bf16.mxu0 0
        %4701 = vmatpush2.bf16.msra.mxu0 0
        %4702 = vmatprep.subr.bf16.mxu0 0
        %4703 = vmatpush2.bf16.msra.mxu0 0
        %4704 = vmatprep.subr.bf16.mxu0 0
        %4705 = vmatpush2.bf16.msra.mxu0 0
        %4706 = vmatprep.subr.bf16.mxu0 0
        %4707 = vmatpush2.bf16.msra.mxu0 0
        %4708 = vmatprep.subr.bf16.mxu0 0
        %4709 = vmatpush2.bf16.msra.mxu0 0
        %4710 = vmatprep.subr.bf16.mxu0 0
        %4711 = vmatpush2.bf16.msra.mxu0 0
        %4712 = vmatprep.mubr.bf16.mxu0 0
        %4713 = vmatmul.mubr.bf16.gmra.mxu0 %v4630
        %v4714 = vpop.f32.mrf.mxu0
        %v4715 = vadd.f32 0.0, %v4714
        %v4716 = vpop.f32.mrf.mxu0
        %v4717 = vpop.f32.mrf.mxu0
        %v4718 = vadd.f32 0.0, %v4717
        %v4719 = vpop.f32.mrf.mxu0
        %4720 = vmatprep.mubr.bf16.mxu0 0
        %4721 = vmatmul.mubr.bf16.gmra.mxu0 %v4633
        %v4722 = vpop.f32.mrf.mxu0
        %v4723 = vadd.f32 0.0, %v4722
        %v4724 = vpop.f32.mrf.mxu0
        %v4725 = vpop.f32.mrf.mxu0
        %v4726 = vadd.f32 0.0, %v4725
        %v4727 = vpop.f32.mrf.mxu0
        %4728 = vmatprep.mubr.bf16.mxu0 0
        %4729 = vmatmul.mubr.bf16.gmra.mxu0 %v4636
        %v4730 = vpop.f32.mrf.mxu0
        %v4731 = vadd.f32 0.0, %v4730
        %v4732 = vpop.f32.mrf.mxu0
        %v4733 = vpop.f32.mrf.mxu0
        %v4734 = vadd.f32 0.0, %v4733
        %v4735 = vpop.f32.mrf.mxu0
        %4736 = vmatprep.mubr.bf16.mxu0 0
        %4737 = vmatmul.mubr.bf16.gmra.mxu0 %v4639
        %v4738 = vpop.f32.mrf.mxu0
        %v4739 = vadd.f32 0.0, %v4738
        %v4740 = vpop.f32.mrf.mxu0
        %v4741 = vpop.f32.mrf.mxu0
        %v4742 = vadd.f32 0.0, %v4741
        %v4743 = vpop.f32.mrf.mxu0
        %4744 = vmatprep.mubr.bf16.mxu0 0
        %4745 = vmatmul.mubr.bf16.gmra.mxu0 %v4642
        %v4746 = vpop.f32.mrf.mxu0
        %v4747 = vadd.f32 0.0, %v4746
        %v4748 = vpop.f32.mrf.mxu0
        %v4749 = vpop.f32.mrf.mxu0
        %v4750 = vadd.f32 0.0, %v4749
        %v4751 = vpop.f32.mrf.mxu0
        %4752 = vmatprep.mubr.bf16.mxu0 0
        %4753 = vmatmul.mubr.bf16.gmra.mxu0 %v4645
        %v4754 = vpop.f32.mrf.mxu0
        %v4755 = vadd.f32 0.0, %v4754
        %v4756 = vpop.f32.mrf.mxu0
        %v4757 = vpop.f32.mrf.mxu0
        %v4758 = vadd.f32 0.0, %v4757
        %v4759 = vpop.f32.mrf.mxu0
        %4760 = vmatprep.mubr.bf16.mxu0 0
        %4761 = vmatmul.mubr.bf16.gmra.mxu0 %v4648
        %v4762 = vpop.f32.mrf.mxu0
        %v4763 = vadd.f32 0.0, %v4762
        %v4764 = vpop.f32.mrf.mxu0
        %v4765 = vpop.f32.mrf.mxu0
        %v4766 = vadd.f32 0.0, %v4765
        %v4767 = vpop.f32.mrf.mxu0
        %4768 = vmatprep.mubr.bf16.mxu0 0
        %4769 = vmatmul.mubr.bf16.gmra.mxu0 %v4651
        %v4770 = vpop.f32.mrf.mxu0
        %v4771 = vadd.f32 0.0, %v4770
        %v4772 = vpop.f32.mrf.mxu0
        %v4773 = vpop.f32.mrf.mxu0
        %v4774 = vadd.f32 0.0, %v4773
        %v4775 = vpop.f32.mrf.mxu0
        %4776 = vmatprep.mubr.bf16.mxu0 0
        %4777 = vmatmul.mubr.bf16.gmra.mxu0 %v4654
        %v4778 = vpop.f32.mrf.mxu0
        %v4779 = vadd.f32 0.0, %v4778
        %v4780 = vpop.f32.mrf.mxu0
        %v4781 = vpop.f32.mrf.mxu0
        %v4782 = vadd.f32 0.0, %v4781
        %v4783 = vpop.f32.mrf.mxu0
        %4784 = vmatprep.mubr.bf16.mxu0 0
        %4785 = vmatmul.mubr.bf16.gmra.mxu0 %v4657
        %v4786 = vpop.f32.mrf.mxu0
        %v4787 = vadd.f32 0.0, %v4786
        %v4788 = vpop.f32.mrf.mxu0
        %v4789 = vpop.f32.mrf.mxu0
        %v4790 = vadd.f32 0.0, %v4789
        %v4791 = vpop.f32.mrf.mxu0
        %4792 = vmatprep.mubr.bf16.mxu0 0
        %4793 = vmatmul.mubr.bf16.gmra.mxu0 %v4660
        %v4794 = vpop.f32.mrf.mxu0
        %v4795 = vadd.f32 0.0, %v4794
        %v4796 = vpop.f32.mrf.mxu0
        %v4797 = vpop.f32.mrf.mxu0
        %v4798 = vadd.f32 0.0, %v4797
        %v4799 = vpop.f32.mrf.mxu0
        %4800 = vmatprep.mubr.bf16.mxu0 0
        %4801 = vmatmul.mubr.bf16.gmra.mxu0 %v4663
        %v4802 = vpop.f32.mrf.mxu0
        %v4803 = vadd.f32 0.0, %v4802
        %v4804 = vpop.f32.mrf.mxu0
        %v4805 = vpop.f32.mrf.mxu0
        %v4806 = vadd.f32 0.0, %v4805
        %v4807 = vpop.f32.mrf.mxu0
        %4808 = vmatprep.mubr.bf16.mxu0 0
        %4809 = vmatmul.mubr.bf16.gmra.mxu0 %v4666
        %v4810 = vpop.f32.mrf.mxu0
        %v4811 = vadd.f32 0.0, %v4810
        %v4812 = vpop.f32.mrf.mxu0
        %v4813 = vpop.f32.mrf.mxu0
        %v4814 = vadd.f32 0.0, %v4813
        %v4815 = vpop.f32.mrf.mxu0
        %4816 = vmatprep.mubr.bf16.mxu0 0
        %4817 = vmatmul.mubr.bf16.gmra.mxu0 %v4669
        %v4818 = vpop.f32.mrf.mxu0
        %v4819 = vadd.f32 0.0, %v4818
        %v4820 = vpop.f32.mrf.mxu0
        %v4821 = vpop.f32.mrf.mxu0
        %v4822 = vadd.f32 0.0, %v4821
        %v4823 = vpop.f32.mrf.mxu0
        %4824 = vmatprep.mubr.bf16.mxu0 0
        %4825 = vmatmul.mubr.bf16.gmra.mxu0 %v4672
        %v4826 = vpop.f32.mrf.mxu0
        %v4827 = vadd.f32 0.0, %v4826
        %v4828 = vpop.f32.mrf.mxu0
        %v4829 = vpop.f32.mrf.mxu0
        %v4830 = vadd.f32 0.0, %v4829
        %v4831 = vpop.f32.mrf.mxu0
        %4832 = vmatprep.mubr.bf16.mxu0 0
        %4833 = vmatmul.mubr.bf16.gmra.mxu0 %v4675
        %v4834 = vpop.f32.mrf.mxu0
        %v4835 = vadd.f32 0.0, %v4834
        %v4836 = vpop.f32.mrf.mxu0
        %v4837 = vpop.f32.mrf.mxu0
        %v4838 = vadd.f32 0.0, %v4837
        %v4839 = vpop.f32.mrf.mxu0
        %4840 = vdwg.mxu0
        %v4841 = vadd.f32 %v4371, %v4715
        %v4842 = vadd.f32 %v4372, %v4718
        %v4843 = vadd.f32 %v4373, %v4723
        %v4844 = vadd.f32 %v4374, %v4726
        %v4845 = vadd.f32 %v4375, %v4731
        %v4846 = vadd.f32 %v4376, %v4734
        %v4847 = vadd.f32 %v4377, %v4739
        %v4848 = vadd.f32 %v4378, %v4742
        %v4849 = vadd.f32 %v4379, %v4747
        %v4850 = vadd.f32 %v4380, %v4750
        %v4851 = vadd.f32 %v4381, %v4755
        %v4852 = vadd.f32 %v4382, %v4758
        %v4853 = vadd.f32 %v4383, %v4763
        %v4854 = vadd.f32 %v4384, %v4766
        %v4855 = vadd.f32 %v4385, %v4771
        %v4856 = vadd.f32 %v4386, %v4774
        %v4857 = vadd.f32 %v4387, %v4779
        %v4858 = vadd.f32 %v4388, %v4782
        %v4859 = vadd.f32 %v4389, %v4787
        %v4860 = vadd.f32 %v4390, %v4790
        %v4861 = vadd.f32 %v4391, %v4795
        %v4862 = vadd.f32 %v4392, %v4798
        %v4863 = vadd.f32 %v4393, %v4803
        %v4864 = vadd.f32 %v4394, %v4806
        %v4865 = vadd.f32 %v4395, %v4811
        %v4866 = vadd.f32 %v4396, %v4814
        %v4867 = vadd.f32 %v4397, %v4819
        %v4868 = vadd.f32 %v4398, %v4822
        %v4869 = vadd.f32 %v4399, %v4827
        %v4870 = vadd.f32 %v4400, %v4830
        %v4871 = vadd.f32 %v4401, %v4835
        %v4872 = vadd.f32 %v4402, %v4838
        %v4873 = vld [vmem:[%s2] sm:$0x1]
        %v4875 = vlaneseq
        %v4876 = vshrl.u32 %v4875, 7
        %v4877 = vsub.s32 0, %v4876
        %v4878 = vrot.slane %v4873, %v4877
        %v4880 = vadd.f32 %v4841, %v4878
        %v4881 = vadd.f32 %v4842, %v4878
        %v4882 = vadd.f32 %v4843, %v4878
        %v4883 = vadd.f32 %v4844, %v4878
        %v4884 = vadd.f32 %v4845, %v4878
        %v4885 = vadd.f32 %v4846, %v4878
        %v4886 = vadd.f32 %v4847, %v4878
        %v4887 = vadd.f32 %v4848, %v4878
        %v4888 = vadd.f32 %v4849, %v4878
        %v4889 = vadd.f32 %v4850, %v4878
        %v4890 = vadd.f32 %v4851, %v4878
        %v4891 = vadd.f32 %v4852, %v4878
        %v4892 = vadd.f32 %v4853, %v4878
        %v4893 = vadd.f32 %v4854, %v4878
        %v4894 = vadd.f32 %v4855, %v4878
        %v4895 = vadd.f32 %v4856, %v4878
        %v4896 = vadd.f32 %v4857, %v4878
        %v4897 = vadd.f32 %v4858, %v4878
        %v4898 = vadd.f32 %v4859, %v4878
        %v4899 = vadd.f32 %v4860, %v4878
        %v4900 = vadd.f32 %v4861, %v4878
        %v4901 = vadd.f32 %v4862, %v4878
        %v4902 = vadd.f32 %v4863, %v4878
        %v4903 = vadd.f32 %v4864, %v4878
        %v4904 = vadd.f32 %v4865, %v4878
        %v4905 = vadd.f32 %v4866, %v4878
        %v4906 = vadd.f32 %v4867, %v4878
        %v4907 = vadd.f32 %v4868, %v4878
        %v4908 = vadd.f32 %v4869, %v4878
        %v4909 = vadd.f32 %v4870, %v4878
        %v4910 = vadd.f32 %v4871, %v4878
        %v4911 = vadd.f32 %v4872, %v4878
        %v4912 = vmax.f32 %v4880, 0.0
        %v4913 = vmax.f32 %v4881, 0.0
        %v4914 = vmax.f32 %v4882, 0.0
        %v4915 = vmax.f32 %v4883, 0.0
        %v4916 = vmax.f32 %v4884, 0.0
        %v4917 = vmax.f32 %v4885, 0.0
        %v4918 = vmax.f32 %v4886, 0.0
        %v4919 = vmax.f32 %v4887, 0.0
        %v4920 = vmax.f32 %v4888, 0.0
        %v4921 = vmax.f32 %v4889, 0.0
        %v4922 = vmax.f32 %v4890, 0.0
        %v4923 = vmax.f32 %v4891, 0.0
        %v4924 = vmax.f32 %v4892, 0.0
        %v4925 = vmax.f32 %v4893, 0.0
        %v4926 = vmax.f32 %v4894, 0.0
        %v4927 = vmax.f32 %v4895, 0.0
        %v4928 = vmax.f32 %v4896, 0.0
        %v4929 = vmax.f32 %v4897, 0.0
        %v4930 = vmax.f32 %v4898, 0.0
        %v4931 = vmax.f32 %v4899, 0.0
        %v4932 = vmax.f32 %v4900, 0.0
        %v4933 = vmax.f32 %v4901, 0.0
        %v4934 = vmax.f32 %v4902, 0.0
        %v4935 = vmax.f32 %v4903, 0.0
        %v4936 = vmax.f32 %v4904, 0.0
        %v4937 = vmax.f32 %v4905, 0.0
        %v4938 = vmax.f32 %v4906, 0.0
        %v4939 = vmax.f32 %v4907, 0.0
        %v4940 = vmax.f32 %v4908, 0.0
        %v4941 = vmax.f32 %v4909, 0.0
        %v4942 = vmax.f32 %v4910, 0.0
        %v4943 = vmax.f32 %v4911, 0.0
        %4944 = vmatprep.subr.mxu0 0.0
        %4945 = vmatpush1.msra.mxu0 %v4927
        %4946 = vmatprep.subr.mxu0 0.0
        %4947 = vmatpush1.msra.mxu0 %v4926
        %4948 = vmatprep.subr.mxu0 0.0
        %4949 = vmatpush1.msra.mxu0 %v4925
        %4950 = vmatprep.subr.mxu0 0.0
        %4951 = vmatpush1.msra.mxu0 %v4924
        %4952 = vmatprep.subr.mxu0 0.0
        %4953 = vmatpush1.msra.mxu0 %v4923
        %4954 = vmatprep.subr.mxu0 0.0
        %4955 = vmatpush1.msra.mxu0 %v4922
        %4956 = vmatprep.subr.mxu0 0.0
        %4957 = vmatpush1.msra.mxu0 %v4921
        %4958 = vmatprep.subr.mxu0 0.0
        %4959 = vmatpush1.msra.mxu0 %v4920
        %4960 = vmatprep.subr.mxu0 0.0
        %4961 = vmatpush1.msra.mxu0 %v4919
        %4962 = vmatprep.subr.mxu0 0.0
        %4963 = vmatpush1.msra.mxu0 %v4918
        %4964 = vmatprep.subr.mxu0 0.0
        %4965 = vmatpush1.msra.mxu0 %v4917
        %4966 = vmatprep.subr.mxu0 0.0
        %4967 = vmatpush1.msra.mxu0 %v4916
        %4968 = vmatprep.subr.mxu0 0.0
        %4969 = vmatpush1.msra.mxu0 %v4915
        %4970 = vmatprep.subr.mxu0 0.0
        %4971 = vmatpush1.msra.mxu0 %v4914
        %4972 = vmatprep.subr.mxu0 0.0
        %4973 = vmatpush1.msra.mxu0 %v4913
        %4974 = vmatprep.subr.mxu0 0.0
        %4975 = vmatpush1.msra.mxu0 %v4912
        %4976 = vmatprep.subr.mxu0 0.0
        %4977 = vmatpush2.msra.mxu0 %v4943
        %4978 = vmatprep.subr.mxu0 0.0
        %4979 = vmatpush2.msra.mxu0 %v4942
        %4980 = vmatprep.subr.mxu0 0.0
        %4981 = vmatpush2.msra.mxu0 %v4941
        %4982 = vmatprep.subr.mxu0 0.0
        %4983 = vmatpush2.msra.mxu0 %v4940
        %4984 = vmatprep.subr.mxu0 0.0
        %4985 = vmatpush2.msra.mxu0 %v4939
        %4986 = vmatprep.subr.mxu0 0.0
        %4987 = vmatpush2.msra.mxu0 %v4938
        %4988 = vmatprep.subr.mxu0 0.0
        %4989 = vmatpush2.msra.mxu0 %v4937
        %4990 = vmatprep.subr.mxu0 0.0
        %4991 = vmatpush2.msra.mxu0 %v4936
        %4992 = vmatprep.subr.mxu0 0.0
        %4993 = vmatpush2.msra.mxu0 %v4935
        %4994 = vmatprep.subr.mxu0 0.0
        %4995 = vmatpush2.msra.mxu0 %v4934
        %4996 = vmatprep.subr.mxu0 0.0
        %4997 = vmatpush2.msra.mxu0 %v4933
        %4998 = vmatprep.subr.mxu0 0.0
        %4999 = vmatpush2.msra.mxu0 %v4932
        %5000 = vmatprep.subr.mxu0 0.0
        %5001 = vmatpush2.msra.mxu0 %v4931
        %5002 = vmatprep.subr.mxu0 0.0
        %5003 = vmatpush2.msra.mxu0 %v4930
        %5004 = vmatprep.subr.mxu0 0.0
        %5005 = vmatpush2.msra.mxu0 %v4929
        %5006 = vmatprep.subr.mxu0 0.0
        %5007 = vmatpush2.msra.mxu0 %v4928
        %5008 = vmatprep.mubr.f32.mxu0 0.00390625
        %5009 = vmatmul.mubr.f32.gmra.mxu0 0.00390625
        %v5010 = vpop.f32.mrf.mxu0
        %v5011 = vadd.f32 0.0, %v5010
        %v5012 = vpop.f32.mrf.mxu0
        %5013 = vdwg.mxu0
        %v5014 = vpack.c.bf16 %v5011, %v5011
        %v5015 = vld [vmem:[%s3] sm:$0xf]
        %v5016 = vld [vmem:[%s3 + $0x4] sm:$0xf]
        %v5017 = vld [vmem:[%s3 + $0x8] sm:$0xf]
        %v5018 = vld [vmem:[%s3 + $0xc] sm:$0xf]
        %v5019 = vld [vmem:[%s3 + $0x10] sm:$0xf]
        %v5020 = vld [vmem:[%s3 + $0x14] sm:$0xf]
        %v5021 = vld [vmem:[%s3 + $0x18] sm:$0xf]
        %v5022 = vld [vmem:[%s3 + $0x1c] sm:$0xf]
        %v5023 = vld [vmem:[%s3 + $0x20] sm:$0xf]
        %v5024 = vld [vmem:[%s3 + $0x24] sm:$0xf]
        %v5025 = vld [vmem:[%s3 + $0x28] sm:$0xf]
        %v5026 = vld [vmem:[%s3 + $0x2c] sm:$0xf]
        %v5027 = vld [vmem:[%s3 + $0x30] sm:$0xf]
        %v5028 = vld [vmem:[%s3 + $0x34] sm:$0xf]
        %v5029 = vld [vmem:[%s3 + $0x38] sm:$0xf]
        %v5030 = vld [vmem:[%s3 + $0x3c] sm:$0xf]
        %v5031 = vld [vmem:[%s4] sm:$0x1]
        %v5048 = vunpack.c.l.b16 %v5015
        %v5049 = vunpack.c.l.b16 %v5016
        %v5050 = vunpack.c.l.b16 %v5017
        %v5051 = vunpack.c.l.b16 %v5018
        %v5052 = vunpack.c.l.b16 %v5019
        %v5053 = vunpack.c.l.b16 %v5020
        %v5054 = vunpack.c.l.b16 %v5021
        %v5055 = vunpack.c.l.b16 %v5022
        %v5056 = vunpack.c.l.b16 %v5023
        %v5057 = vunpack.c.l.b16 %v5024
        %v5058 = vunpack.c.l.b16 %v5025
        %v5059 = vunpack.c.l.b16 %v5026
        %v5060 = vunpack.c.l.b16 %v5027
        %v5061 = vunpack.c.l.b16 %v5028
        %v5062 = vunpack.c.l.b16 %v5029
        %v5063 = vunpack.c.l.b16 %v5030
        %v5064 = vpack.c.b16 %v5049, %v5048
        %v5065 = vpack.c.b16 %v5051, %v5050
        %v5066 = vpack.c.b16 %v5053, %v5052
        %v5067 = vpack.c.b16 %v5055, %v5054
        %v5068 = vpack.c.b16 %v5057, %v5056
        %v5069 = vpack.c.b16 %v5059, %v5058
        %v5070 = vpack.c.b16 %v5061, %v5060
        %v5071 = vpack.c.b16 %v5063, %v5062
        %5080 = vmatprep.subr.bf16.mxu0 0
        %5081 = vmatpush1.bf16.msra.mxu0 %v5071
        %5082 = vmatprep.subr.bf16.mxu0 0
        %5083 = vmatpush1.bf16.msra.mxu0 %v5070
        %5084 = vmatprep.subr.bf16.mxu0 0
        %5085 = vmatpush1.bf16.msra.mxu0 %v5069
        %5086 = vmatprep.subr.bf16.mxu0 0
        %5087 = vmatpush1.bf16.msra.mxu0 %v5068
        %5088 = vmatprep.subr.bf16.mxu0 0
        %5089 = vmatpush1.bf16.msra.mxu0 %v5067
        %5090 = vmatprep.subr.bf16.mxu0 0
        %5091 = vmatpush1.bf16.msra.mxu0 %v5066
        %5092 = vmatprep.subr.bf16.mxu0 0
        %5093 = vmatpush1.bf16.msra.mxu0 %v5065
        %5094 = vmatprep.subr.bf16.mxu0 0
        %5095 = vmatpush1.bf16.msra.mxu0 %v5064
        %5096 = vmatprep.subr.bf16.mxu0 0
        %5097 = vmatpush2.bf16.msra.mxu0 0
        %5098 = vmatprep.subr.bf16.mxu0 0
        %5099 = vmatpush2.bf16.msra.mxu0 0
        %5100 = vmatprep.subr.bf16.mxu0 0
        %5101 = vmatpush2.bf16.msra.mxu0 0
        %5102 = vmatprep.subr.bf16.mxu0 0
        %5103 = vmatpush2.bf16.msra.mxu0 0
        %5104 = vmatprep.subr.bf16.mxu0 0
        %5105 = vmatpush2.bf16.msra.mxu0 0
        %5106 = vmatprep.subr.bf16.mxu0 0
        %5107 = vmatpush2.bf16.msra.mxu0 0
        %5108 = vmatprep.subr.bf16.mxu0 0
        %5109 = vmatpush2.bf16.msra.mxu0 0
        %5110 = vmatprep.subr.bf16.mxu0 0
        %5111 = vmatpush2.bf16.msra.mxu0 0
        %5112 = vmatprep.mubr.bf16.mxu0 0
        %5113 = vmatmul.mubr.bf16.gmra.mxu0 %v5014
        %v5114 = vpop.f32.mrf.mxu0
        %v5115 = vadd.f32 %v5031, %v5114
        %v5116 = vpop.f32.mrf.mxu0
        %v5117 = vpop.f32.mrf.mxu0
        %v5118 = vpop.f32.mrf.mxu0
        %5119 = vdwg.mxu0
        %v5120 = vmax.f32 %v5115, 0.0
        %v5121 = vpack.c.bf16 %v5120, %v5120
        %v5122 = vld [vmem:[%s5] sm:$0xf]
        %v5123 = vld [vmem:[%s5 + $0x4] sm:$0xf]
        %v5124 = vld [vmem:[%s5 + $0x8] sm:$0xf]
        %v5125 = vld [vmem:[%s5 + $0xc] sm:$0xf]
        %v5126 = vld [vmem:[%s5 + $0x10] sm:$0xf]
        %v5127 = vld [vmem:[%s5 + $0x14] sm:$0xf]
        %v5128 = vld [vmem:[%s5 + $0x18] sm:$0xf]
        %v5129 = vld [vmem:[%s5 + $0x1c] sm:$0xf]
        %v5130 = vld [vmem:[%s5 + $0x20] sm:$0xf]
        %v5131 = vld [vmem:[%s5 + $0x24] sm:$0xf]
        %v5132 = vld [vmem:[%s5 + $0x28] sm:$0xf]
        %v5133 = vld [vmem:[%s5 + $0x2c] sm:$0xf]
        %v5134 = vld [vmem:[%s5 + $0x30] sm:$0xf]
        %v5135 = vld [vmem:[%s5 + $0x34] sm:$0xf]
        %v5136 = vld [vmem:[%s5 + $0x38] sm:$0xf]
        %v5137 = vld [vmem:[%s5 + $0x3c] sm:$0xf]
        %v5138 = vld [vmem:[%s6] sm:$0x1]
        %v5155 = vunpack.c.l.b16 %v5122
        %v5156 = vunpack.c.l.b16 %v5123
        %v5157 = vunpack.c.l.b16 %v5124
        %v5158 = vunpack.c.l.b16 %v5125
        %v5159 = vunpack.c.l.b16 %v5126
        %v5160 = vunpack.c.l.b16 %v5127
        %v5161 = vunpack.c.l.b16 %v5128
        %v5162 = vunpack.c.l.b16 %v5129
        %v5163 = vunpack.c.l.b16 %v5130
        %v5164 = vunpack.c.l.b16 %v5131
        %v5165 = vunpack.c.l.b16 %v5132
        %v5166 = vunpack.c.l.b16 %v5133
        %v5167 = vunpack.c.l.b16 %v5134
        %v5168 = vunpack.c.l.b16 %v5135
        %v5169 = vunpack.c.l.b16 %v5136
        %v5170 = vunpack.c.l.b16 %v5137
        %v5171 = vpack.c.b16 %v5156, %v5155
        %v5172 = vpack.c.b16 %v5158, %v5157
        %v5173 = vpack.c.b16 %v5160, %v5159
        %v5174 = vpack.c.b16 %v5162, %v5161
        %v5175 = vpack.c.b16 %v5164, %v5163
        %v5176 = vpack.c.b16 %v5166, %v5165
        %v5177 = vpack.c.b16 %v5168, %v5167
        %v5178 = vpack.c.b16 %v5170, %v5169
        %5187 = vmatprep.subr.bf16.mxu0 0
        %5188 = vmatpush1.bf16.msra.mxu0 %v5178
        %5189 = vmatprep.subr.bf16.mxu0 0
        %5190 = vmatpush1.bf16.msra.mxu0 %v5177
        %5191 = vmatprep.subr.bf16.mxu0 0
        %5192 = vmatpush1.bf16.msra.mxu0 %v5176
        %5193 = vmatprep.subr.bf16.mxu0 0
        %5194 = vmatpush1.bf16.msra.mxu0 %v5175
        %5195 = vmatprep.subr.bf16.mxu0 0
        %5196 = vmatpush1.bf16.msra.mxu0 %v5174
        %5197 = vmatprep.subr.bf16.mxu0 0
        %5198 = vmatpush1.bf16.msra.mxu0 %v5173
        %5199 = vmatprep.subr.bf16.mxu0 0
        %5200 = vmatpush1.bf16.msra.mxu0 %v5172
        %5201 = vmatprep.subr.bf16.mxu0 0
        %5202 = vmatpush1.bf16.msra.mxu0 %v5171
        %5203 = vmatprep.subr.bf16.mxu0 0
        %5204 = vmatpush2.bf16.msra.mxu0 0
        %5205 = vmatprep.subr.bf16.mxu0 0
        %5206 = vmatpush2.bf16.msra.mxu0 0
        %5207 = vmatprep.subr.bf16.mxu0 0
        %5208 = vmatpush2.bf16.msra.mxu0 0
        %5209 = vmatprep.subr.bf16.mxu0 0
        %5210 = vmatpush2.bf16.msra.mxu0 0
        %5211 = vmatprep.subr.bf16.mxu0 0
        %5212 = vmatpush2.bf16.msra.mxu0 0
        %5213 = vmatprep.subr.bf16.mxu0 0
        %5214 = vmatpush2.bf16.msra.mxu0 0
        %5215 = vmatprep.subr.bf16.mxu0 0
        %5216 = vmatpush2.bf16.msra.mxu0 0
        %5217 = vmatprep.subr.bf16.mxu0 0
        %5218 = vmatpush2.bf16.msra.mxu0 0
        %5219 = vmatprep.mubr.bf16.mxu0 0
        %5220 = vmatmul.mubr.bf16.gmra.mxu0 %v5121
        %v5221 = vpop.f32.mrf.mxu0
        %v5222 = vadd.f32 %v5138, %v5221
        %v5223 = vpop.f32.mrf.mxu0
        %v5224 = vpop.f32.mrf.mxu0
        %v5225 = vpop.f32.mrf.mxu0
        %5226 = vdwg.mxu0
        %5227 = vst [vmem:[%s301] sm:$0x1] %v5011
        %5228 = vst [vmem:[%s307] sm:$0x1] %v5222
        %s5229 = sand.u32 %s186, 1
        %s5230 = scalar_lea.sflag [#allocation3], %s5229
        %s5231 = sand.u32 %s186, 1
        %s5232 = scalar_lea.vmem [#allocation2], %s5231
        %s5233 = sand.u32 %s212, 1
        %s5234 = scalar_lea.sflag [#allocation5], %s5233
        %s5235 = sand.u32 %s212, 1
        %s5236 = scalar_lea.vmem [#allocation4], %s5235
        // Predicated region
        $region49: #{simclr_forward.1} parent=47 // pred_check
          %p5237 = pneg %p196
        $region50: #{simclr_forward.1} parent=47 // pred_check_branch
          %5239 = sbr.rel (%p5237) target = $region52
        $region51: #{simclr_forward.1} parent=47 // pred_region
          %s5241 = ssub.s32 16, 16
          %5242 = vsyncadd %s5230, %s5241
          %s5243 = smul.addr %s26, 16
          %s5244 = scalar_lea.hbm %s7, %s5243
          %s5246 = sshll.u32 %s5232, 4
          %s5247 = int_to_ptr.vmem [resolvable:$true] %s5246
          %5249 = dma.vmem_to_hbm [thread:$0]  %s5247, 16, %s5244, %s5230
        $region52: #{simclr_forward.1} parent=47 // pred_fallthru
          _
        // Predicated region
        $region53: #{simclr_forward.1} parent=47 // pred_check
          %p5250 = pneg %p222
        $region54: #{simclr_forward.1} parent=47 // pred_check_branch
          %5252 = sbr.rel (%p5250) target = $region56
        $region55: #{simclr_forward.1} parent=47 // pred_region
          %s5254 = ssub.s32 16, 16
          %5255 = vsyncadd %s5234, %s5254
          %s5256 = smul.addr %s26, 16
          %s5257 = scalar_lea.hbm %s8, %s5256
          %s5259 = sshll.u32 %s5236, 4
          %s5260 = int_to_ptr.vmem [resolvable:$true] %s5259
          %5262 = dma.vmem_to_hbm [thread:$0]  %s5260, 16, %s5257, %s5234
        $region56: #{simclr_forward.1} parent=47 // pred_fallthru
          _
      $region48: #{simclr_forward.1} parent=5 // pred_fallthru
        _
      %p5263 = scmp.le.s32.totalorder 2, %s21
      // Predicated region
      $region57: #{simclr_forward.1} parent=5 // pred_check
        %p5264 = pneg %p5263
      $region58: #{simclr_forward.1} parent=5 // pred_check_branch
        %5266 = sbr.rel (%p5264) target = $region60
      $region59: #{simclr_forward.1} parent=5 // pred_region
        %s5267 = ssub.s32 %s21, 2
        // Predicated region
        $region61: #{simclr_forward.1} parent=59 // pred_check
          %p5268 = pneg %p202
        $region62: #{simclr_forward.1} parent=59 // pred_check_branch
          %5270 = sbr.rel (%p5268) target = $region64
        $region63: #{simclr_forward.1} parent=59 // pred_region
          %s5271 = sand.u32 %s187, 1
          %s5272 = scalar_lea.sflag [#allocation3], %s5271
          %s5273 = sand.u32 %s187, 1
          %s5274 = scalar_lea.vmem [#allocation2], %s5273
          %5275 = dma.done %s5272, 16
        $region64: #{simclr_forward.1} parent=59 // pred_fallthru
          _
        // Predicated region
        $region65: #{simclr_forward.1} parent=59 // pred_check
          %p5276 = pneg %p228
        $region66: #{simclr_forward.1} parent=59 // pred_check_branch
          %5278 = sbr.rel (%p5276) target = $region68
        $region67: #{simclr_forward.1} parent=59 // pred_region
          %s5279 = sand.u32 %s213, 1
          %s5280 = scalar_lea.sflag [#allocation5], %s5279
          %s5281 = sand.u32 %s213, 1
          %s5282 = scalar_lea.vmem [#allocation4], %s5281
          %5283 = dma.done %s5280, 16
        $region68: #{simclr_forward.1} parent=59 // pred_fallthru
          _
      $region60: #{simclr_forward.1} parent=5 // pred_fallthru
        _
    $region6: #{simclr_forward.1} parent=1 // loop_footer
      %s25 = sadd.s32 1, %s21
    $region7: #{simclr_forward.1} parent=1 // loop_footer_branch
      %20 = sbr.rel target = $region3
    $region8: #{simclr_forward.1} parent=1 // loop_exit
      _
    %5284 = vsyncpa [#allocation3], 1
    %s5285 = scalar_lea.sflag [#allocation3], 1
    %5286 = vsyncpa %s5285, 1
    %5287 = vsyncpa [#allocation5], 1
    %s5288 = scalar_lea.sflag [#allocation5], 1
    %5289 = vsyncpa %s5288, 1

</llo_original>
